<compile_context>
chip_gen: v5e
topology: v5e:2x2
jax: 0.10.0
libtpu: 0.0.40
codegen_flags: <defaults>
</compile_context>

<pallas_src>
import functools
import math

import jax
import jax.numpy as jnp
from jax.experimental import pallas as pl
from jax.experimental.pallas import tpu as pltpu


# ------------------------------- model config --------------------------------

VOCAB = 128
HIDDEN = 32
LAYERS = 2
HEADS = 4
INTER = 64
MAX_POS = 16
SEQ = 8
BATCH = 2


# ------------------------------ Pallas kernel --------------------------------

def _vmem_spec(shape):
    n = len(shape)
    return pl.BlockSpec(tuple(shape), lambda *_: (0,) * n)


def _fused_bert_kernel(
        ids_ref, mask_ref, mlm_lab_ref, nsp_lab_ref,
        word_emb_ref, pos_emb_ref, tok_emb_ref,
        emb_g_ref, emb_b_ref,
        wqkv_ref, bqkv_ref, wo_ref, bo_ref, ln1g_ref, ln1b_ref,
        w1_ref, b1_ref, w2_ref, b2_ref, ln2g_ref, ln2b_ref,
        mlm_w_ref, mlm_b_ref, mlm_lng_ref, mlm_lnb_ref, dec_b_ref,
        pool_w_ref, pool_b_ref, nsp_w_ref, nsp_b_ref,
        out_ref, *, num_heads):
    """Whole BertForPreTraining forward (including the embedding gather) in one kernel."""
    N = ids_ref.shape[0]
    B, S = mask_ref.shape
    V, H = word_emb_ref.shape
    L = wqkv_ref.shape[0]
    nH = num_heads
    Dh = H // nH
    G = B * nH
    scale = 1.0 / math.sqrt(Dh)

    bf16 = jnp.bfloat16
    f32 = jnp.float32

    def layer_norm(v, g, b):
        mu = jnp.mean(v, axis=-1, keepdims=True)
        var = jnp.mean((v - mu) * (v - mu), axis=-1, keepdims=True)
        return (v - mu) * jax.lax.rsqrt(var + 1e-12) * g + b

    def softmax_last(s):
        s = s - jnp.max(s, axis=-1, keepdims=True)
        p = jnp.exp(s)
        return p * pl.reciprocal(jnp.sum(p, axis=-1, keepdims=True), approx=True)

    word_emb_bf = word_emb_ref[...]                                    # [V, H] bf16 (tied)

    # ---- fused embedding gather: one-hot [N, V=128] @ [V, H] on the MXU ----
    col_v = jax.lax.broadcasted_iota(jnp.int32, (N, V), 1)
    onehot = (col_v == ids_ref[...]).astype(bf16)                      # [N, V]
    x = jnp.dot(onehot, word_emb_bf, preferred_element_type=f32)       # [N, H] f32
    # position + token_type (== 0) add; reshape [N,H]->[B,S,H] is layout-free (S == 8).
    pos_tok = pos_emb_ref[0:S, :] + tok_emb_ref[0:1, :]                # [S, H]
    x = (x.reshape(B, S, H) + pos_tok[None, :, :]).reshape(N, H)
    x = layer_norm(x, emb_g_ref[...], emb_b_ref[...])                  # [N, H] f32

    # ---- additive attention mask, broadcast ONCE to the grouped [G, 1, S] layout ----
    add_mask = (1 - mask_ref[...]).astype(f32) * (-1e9)                # [B, S]
    mask_g = jnp.broadcast_to(add_mask[:, None, None, :], (B, nH, 1, S)).reshape(G, 1, S)

    def to_heads(a):                                                   # [N, H] f32 -> [G, S, Dh] bf16
        return jnp.transpose(a.reshape(B, S, nH, Dh), (0, 2, 1, 3)).reshape(G, S, Dh).astype(bf16)

    # ---- encoder layers (fully unrolled; weights + activations stay in VMEM) ----
    for l in range(L):
        x_bf = x.astype(bf16)
        # fused Q/K/V projection: one [N, H] x [H, 3H] matmul
        qkv = jnp.dot(x_bf, wqkv_ref[l], preferred_element_type=f32) + bqkv_ref[l]   # [N, 3H]

        qg = to_heads(qkv[:, 0:H])                                     # [G, S, Dh]
        kg = to_heads(qkv[:, H:2 * H])
        vg = to_heads(qkv[:, 2 * H:3 * H])

        # ONE batched score contraction + ONE batched context contraction per layer.
        s = jnp.einsum('gqd,gkd->gqk', qg, kg, preferred_element_type=f32)            # [G, S, S]
        p = softmax_last(s * scale + mask_g)
        ctx_g = jnp.einsum('gqk,gkd->gqd', p.astype(bf16), vg, preferred_element_type=f32)
        ctx = jnp.transpose(ctx_g.reshape(B, nH, S, Dh), (0, 2, 1, 3)).reshape(N, H)  # [N, H]

        attn_out = jnp.dot(ctx.astype(bf16), wo_ref[l], preferred_element_type=f32) + bo_ref[l]
        x = layer_norm(attn_out + x, ln1g_ref[l], ln1b_ref[l])

        # TODO(synk): HF BERT uses erf-GELU; tanh approximation kept (≈1e-3 close).
        x_bf = x.astype(bf16)
        h1 = jax.nn.gelu(jnp.dot(x_bf, w1_ref[l], preferred_element_type=f32) + b1_ref[l],
                         approximate=True)                             # [N, INTER]
        ffn = jnp.dot(h1.astype(bf16), w2_ref[l], preferred_element_type=f32) + b2_ref[l]
        x = layer_norm(ffn + x, ln2g_ref[l], ln2b_ref[l])

    # ---- MLM head: transform + tied decoder (contract on H, no transpose) + CE ----
    x_bf = x.astype(bf16)
    t = jax.nn.gelu(jnp.dot(x_bf, mlm_w_ref[...], preferred_element_type=f32) + mlm_b_ref[...],
                    approximate=True)
    t = layer_norm(t, mlm_lng_ref[...], mlm_lnb_ref[...])
    logits = jax.lax.dot_general(                                      # [N, V] lane-dense
        t.astype(bf16), word_emb_bf,
        dimension_numbers=(((1,), (1,)), ((), ())),
        preferred_element_type=f32) + dec_b_ref[...]

    lab = mlm_lab_ref[...]                                             # [N, 1] int32
    m = jnp.max(logits, axis=-1, keepdims=True)
    lse = jnp.log(jnp.sum(jnp.exp(logits - m), axis=-1, keepdims=True)) + m
    col = jax.lax.broadcasted_iota(jnp.int32, logits.shape, 1)
    tgt = jnp.sum(jnp.where(col == lab, logits, 0.0), axis=-1, keepdims=True)
    valid = (lab != -100).astype(f32)
    mlm_loss = jnp.sum((lse - tgt) * valid) / jnp.maximum(jnp.sum(valid), 1.0)

    # ---- NSP head: pooler on the [CLS] token of each sequence + cross-entropy ----
    cls = x.reshape(B, S, H)[:, 0, :]                                  # [B, H] (layout-free)
    pooled = jnp.tanh(jnp.dot(cls.astype(bf16), pool_w_ref[...],
                              preferred_element_type=f32) + pool_b_ref[...])
    nsp_logits = jnp.dot(pooled.astype(bf16), nsp_w_ref[...],
                         preferred_element_type=f32) + nsp_b_ref[...]  # [B, 2]

    nlab = nsp_lab_ref[...]                                            # [B, 1] int32
    m2 = jnp.max(nsp_logits, axis=-1, keepdims=True)
    lse2 = jnp.log(jnp.sum(jnp.exp(nsp_logits - m2), axis=-1, keepdims=True)) + m2
    col2 = jax.lax.broadcasted_iota(jnp.int32, nsp_logits.shape, 1)
    tgt2 = jnp.sum(jnp.where(col2 == nlab, nsp_logits, 0.0), axis=-1, keepdims=True)
    nsp_loss = jnp.mean(lse2 - tgt2)

    # Scalar losses -> SMEM output (no masked VMEM tile store).
    out_ref[0, 0] = mlm_loss
    out_ref[0, 1] = nsp_loss


# ------------------------------ params & glue ---------------------------------

def init_params(key):
    keys = jax.random.split(key, 32)
    ki = iter(keys)
    bf = jnp.bfloat16

    def nrm(shape, dtype=jnp.float32):
        return (jax.random.normal(next(ki), shape, jnp.float32) * 0.02).astype(dtype)

    p = {
        # word embedding (bf16): used for the in-kernel one-hot gather AND the tied decoder
        "word_emb": nrm((VOCAB, HIDDEN), bf),
        "pos_emb": nrm((MAX_POS, HIDDEN)),
        "tok_emb": nrm((2, HIDDEN)),
        "emb_ln_g": jnp.ones((1, HIDDEN), jnp.float32),
        "emb_ln_b": jnp.zeros((1, HIDDEN), jnp.float32),
        # encoder layers, stacked over LAYERS; Q/K/V merged into one [H, 3H] weight
        "wqkv": nrm((LAYERS, HIDDEN, 3 * HIDDEN), bf),
        "bqkv": jnp.zeros((LAYERS, 1, 3 * HIDDEN), jnp.float32),
        "wo": nrm((LAYERS, HIDDEN, HIDDEN), bf),
        "bo": jnp.zeros((LAYERS, 1, HIDDEN), jnp.float32),
        "ln1_g": jnp.ones((LAYERS, 1, HIDDEN), jnp.float32),
        "ln1_b": jnp.zeros((LAYERS, 1, HIDDEN), jnp.float32),
        "w1": nrm((LAYERS, HIDDEN, INTER), bf),
        "b1": jnp.zeros((LAYERS, 1, INTER), jnp.float32),
        "w2": nrm((LAYERS, INTER, HIDDEN), bf),
        "b2": jnp.zeros((LAYERS, 1, HIDDEN), jnp.float32),
        "ln2_g": jnp.ones((LAYERS, 1, HIDDEN), jnp.float32),
        "ln2_b": jnp.zeros((LAYERS, 1, HIDDEN), jnp.float32),
        # MLM transform head (decoder weight is tied to word_emb; only its bias is separate)
        "mlm_w": nrm((HIDDEN, HIDDEN), bf),
        "mlm_b": jnp.zeros((1, HIDDEN), jnp.float32),
        "mlm_ln_g": jnp.ones((1, HIDDEN), jnp.float32),
        "mlm_ln_b": jnp.zeros((1, HIDDEN), jnp.float32),
        "dec_b": jnp.zeros((1, VOCAB), jnp.float32),
        # pooler + NSP classifier
        "pool_w": nrm((HIDDEN, HIDDEN), bf),
        "pool_b": jnp.zeros((1, HIDDEN), jnp.float32),
        "nsp_w": nrm((HIDDEN, 2), bf),
        "nsp_b": jnp.zeros((1, 2), jnp.float32),
    }
    return p


def post_training_bert_forward(params, ids, attn_mask, labels, next_sentence_label):
    """Returns (mlm_loss, nsp_loss) — same contract as PostTrainingBert.forward."""
    B, S = ids.shape
    H = HIDDEN
    N = B * S
    nH, Dh = HEADS, HIDDEN // HEADS

    operands = (
        ids.reshape(N, 1).astype(jnp.int32),
        attn_mask.astype(jnp.int32),
        labels.reshape(N, 1).astype(jnp.int32),
        next_sentence_label.reshape(B, 1).astype(jnp.int32),
        params["word_emb"], params["pos_emb"], params["tok_emb"],
        params["emb_ln_g"], params["emb_ln_b"],
        params["wqkv"], params["bqkv"], params["wo"], params["bo"],
        params["ln1_g"], params["ln1_b"],
        params["w1"], params["b1"], params["w2"], params["b2"],
        params["ln2_g"], params["ln2_b"],
        params["mlm_w"], params["mlm_b"], params["mlm_ln_g"], params["mlm_ln_b"],
        params["dec_b"],
        params["pool_w"], params["pool_b"], params["nsp_w"], params["nsp_b"],
    )
    in_specs = [_vmem_spec(op.shape) for op in operands]

    flops = (
        2 * N * VOCAB * H                                    # one-hot embedding gather
        + LAYERS * (2 * N * H * 3 * H                        # fused QKV projection
                    + 2 * (2 * B * nH * S * S * Dh)          # batched scores + context
                    + 2 * N * H * H                          # attention output proj
                    + 2 * 2 * N * H * INTER)                 # FFN (both matmuls)
        + 2 * N * H * H                                      # MLM transform
        + 2 * N * H * VOCAB                                  # tied decoder
        + 2 * B * H * H                                      # pooler
        + 2 * B * H * 2)                                     # NSP classifier
    transcendentals = (LAYERS * (B * nH * S * S + N * INTER)
                       + N * H + N * VOCAB + B * H + B * 2)
    bytes_accessed = sum(int(op.size) * op.dtype.itemsize for op in operands) + 8

    losses = pl.pallas_call(
        functools.partial(_fused_bert_kernel, num_heads=HEADS),
        out_shape=jax.ShapeDtypeStruct((1, 2), jnp.float32),
        in_specs=in_specs,
        out_specs=pl.BlockSpec(memory_space=pltpu.MemorySpace.SMEM),
        cost_estimate=pl.CostEstimate(flops=flops,
                                      transcendentals=transcendentals,
                                      bytes_accessed=bytes_accessed),
    )(*operands)

    return losses[0, 0], losses[0, 1]


# ----------------------------------- main -------------------------------------

if __name__ == "__main__":
    key = jax.random.PRNGKey(0)
    k_ids, k_lab, k_par = jax.random.split(key, 3)

    ids = jax.random.randint(k_ids, (BATCH, SEQ), 0, VOCAB, dtype=jnp.int32)
    attn_mask = jnp.ones((BATCH, SEQ), jnp.int32).at[1, SEQ - 2:].set(0)

    # MLM labels: -100 everywhere except a couple of masked positions.
    labels = jnp.full((BATCH, SEQ), -100, jnp.int32)
    masked_targets = jax.random.randint(k_lab, (BATCH, 2), 0, VOCAB, dtype=jnp.int32)
    labels = labels.at[:, 1].set(masked_targets[:, 0]).at[:, 3].set(masked_targets[:, 1])

    next_sentence_label = jnp.array([0, 1], jnp.int32)

    params = init_params(k_par)

    fwd = jax.jit(post_training_bert_forward)
    mlm_loss, nsp_loss = fwd(params, ids, attn_mask, labels, next_sentence_label)
    jax.block_until_ready((mlm_loss, nsp_loss))

    assert mlm_loss.shape == () and nsp_loss.shape == ()
    assert bool(jnp.isfinite(mlm_loss)) and bool(jnp.isfinite(nsp_loss))
    print("KERNEL_OK")
</pallas_src>

<mosaic_0001>
module attributes {stable_mosaic.version = 11 : i64} {
  func.func @_fused_bert_kernel(%arg0: memref<16x1xi32, #tpu.memory_space<vmem>>, %arg1: memref<2x8xi32, #tpu.memory_space<vmem>>, %arg2: memref<16x1xi32, #tpu.memory_space<vmem>>, %arg3: memref<2x1xi32, #tpu.memory_space<vmem>>, %arg4: memref<128x32xbf16, #tpu.memory_space<vmem>>, %arg5: memref<16x32xf32, #tpu.memory_space<vmem>>, %arg6: memref<2x32xf32, #tpu.memory_space<vmem>>, %arg7: memref<1x32xf32, #tpu.memory_space<vmem>>, %arg8: memref<1x32xf32, #tpu.memory_space<vmem>>, %arg9: memref<2x32x96xbf16, #tpu.memory_space<vmem>>, %arg10: memref<2x1x96xf32, #tpu.memory_space<vmem>>, %arg11: memref<2x32x32xbf16, #tpu.memory_space<vmem>>, %arg12: memref<2x1x32xf32, #tpu.memory_space<vmem>>, %arg13: memref<2x1x32xf32, #tpu.memory_space<vmem>>, %arg14: memref<2x1x32xf32, #tpu.memory_space<vmem>>, %arg15: memref<2x32x64xbf16, #tpu.memory_space<vmem>>, %arg16: memref<2x1x64xf32, #tpu.memory_space<vmem>>, %arg17: memref<2x64x32xbf16, #tpu.memory_space<vmem>>, %arg18: memref<2x1x32xf32, #tpu.memory_space<vmem>>, %arg19: memref<2x1x32xf32, #tpu.memory_space<vmem>>, %arg20: memref<2x1x32xf32, #tpu.memory_space<vmem>>, %arg21: memref<32x32xbf16, #tpu.memory_space<vmem>>, %arg22: memref<1x32xf32, #tpu.memory_space<vmem>>, %arg23: memref<1x32xf32, #tpu.memory_space<vmem>>, %arg24: memref<1x32xf32, #tpu.memory_space<vmem>>, %arg25: memref<1x128xf32, #tpu.memory_space<vmem>>, %arg26: memref<32x32xbf16, #tpu.memory_space<vmem>>, %arg27: memref<1x32xf32, #tpu.memory_space<vmem>>, %arg28: memref<32x2xbf16, #tpu.memory_space<vmem>>, %arg29: memref<1x2xf32, #tpu.memory_space<vmem>>, %arg30: memref<1x2xf32, #tpu.memory_space<smem>>) attributes {dimension_semantics = [], scalar_prefetch = 0 : i64, scratch_operands = 0 : i64, tpu.core_type = #tpu.core_type<tc>} {
    %c0 = arith.constant 0 : index
    %c0_0 = arith.constant 0 : index
    %0 = vector.load %arg4[%c0, %c0_0] : memref<128x32xbf16, #tpu.memory_space<vmem>>, vector<128x32xbf16>
    %1 = tpu.iota {dimensions = array<i32: 1>} : vector<16x128xi32>
    %c0_1 = arith.constant 0 : index
    %c0_2 = arith.constant 0 : index
    %2 = vector.load %arg0[%c0_1, %c0_2] : memref<16x1xi32, #tpu.memory_space<vmem>>, vector<16x1xi32>
    %3 = vector.broadcast %2 : vector<16x1xi32> to vector<16x128xi32>
    %4 = arith.cmpi eq, %1, %3 : vector<16x128xi32>
    %5 = arith.extui %4 : vector<16x128xi1> to vector<16x128xi32>
    %6 = arith.sitofp %5 : vector<16x128xi32> to vector<16x128xf32>
    %7 = arith.truncf %6 : vector<16x128xf32> to vector<16x128xbf16>
    %cst = arith.constant dense<0.000000e+00> : vector<16x32xf32>
    %8 = tpu.matmul %7, %0, %cst {dimension_numbers = #tpu.dot_dimension_numbers<[1], [0], [0], [1], [0, 0, 1, 1], [], []>} : vector<16x128xbf16>, vector<128x32xbf16>, vector<16x32xf32> -> vector<16x32xf32>
    %c0_3 = arith.constant 0 : index
    %c0_4 = arith.constant 0 : index
    %9 = vector.load %arg5[%c0_3, %c0_4] : memref<16x32xf32, #tpu.memory_space<vmem>>, vector<8x32xf32>
    %c0_5 = arith.constant 0 : index
    %c0_6 = arith.constant 0 : index
    %10 = vector.load %arg6[%c0_5, %c0_6] : memref<2x32xf32, #tpu.memory_space<vmem>>, vector<1x32xf32>
    %11 = vector.broadcast %10 : vector<1x32xf32> to vector<8x32xf32>
    %12 = arith.addf %9, %11 : vector<8x32xf32>
    %13 = vector.shape_cast %8 : vector<16x32xf32> to vector<2x8x32xf32>
    %14 = vector.shape_cast %12 : vector<8x32xf32> to vector<1x8x32xf32>
    %15 = vector.broadcast %14 : vector<1x8x32xf32> to vector<2x8x32xf32>
    %16 = arith.addf %13, %15 : vector<2x8x32xf32>
    %17 = vector.shape_cast %16 : vector<2x8x32xf32> to vector<16x32xf32>
    %c0_7 = arith.constant 0 : index
    %c0_8 = arith.constant 0 : index
    %18 = vector.load %arg7[%c0_7, %c0_8] : memref<1x32xf32, #tpu.memory_space<vmem>>, vector<1x32xf32>
    %c0_9 = arith.constant 0 : index
    %c0_10 = arith.constant 0 : index
    %19 = vector.load %arg8[%c0_9, %c0_10] : memref<1x32xf32, #tpu.memory_space<vmem>>, vector<1x32xf32>
    %cst_11 = arith.constant dense<0.000000e+00> : vector<16xf32>
    %20 = vector.multi_reduction <add>, %17, %cst_11 [1] : vector<16x32xf32> to vector<16xf32>
    %21 = vector.shape_cast %20 : vector<16xf32> to vector<16x1xf32>
    %cst_12 = arith.constant 3.200000e+01 : f32
    %22 = vector.broadcast %cst_12 : f32 to vector<16x1xf32>
    %23 = arith.divf %21, %22 : vector<16x1xf32>
    %24 = vector.broadcast %23 : vector<16x1xf32> to vector<16x32xf32>
    %25 = arith.subf %17, %24 : vector<16x32xf32>
    %26 = vector.broadcast %23 : vector<16x1xf32> to vector<16x32xf32>
    %27 = arith.subf %17, %26 : vector<16x32xf32>
    %28 = arith.mulf %25, %27 : vector<16x32xf32>
    %cst_13 = arith.constant dense<0.000000e+00> : vector<16xf32>
    %29 = vector.multi_reduction <add>, %28, %cst_13 [1] : vector<16x32xf32> to vector<16xf32>
    %30 = vector.shape_cast %29 : vector<16xf32> to vector<16x1xf32>
    %cst_14 = arith.constant 3.200000e+01 : f32
    %31 = vector.broadcast %cst_14 : f32 to vector<16x1xf32>
    %32 = arith.divf %30, %31 : vector<16x1xf32>
    %33 = vector.broadcast %23 : vector<16x1xf32> to vector<16x32xf32>
    %34 = arith.subf %17, %33 : vector<16x32xf32>
    %cst_15 = arith.constant 9.99999996E-13 : f32
    %35 = vector.broadcast %cst_15 : f32 to vector<16x1xf32>
    %36 = arith.addf %32, %35 : vector<16x1xf32>
    %37 = math.rsqrt %36 : vector<16x1xf32>
    %38 = vector.broadcast %37 : vector<16x1xf32> to vector<16x32xf32>
    %39 = arith.mulf %34, %38 : vector<16x32xf32>
    %40 = vector.broadcast %18 : vector<1x32xf32> to vector<16x32xf32>
    %41 = arith.mulf %39, %40 : vector<16x32xf32>
    %42 = vector.broadcast %19 : vector<1x32xf32> to vector<16x32xf32>
    %43 = arith.addf %41, %42 : vector<16x32xf32>
    %c0_16 = arith.constant 0 : index
    %c0_17 = arith.constant 0 : index
    %44 = vector.load %arg1[%c0_16, %c0_17] : memref<2x8xi32, #tpu.memory_space<vmem>>, vector<2x8xi32>
    %c1_i32 = arith.constant 1 : i32
    %45 = vector.broadcast %c1_i32 : i32 to vector<2x8xi32>
    %46 = arith.subi %45, %44 : vector<2x8xi32>
    %47 = arith.sitofp %46 : vector<2x8xi32> to vector<2x8xf32>
    %cst_18 = arith.constant -1.000000e+09 : f32
    %48 = vector.broadcast %cst_18 : f32 to vector<2x8xf32>
    %49 = arith.mulf %47, %48 : vector<2x8xf32>
    %50 = vector.shape_cast %49 : vector<2x8xf32> to vector<2x1x1x8xf32>
    %51 = vector.shape_cast %50 : vector<2x1x1x8xf32> to vector<2x1x1x8xf32>
    %52 = vector.broadcast %51 : vector<2x1x1x8xf32> to vector<2x4x1x8xf32>
    %53 = vector.shape_cast %52 : vector<2x4x1x8xf32> to vector<8x1x8xf32>
    %54 = arith.truncf %43 : vector<16x32xf32> to vector<16x32xbf16>
    %c0_19 = arith.constant 0 : index
    %c0_20 = arith.constant 0 : index
    %c0_21 = arith.constant 0 : index
    %55 = vector.load %arg9[%c0_19, %c0_20, %c0_21] : memref<2x32x96xbf16, #tpu.memory_space<vmem>>, vector<1x32x96xbf16>
    %56 = vector.shape_cast %55 : vector<1x32x96xbf16> to vector<32x96xbf16>
    %cst_22 = arith.constant dense<0.000000e+00> : vector<16x96xf32>
    %57 = tpu.matmul %54, %56, %cst_22 {dimension_numbers = #tpu.dot_dimension_numbers<[1], [0], [0], [1], [0, 0, 1, 1], [], []>} : vector<16x32xbf16>, vector<32x96xbf16>, vector<16x96xf32> -> vector<16x96xf32>
    %c0_23 = arith.constant 0 : index
    %c0_24 = arith.constant 0 : index
    %c0_25 = arith.constant 0 : index
    %58 = vector.load %arg10[%c0_23, %c0_24, %c0_25] : memref<2x1x96xf32, #tpu.memory_space<vmem>>, vector<1x1x96xf32>
    %59 = vector.shape_cast %58 : vector<1x1x96xf32> to vector<1x96xf32>
    %60 = vector.broadcast %59 : vector<1x96xf32> to vector<16x96xf32>
    %61 = arith.addf %57, %60 : vector<16x96xf32>
    %62 = vector.extract_strided_slice %61 {offsets = [0, 0], sizes = [16, 32], strides = [1, 1]} : vector<16x96xf32> to vector<16x32xf32>
    %63 = vector.shape_cast %62 : vector<16x32xf32> to vector<2x8x4x8xf32>
    %64 = tpu.transpose %63, [0, 2, 1, 3] : vector<2x8x4x8xf32> -> vector<2x4x8x8xf32>
    %65 = vector.shape_cast %64 : vector<2x4x8x8xf32> to vector<8x8x8xf32>
    %66 = arith.truncf %65 : vector<8x8x8xf32> to vector<8x8x8xbf16>
    %67 = vector.extract_strided_slice %61 {offsets = [0, 32], sizes = [16, 32], strides = [1, 1]} : vector<16x96xf32> to vector<16x32xf32>
    %68 = vector.shape_cast %67 : vector<16x32xf32> to vector<2x8x4x8xf32>
    %69 = tpu.transpose %68, [0, 2, 1, 3] : vector<2x8x4x8xf32> -> vector<2x4x8x8xf32>
    %70 = vector.shape_cast %69 : vector<2x4x8x8xf32> to vector<8x8x8xf32>
    %71 = arith.truncf %70 : vector<8x8x8xf32> to vector<8x8x8xbf16>
    %72 = vector.extract_strided_slice %61 {offsets = [0, 64], sizes = [16, 32], strides = [1, 1]} : vector<16x96xf32> to vector<16x32xf32>
    %73 = vector.shape_cast %72 : vector<16x32xf32> to vector<2x8x4x8xf32>
    %74 = tpu.transpose %73, [0, 2, 1, 3] : vector<2x8x4x8xf32> -> vector<2x4x8x8xf32>
    %75 = vector.shape_cast %74 : vector<2x4x8x8xf32> to vector<8x8x8xf32>
    %76 = arith.truncf %75 : vector<8x8x8xf32> to vector<8x8x8xbf16>
    "tpu.trace_start"() <{level = 10 : i32, message = "gqd,gkd->gqk"}> : () -> ()
    %cst_26 = arith.constant dense<0.000000e+00> : vector<8x8x8xf32>
    %77 = tpu.matmul %66, %71, %cst_26 {dimension_numbers = #tpu.dot_dimension_numbers<[2], [2], [1], [1], [0, 0, 0, 1, 1, 1], [0], [0]>} : vector<8x8x8xbf16>, vector<8x8x8xbf16>, vector<8x8x8xf32> -> vector<8x8x8xf32>
    "tpu.trace_stop"() : () -> ()
    %cst_27 = arith.constant 0.353553385 : f32
    %78 = vector.broadcast %cst_27 : f32 to vector<8x8x8xf32>
    %79 = arith.mulf %77, %78 : vector<8x8x8xf32>
    %80 = vector.broadcast %53 : vector<8x1x8xf32> to vector<8x8x8xf32>
    %81 = arith.addf %79, %80 : vector<8x8x8xf32>
    %cst_28 = arith.constant dense<0xFF800000> : vector<8x8xf32>
    %82 = vector.multi_reduction <maximumf>, %81, %cst_28 [2] : vector<8x8x8xf32> to vector<8x8xf32>
    %83 = vector.shape_cast %82 : vector<8x8xf32> to vector<8x8x1xf32>
    %84 = vector.broadcast %83 : vector<8x8x1xf32> to vector<8x8x8xf32>
    %85 = arith.subf %81, %84 : vector<8x8x8xf32>
    %86 = math.exp %85 : vector<8x8x8xf32>
    %cst_29 = arith.constant dense<0.000000e+00> : vector<8x8xf32>
    %87 = vector.multi_reduction <add>, %86, %cst_29 [2] : vector<8x8x8xf32> to vector<8x8xf32>
    %88 = vector.shape_cast %87 : vector<8x8xf32> to vector<8x8x1xf32>
    %89 = tpu.reciprocal %88 {approx = true} : vector<8x8x1xf32> -> vector<8x8x1xf32>
    %90 = vector.broadcast %89 : vector<8x8x1xf32> to vector<8x8x8xf32>
    %91 = arith.mulf %86, %90 : vector<8x8x8xf32>
    %92 = arith.truncf %91 : vector<8x8x8xf32> to vector<8x8x8xbf16>
    "tpu.trace_start"() <{level = 10 : i32, message = "gqk,gkd->gqd"}> : () -> ()
    %cst_30 = arith.constant dense<0.000000e+00> : vector<8x8x8xf32>
    %93 = tpu.matmul %92, %76, %cst_30 {dimension_numbers = #tpu.dot_dimension_numbers<[2], [1], [1], [2], [0, 0, 0, 1, 1, 2], [0], [0]>} : vector<8x8x8xbf16>, vector<8x8x8xbf16>, vector<8x8x8xf32> -> vector<8x8x8xf32>
    "tpu.trace_stop"() : () -> ()
    %94 = vector.shape_cast %93 : vector<8x8x8xf32> to vector<2x4x8x8xf32>
    %95 = tpu.transpose %94, [0, 2, 1, 3] : vector<2x4x8x8xf32> -> vector<2x8x4x8xf32>
    %96 = vector.shape_cast %95 : vector<2x8x4x8xf32> to vector<16x32xf32>
    %97 = arith.truncf %96 : vector<16x32xf32> to vector<16x32xbf16>
    %c0_31 = arith.constant 0 : index
    %c0_32 = arith.constant 0 : index
    %c0_33 = arith.constant 0 : index
    %98 = vector.load %arg11[%c0_31, %c0_32, %c0_33] : memref<2x32x32xbf16, #tpu.memory_space<vmem>>, vector<1x32x32xbf16>
    %99 = vector.shape_cast %98 : vector<1x32x32xbf16> to vector<32x32xbf16>
    %cst_34 = arith.constant dense<0.000000e+00> : vector<16x32xf32>
    %100 = tpu.matmul %97, %99, %cst_34 {dimension_numbers = #tpu.dot_dimension_numbers<[1], [0], [0], [1], [0, 0, 1, 1], [], []>} : vector<16x32xbf16>, vector<32x32xbf16>, vector<16x32xf32> -> vector<16x32xf32>
    %c0_35 = arith.constant 0 : index
    %c0_36 = arith.constant 0 : index
    %c0_37 = arith.constant 0 : index
    %101 = vector.load %arg12[%c0_35, %c0_36, %c0_37] : memref<2x1x32xf32, #tpu.memory_space<vmem>>, vector<1x1x32xf32>
    %102 = vector.shape_cast %101 : vector<1x1x32xf32> to vector<1x32xf32>
    %103 = vector.broadcast %102 : vector<1x32xf32> to vector<16x32xf32>
    %104 = arith.addf %100, %103 : vector<16x32xf32>
    %105 = arith.addf %104, %43 : vector<16x32xf32>
    %c0_38 = arith.constant 0 : index
    %c0_39 = arith.constant 0 : index
    %c0_40 = arith.constant 0 : index
    %106 = vector.load %arg13[%c0_38, %c0_39, %c0_40] : memref<2x1x32xf32, #tpu.memory_space<vmem>>, vector<1x1x32xf32>
    %107 = vector.shape_cast %106 : vector<1x1x32xf32> to vector<1x32xf32>
    %c0_41 = arith.constant 0 : index
    %c0_42 = arith.constant 0 : index
    %c0_43 = arith.constant 0 : index
    %108 = vector.load %arg14[%c0_41, %c0_42, %c0_43] : memref<2x1x32xf32, #tpu.memory_space<vmem>>, vector<1x1x32xf32>
    %109 = vector.shape_cast %108 : vector<1x1x32xf32> to vector<1x32xf32>
    %cst_44 = arith.constant dense<0.000000e+00> : vector<16xf32>
    %110 = vector.multi_reduction <add>, %105, %cst_44 [1] : vector<16x32xf32> to vector<16xf32>
    %111 = vector.shape_cast %110 : vector<16xf32> to vector<16x1xf32>
    %cst_45 = arith.constant 3.200000e+01 : f32
    %112 = vector.broadcast %cst_45 : f32 to vector<16x1xf32>
    %113 = arith.divf %111, %112 : vector<16x1xf32>
    %114 = vector.broadcast %113 : vector<16x1xf32> to vector<16x32xf32>
    %115 = arith.subf %105, %114 : vector<16x32xf32>
    %116 = vector.broadcast %113 : vector<16x1xf32> to vector<16x32xf32>
    %117 = arith.subf %105, %116 : vector<16x32xf32>
    %118 = arith.mulf %115, %117 : vector<16x32xf32>
    %cst_46 = arith.constant dense<0.000000e+00> : vector<16xf32>
    %119 = vector.multi_reduction <add>, %118, %cst_46 [1] : vector<16x32xf32> to vector<16xf32>
    %120 = vector.shape_cast %119 : vector<16xf32> to vector<16x1xf32>
    %cst_47 = arith.constant 3.200000e+01 : f32
    %121 = vector.broadcast %cst_47 : f32 to vector<16x1xf32>
    %122 = arith.divf %120, %121 : vector<16x1xf32>
    %123 = vector.broadcast %113 : vector<16x1xf32> to vector<16x32xf32>
    %124 = arith.subf %105, %123 : vector<16x32xf32>
    %cst_48 = arith.constant 9.99999996E-13 : f32
    %125 = vector.broadcast %cst_48 : f32 to vector<16x1xf32>
    %126 = arith.addf %122, %125 : vector<16x1xf32>
    %127 = math.rsqrt %126 : vector<16x1xf32>
    %128 = vector.broadcast %127 : vector<16x1xf32> to vector<16x32xf32>
    %129 = arith.mulf %124, %128 : vector<16x32xf32>
    %130 = vector.broadcast %107 : vector<1x32xf32> to vector<16x32xf32>
    %131 = arith.mulf %129, %130 : vector<16x32xf32>
    %132 = vector.broadcast %109 : vector<1x32xf32> to vector<16x32xf32>
    %133 = arith.addf %131, %132 : vector<16x32xf32>
    %134 = arith.truncf %133 : vector<16x32xf32> to vector<16x32xbf16>
    %c0_49 = arith.constant 0 : index
    %c0_50 = arith.constant 0 : index
    %c0_51 = arith.constant 0 : index
    %135 = vector.load %arg15[%c0_49, %c0_50, %c0_51] : memref<2x32x64xbf16, #tpu.memory_space<vmem>>, vector<1x32x64xbf16>
    %136 = vector.shape_cast %135 : vector<1x32x64xbf16> to vector<32x64xbf16>
    %cst_52 = arith.constant dense<0.000000e+00> : vector<16x64xf32>
    %137 = tpu.matmul %134, %136, %cst_52 {dimension_numbers = #tpu.dot_dimension_numbers<[1], [0], [0], [1], [0, 0, 1, 1], [], []>} : vector<16x32xbf16>, vector<32x64xbf16>, vector<16x64xf32> -> vector<16x64xf32>
    %c0_53 = arith.constant 0 : index
    %c0_54 = arith.constant 0 : index
    %c0_55 = arith.constant 0 : index
    %138 = vector.load %arg16[%c0_53, %c0_54, %c0_55] : memref<2x1x64xf32, #tpu.memory_space<vmem>>, vector<1x1x64xf32>
    %139 = vector.shape_cast %138 : vector<1x1x64xf32> to vector<1x64xf32>
    %140 = vector.broadcast %139 : vector<1x64xf32> to vector<16x64xf32>
    %141 = arith.addf %137, %140 : vector<16x64xf32>
    %142 = arith.mulf %141, %141 : vector<16x64xf32>
    %143 = arith.mulf %141, %142 : vector<16x64xf32>
    %cst_56 = arith.constant 4.471500e-02 : f32
    %144 = vector.broadcast %cst_56 : f32 to vector<16x64xf32>
    %145 = arith.mulf %144, %143 : vector<16x64xf32>
    %146 = arith.addf %141, %145 : vector<16x64xf32>
    %cst_57 = arith.constant 0.797884583 : f32
    %147 = vector.broadcast %cst_57 : f32 to vector<16x64xf32>
    %148 = arith.mulf %147, %146 : vector<16x64xf32>
    %149 = math.tanh %148 : vector<16x64xf32>
    %cst_58 = arith.constant 1.000000e+00 : f32
    %150 = vector.broadcast %cst_58 : f32 to vector<16x64xf32>
    %151 = arith.addf %150, %149 : vector<16x64xf32>
    %cst_59 = arith.constant 5.000000e-01 : f32
    %152 = vector.broadcast %cst_59 : f32 to vector<16x64xf32>
    %153 = arith.mulf %152, %151 : vector<16x64xf32>
    %154 = arith.mulf %141, %153 : vector<16x64xf32>
    %155 = arith.truncf %154 : vector<16x64xf32> to vector<16x64xbf16>
    %c0_60 = arith.constant 0 : index
    %c0_61 = arith.constant 0 : index
    %c0_62 = arith.constant 0 : index
    %156 = vector.load %arg17[%c0_60, %c0_61, %c0_62] : memref<2x64x32xbf16, #tpu.memory_space<vmem>>, vector<1x64x32xbf16>
    %157 = vector.shape_cast %156 : vector<1x64x32xbf16> to vector<64x32xbf16>
    %cst_63 = arith.constant dense<0.000000e+00> : vector<16x32xf32>
    %158 = tpu.matmul %155, %157, %cst_63 {dimension_numbers = #tpu.dot_dimension_numbers<[1], [0], [0], [1], [0, 0, 1, 1], [], []>} : vector<16x64xbf16>, vector<64x32xbf16>, vector<16x32xf32> -> vector<16x32xf32>
    %c0_64 = arith.constant 0 : index
    %c0_65 = arith.constant 0 : index
    %c0_66 = arith.constant 0 : index
    %159 = vector.load %arg18[%c0_64, %c0_65, %c0_66] : memref<2x1x32xf32, #tpu.memory_space<vmem>>, vector<1x1x32xf32>
    %160 = vector.shape_cast %159 : vector<1x1x32xf32> to vector<1x32xf32>
    %161 = vector.broadcast %160 : vector<1x32xf32> to vector<16x32xf32>
    %162 = arith.addf %158, %161 : vector<16x32xf32>
    %163 = arith.addf %162, %133 : vector<16x32xf32>
    %c0_67 = arith.constant 0 : index
    %c0_68 = arith.constant 0 : index
    %c0_69 = arith.constant 0 : index
    %164 = vector.load %arg19[%c0_67, %c0_68, %c0_69] : memref<2x1x32xf32, #tpu.memory_space<vmem>>, vector<1x1x32xf32>
    %165 = vector.shape_cast %164 : vector<1x1x32xf32> to vector<1x32xf32>
    %c0_70 = arith.constant 0 : index
    %c0_71 = arith.constant 0 : index
    %c0_72 = arith.constant 0 : index
    %166 = vector.load %arg20[%c0_70, %c0_71, %c0_72] : memref<2x1x32xf32, #tpu.memory_space<vmem>>, vector<1x1x32xf32>
    %167 = vector.shape_cast %166 : vector<1x1x32xf32> to vector<1x32xf32>
    %cst_73 = arith.constant dense<0.000000e+00> : vector<16xf32>
    %168 = vector.multi_reduction <add>, %163, %cst_73 [1] : vector<16x32xf32> to vector<16xf32>
    %169 = vector.shape_cast %168 : vector<16xf32> to vector<16x1xf32>
    %cst_74 = arith.constant 3.200000e+01 : f32
    %170 = vector.broadcast %cst_74 : f32 to vector<16x1xf32>
    %171 = arith.divf %169, %170 : vector<16x1xf32>
    %172 = vector.broadcast %171 : vector<16x1xf32> to vector<16x32xf32>
    %173 = arith.subf %163, %172 : vector<16x32xf32>
    %174 = vector.broadcast %171 : vector<16x1xf32> to vector<16x32xf32>
    %175 = arith.subf %163, %174 : vector<16x32xf32>
    %176 = arith.mulf %173, %175 : vector<16x32xf32>
    %cst_75 = arith.constant dense<0.000000e+00> : vector<16xf32>
    %177 = vector.multi_reduction <add>, %176, %cst_75 [1] : vector<16x32xf32> to vector<16xf32>
    %178 = vector.shape_cast %177 : vector<16xf32> to vector<16x1xf32>
    %cst_76 = arith.constant 3.200000e+01 : f32
    %179 = vector.broadcast %cst_76 : f32 to vector<16x1xf32>
    %180 = arith.divf %178, %179 : vector<16x1xf32>
    %181 = vector.broadcast %171 : vector<16x1xf32> to vector<16x32xf32>
    %182 = arith.subf %163, %181 : vector<16x32xf32>
    %cst_77 = arith.constant 9.99999996E-13 : f32
    %183 = vector.broadcast %cst_77 : f32 to vector<16x1xf32>
    %184 = arith.addf %180, %183 : vector<16x1xf32>
    %185 = math.rsqrt %184 : vector<16x1xf32>
    %186 = vector.broadcast %185 : vector<16x1xf32> to vector<16x32xf32>
    %187 = arith.mulf %182, %186 : vector<16x32xf32>
    %188 = vector.broadcast %165 : vector<1x32xf32> to vector<16x32xf32>
    %189 = arith.mulf %187, %188 : vector<16x32xf32>
    %190 = vector.broadcast %167 : vector<1x32xf32> to vector<16x32xf32>
    %191 = arith.addf %189, %190 : vector<16x32xf32>
    %192 = arith.truncf %191 : vector<16x32xf32> to vector<16x32xbf16>
    %c1 = arith.constant 1 : index
    %c0_78 = arith.constant 0 : index
    %c0_79 = arith.constant 0 : index
    %193 = vector.load %arg9[%c1, %c0_78, %c0_79] : memref<2x32x96xbf16, #tpu.memory_space<vmem>>, vector<1x32x96xbf16>
    %194 = vector.shape_cast %193 : vector<1x32x96xbf16> to vector<32x96xbf16>
    %cst_80 = arith.constant dense<0.000000e+00> : vector<16x96xf32>
    %195 = tpu.matmul %192, %194, %cst_80 {dimension_numbers = #tpu.dot_dimension_numbers<[1], [0], [0], [1], [0, 0, 1, 1], [], []>} : vector<16x32xbf16>, vector<32x96xbf16>, vector<16x96xf32> -> vector<16x96xf32>
    %c1_81 = arith.constant 1 : index
    %c0_82 = arith.constant 0 : index
    %c0_83 = arith.constant 0 : index
    %196 = vector.load %arg10[%c1_81, %c0_82, %c0_83] : memref<2x1x96xf32, #tpu.memory_space<vmem>>, vector<1x1x96xf32>
    %197 = vector.shape_cast %196 : vector<1x1x96xf32> to vector<1x96xf32>
    %198 = vector.broadcast %197 : vector<1x96xf32> to vector<16x96xf32>
    %199 = arith.addf %195, %198 : vector<16x96xf32>
    %200 = vector.extract_strided_slice %199 {offsets = [0, 0], sizes = [16, 32], strides = [1, 1]} : vector<16x96xf32> to vector<16x32xf32>
    %201 = vector.shape_cast %200 : vector<16x32xf32> to vector<2x8x4x8xf32>
    %202 = tpu.transpose %201, [0, 2, 1, 3] : vector<2x8x4x8xf32> -> vector<2x4x8x8xf32>
    %203 = vector.shape_cast %202 : vector<2x4x8x8xf32> to vector<8x8x8xf32>
    %204 = arith.truncf %203 : vector<8x8x8xf32> to vector<8x8x8xbf16>
    %205 = vector.extract_strided_slice %199 {offsets = [0, 32], sizes = [16, 32], strides = [1, 1]} : vector<16x96xf32> to vector<16x32xf32>
    %206 = vector.shape_cast %205 : vector<16x32xf32> to vector<2x8x4x8xf32>
    %207 = tpu.transpose %206, [0, 2, 1, 3] : vector<2x8x4x8xf32> -> vector<2x4x8x8xf32>
    %208 = vector.shape_cast %207 : vector<2x4x8x8xf32> to vector<8x8x8xf32>
    %209 = arith.truncf %208 : vector<8x8x8xf32> to vector<8x8x8xbf16>
    %210 = vector.extract_strided_slice %199 {offsets = [0, 64], sizes = [16, 32], strides = [1, 1]} : vector<16x96xf32> to vector<16x32xf32>
    %211 = vector.shape_cast %210 : vector<16x32xf32> to vector<2x8x4x8xf32>
    %212 = tpu.transpose %211, [0, 2, 1, 3] : vector<2x8x4x8xf32> -> vector<2x4x8x8xf32>
    %213 = vector.shape_cast %212 : vector<2x4x8x8xf32> to vector<8x8x8xf32>
    %214 = arith.truncf %213 : vector<8x8x8xf32> to vector<8x8x8xbf16>
    "tpu.trace_start"() <{level = 10 : i32, message = "gqd,gkd->gqk"}> : () -> ()
    %cst_84 = arith.constant dense<0.000000e+00> : vector<8x8x8xf32>
    %215 = tpu.matmul %204, %209, %cst_84 {dimension_numbers = #tpu.dot_dimension_numbers<[2], [2], [1], [1], [0, 0, 0, 1, 1, 1], [0], [0]>} : vector<8x8x8xbf16>, vector<8x8x8xbf16>, vector<8x8x8xf32> -> vector<8x8x8xf32>
    "tpu.trace_stop"() : () -> ()
    %cst_85 = arith.constant 0.353553385 : f32
    %216 = vector.broadcast %cst_85 : f32 to vector<8x8x8xf32>
    %217 = arith.mulf %215, %216 : vector<8x8x8xf32>
    %218 = vector.broadcast %53 : vector<8x1x8xf32> to vector<8x8x8xf32>
    %219 = arith.addf %217, %218 : vector<8x8x8xf32>
    %cst_86 = arith.constant dense<0xFF800000> : vector<8x8xf32>
    %220 = vector.multi_reduction <maximumf>, %219, %cst_86 [2] : vector<8x8x8xf32> to vector<8x8xf32>
    %221 = vector.shape_cast %220 : vector<8x8xf32> to vector<8x8x1xf32>
    %222 = vector.broadcast %221 : vector<8x8x1xf32> to vector<8x8x8xf32>
    %223 = arith.subf %219, %222 : vector<8x8x8xf32>
    %224 = math.exp %223 : vector<8x8x8xf32>
    %cst_87 = arith.constant dense<0.000000e+00> : vector<8x8xf32>
    %225 = vector.multi_reduction <add>, %224, %cst_87 [2] : vector<8x8x8xf32> to vector<8x8xf32>
    %226 = vector.shape_cast %225 : vector<8x8xf32> to vector<8x8x1xf32>
    %227 = tpu.reciprocal %226 {approx = true} : vector<8x8x1xf32> -> vector<8x8x1xf32>
    %228 = vector.broadcast %227 : vector<8x8x1xf32> to vector<8x8x8xf32>
    %229 = arith.mulf %224, %228 : vector<8x8x8xf32>
    %230 = arith.truncf %229 : vector<8x8x8xf32> to vector<8x8x8xbf16>
    "tpu.trace_start"() <{level = 10 : i32, message = "gqk,gkd->gqd"}> : () -> ()
    %cst_88 = arith.constant dense<0.000000e+00> : vector<8x8x8xf32>
    %231 = tpu.matmul %230, %214, %cst_88 {dimension_numbers = #tpu.dot_dimension_numbers<[2], [1], [1], [2], [0, 0, 0, 1, 1, 2], [0], [0]>} : vector<8x8x8xbf16>, vector<8x8x8xbf16>, vector<8x8x8xf32> -> vector<8x8x8xf32>
    "tpu.trace_stop"() : () -> ()
    %232 = vector.shape_cast %231 : vector<8x8x8xf32> to vector<2x4x8x8xf32>
    %233 = tpu.transpose %232, [0, 2, 1, 3] : vector<2x4x8x8xf32> -> vector<2x8x4x8xf32>
    %234 = vector.shape_cast %233 : vector<2x8x4x8xf32> to vector<16x32xf32>
    %235 = arith.truncf %234 : vector<16x32xf32> to vector<16x32xbf16>
    %c1_89 = arith.constant 1 : index
    %c0_90 = arith.constant 0 : index
    %c0_91 = arith.constant 0 : index
    %236 = vector.load %arg11[%c1_89, %c0_90, %c0_91] : memref<2x32x32xbf16, #tpu.memory_space<vmem>>, vector<1x32x32xbf16>
    %237 = vector.shape_cast %236 : vector<1x32x32xbf16> to vector<32x32xbf16>
    %cst_92 = arith.constant dense<0.000000e+00> : vector<16x32xf32>
    %238 = tpu.matmul %235, %237, %cst_92 {dimension_numbers = #tpu.dot_dimension_numbers<[1], [0], [0], [1], [0, 0, 1, 1], [], []>} : vector<16x32xbf16>, vector<32x32xbf16>, vector<16x32xf32> -> vector<16x32xf32>
    %c1_93 = arith.constant 1 : index
    %c0_94 = arith.constant 0 : index
    %c0_95 = arith.constant 0 : index
    %239 = vector.load %arg12[%c1_93, %c0_94, %c0_95] : memref<2x1x32xf32, #tpu.memory_space<vmem>>, vector<1x1x32xf32>
    %240 = vector.shape_cast %239 : vector<1x1x32xf32> to vector<1x32xf32>
    %241 = vector.broadcast %240 : vector<1x32xf32> to vector<16x32xf32>
    %242 = arith.addf %238, %241 : vector<16x32xf32>
    %243 = arith.addf %242, %191 : vector<16x32xf32>
    %c1_96 = arith.constant 1 : index
    %c0_97 = arith.constant 0 : index
    %c0_98 = arith.constant 0 : index
    %244 = vector.load %arg13[%c1_96, %c0_97, %c0_98] : memref<2x1x32xf32, #tpu.memory_space<vmem>>, vector<1x1x32xf32>
    %245 = vector.shape_cast %244 : vector<1x1x32xf32> to vector<1x32xf32>
    %c1_99 = arith.constant 1 : index
    %c0_100 = arith.constant 0 : index
    %c0_101 = arith.constant 0 : index
    %246 = vector.load %arg14[%c1_99, %c0_100, %c0_101] : memref<2x1x32xf32, #tpu.memory_space<vmem>>, vector<1x1x32xf32>
    %247 = vector.shape_cast %246 : vector<1x1x32xf32> to vector<1x32xf32>
    %cst_102 = arith.constant dense<0.000000e+00> : vector<16xf32>
    %248 = vector.multi_reduction <add>, %243, %cst_102 [1] : vector<16x32xf32> to vector<16xf32>
    %249 = vector.shape_cast %248 : vector<16xf32> to vector<16x1xf32>
    %cst_103 = arith.constant 3.200000e+01 : f32
    %250 = vector.broadcast %cst_103 : f32 to vector<16x1xf32>
    %251 = arith.divf %249, %250 : vector<16x1xf32>
    %252 = vector.broadcast %251 : vector<16x1xf32> to vector<16x32xf32>
    %253 = arith.subf %243, %252 : vector<16x32xf32>
    %254 = vector.broadcast %251 : vector<16x1xf32> to vector<16x32xf32>
    %255 = arith.subf %243, %254 : vector<16x32xf32>
    %256 = arith.mulf %253, %255 : vector<16x32xf32>
    %cst_104 = arith.constant dense<0.000000e+00> : vector<16xf32>
    %257 = vector.multi_reduction <add>, %256, %cst_104 [1] : vector<16x32xf32> to vector<16xf32>
    %258 = vector.shape_cast %257 : vector<16xf32> to vector<16x1xf32>
    %cst_105 = arith.constant 3.200000e+01 : f32
    %259 = vector.broadcast %cst_105 : f32 to vector<16x1xf32>
    %260 = arith.divf %258, %259 : vector<16x1xf32>
    %261 = vector.broadcast %251 : vector<16x1xf32> to vector<16x32xf32>
    %262 = arith.subf %243, %261 : vector<16x32xf32>
    %cst_106 = arith.constant 9.99999996E-13 : f32
    %263 = vector.broadcast %cst_106 : f32 to vector<16x1xf32>
    %264 = arith.addf %260, %263 : vector<16x1xf32>
    %265 = math.rsqrt %264 : vector<16x1xf32>
    %266 = vector.broadcast %265 : vector<16x1xf32> to vector<16x32xf32>
    %267 = arith.mulf %262, %266 : vector<16x32xf32>
    %268 = vector.broadcast %245 : vector<1x32xf32> to vector<16x32xf32>
    %269 = arith.mulf %267, %268 : vector<16x32xf32>
    %270 = vector.broadcast %247 : vector<1x32xf32> to vector<16x32xf32>
    %271 = arith.addf %269, %270 : vector<16x32xf32>
    %272 = arith.truncf %271 : vector<16x32xf32> to vector<16x32xbf16>
    %c1_107 = arith.constant 1 : index
    %c0_108 = arith.constant 0 : index
    %c0_109 = arith.constant 0 : index
    %273 = vector.load %arg15[%c1_107, %c0_108, %c0_109] : memref<2x32x64xbf16, #tpu.memory_space<vmem>>, vector<1x32x64xbf16>
    %274 = vector.shape_cast %273 : vector<1x32x64xbf16> to vector<32x64xbf16>
    %cst_110 = arith.constant dense<0.000000e+00> : vector<16x64xf32>
    %275 = tpu.matmul %272, %274, %cst_110 {dimension_numbers = #tpu.dot_dimension_numbers<[1], [0], [0], [1], [0, 0, 1, 1], [], []>} : vector<16x32xbf16>, vector<32x64xbf16>, vector<16x64xf32> -> vector<16x64xf32>
    %c1_111 = arith.constant 1 : index
    %c0_112 = arith.constant 0 : index
    %c0_113 = arith.constant 0 : index
    %276 = vector.load %arg16[%c1_111, %c0_112, %c0_113] : memref<2x1x64xf32, #tpu.memory_space<vmem>>, vector<1x1x64xf32>
    %277 = vector.shape_cast %276 : vector<1x1x64xf32> to vector<1x64xf32>
    %278 = vector.broadcast %277 : vector<1x64xf32> to vector<16x64xf32>
    %279 = arith.addf %275, %278 : vector<16x64xf32>
    %280 = arith.mulf %279, %279 : vector<16x64xf32>
    %281 = arith.mulf %279, %280 : vector<16x64xf32>
    %cst_114 = arith.constant 4.471500e-02 : f32
    %282 = vector.broadcast %cst_114 : f32 to vector<16x64xf32>
    %283 = arith.mulf %282, %281 : vector<16x64xf32>
    %284 = arith.addf %279, %283 : vector<16x64xf32>
    %cst_115 = arith.constant 0.797884583 : f32
    %285 = vector.broadcast %cst_115 : f32 to vector<16x64xf32>
    %286 = arith.mulf %285, %284 : vector<16x64xf32>
    %287 = math.tanh %286 : vector<16x64xf32>
    %cst_116 = arith.constant 1.000000e+00 : f32
    %288 = vector.broadcast %cst_116 : f32 to vector<16x64xf32>
    %289 = arith.addf %288, %287 : vector<16x64xf32>
    %cst_117 = arith.constant 5.000000e-01 : f32
    %290 = vector.broadcast %cst_117 : f32 to vector<16x64xf32>
    %291 = arith.mulf %290, %289 : vector<16x64xf32>
    %292 = arith.mulf %279, %291 : vector<16x64xf32>
    %293 = arith.truncf %292 : vector<16x64xf32> to vector<16x64xbf16>
    %c1_118 = arith.constant 1 : index
    %c0_119 = arith.constant 0 : index
    %c0_120 = arith.constant 0 : index
    %294 = vector.load %arg17[%c1_118, %c0_119, %c0_120] : memref<2x64x32xbf16, #tpu.memory_space<vmem>>, vector<1x64x32xbf16>
    %295 = vector.shape_cast %294 : vector<1x64x32xbf16> to vector<64x32xbf16>
    %cst_121 = arith.constant dense<0.000000e+00> : vector<16x32xf32>
    %296 = tpu.matmul %293, %295, %cst_121 {dimension_numbers = #tpu.dot_dimension_numbers<[1], [0], [0], [1], [0, 0, 1, 1], [], []>} : vector<16x64xbf16>, vector<64x32xbf16>, vector<16x32xf32> -> vector<16x32xf32>
    %c1_122 = arith.constant 1 : index
    %c0_123 = arith.constant 0 : index
    %c0_124 = arith.constant 0 : index
    %297 = vector.load %arg18[%c1_122, %c0_123, %c0_124] : memref<2x1x32xf32, #tpu.memory_space<vmem>>, vector<1x1x32xf32>
    %298 = vector.shape_cast %297 : vector<1x1x32xf32> to vector<1x32xf32>
    %299 = vector.broadcast %298 : vector<1x32xf32> to vector<16x32xf32>
    %300 = arith.addf %296, %299 : vector<16x32xf32>
    %301 = arith.addf %300, %271 : vector<16x32xf32>
    %c1_125 = arith.constant 1 : index
    %c0_126 = arith.constant 0 : index
    %c0_127 = arith.constant 0 : index
    %302 = vector.load %arg19[%c1_125, %c0_126, %c0_127] : memref<2x1x32xf32, #tpu.memory_space<vmem>>, vector<1x1x32xf32>
    %303 = vector.shape_cast %302 : vector<1x1x32xf32> to vector<1x32xf32>
    %c1_128 = arith.constant 1 : index
    %c0_129 = arith.constant 0 : index
    %c0_130 = arith.constant 0 : index
    %304 = vector.load %arg20[%c1_128, %c0_129, %c0_130] : memref<2x1x32xf32, #tpu.memory_space<vmem>>, vector<1x1x32xf32>
    %305 = vector.shape_cast %304 : vector<1x1x32xf32> to vector<1x32xf32>
    %cst_131 = arith.constant dense<0.000000e+00> : vector<16xf32>
    %306 = vector.multi_reduction <add>, %301, %cst_131 [1] : vector<16x32xf32> to vector<16xf32>
    %307 = vector.shape_cast %306 : vector<16xf32> to vector<16x1xf32>
    %cst_132 = arith.constant 3.200000e+01 : f32
    %308 = vector.broadcast %cst_132 : f32 to vector<16x1xf32>
    %309 = arith.divf %307, %308 : vector<16x1xf32>
    %310 = vector.broadcast %309 : vector<16x1xf32> to vector<16x32xf32>
    %311 = arith.subf %301, %310 : vector<16x32xf32>
    %312 = vector.broadcast %309 : vector<16x1xf32> to vector<16x32xf32>
    %313 = arith.subf %301, %312 : vector<16x32xf32>
    %314 = arith.mulf %311, %313 : vector<16x32xf32>
    %cst_133 = arith.constant dense<0.000000e+00> : vector<16xf32>
    %315 = vector.multi_reduction <add>, %314, %cst_133 [1] : vector<16x32xf32> to vector<16xf32>
    %316 = vector.shape_cast %315 : vector<16xf32> to vector<16x1xf32>
    %cst_134 = arith.constant 3.200000e+01 : f32
    %317 = vector.broadcast %cst_134 : f32 to vector<16x1xf32>
    %318 = arith.divf %316, %317 : vector<16x1xf32>
    %319 = vector.broadcast %309 : vector<16x1xf32> to vector<16x32xf32>
    %320 = arith.subf %301, %319 : vector<16x32xf32>
    %cst_135 = arith.constant 9.99999996E-13 : f32
    %321 = vector.broadcast %cst_135 : f32 to vector<16x1xf32>
    %322 = arith.addf %318, %321 : vector<16x1xf32>
    %323 = math.rsqrt %322 : vector<16x1xf32>
    %324 = vector.broadcast %323 : vector<16x1xf32> to vector<16x32xf32>
    %325 = arith.mulf %320, %324 : vector<16x32xf32>
    %326 = vector.broadcast %303 : vector<1x32xf32> to vector<16x32xf32>
    %327 = arith.mulf %325, %326 : vector<16x32xf32>
    %328 = vector.broadcast %305 : vector<1x32xf32> to vector<16x32xf32>
    %329 = arith.addf %327, %328 : vector<16x32xf32>
    %330 = arith.truncf %329 : vector<16x32xf32> to vector<16x32xbf16>
    %c0_136 = arith.constant 0 : index
    %c0_137 = arith.constant 0 : index
    %331 = vector.load %arg21[%c0_136, %c0_137] : memref<32x32xbf16, #tpu.memory_space<vmem>>, vector<32x32xbf16>
    %cst_138 = arith.constant dense<0.000000e+00> : vector<16x32xf32>
    %332 = tpu.matmul %330, %331, %cst_138 {dimension_numbers = #tpu.dot_dimension_numbers<[1], [0], [0], [1], [0, 0, 1, 1], [], []>} : vector<16x32xbf16>, vector<32x32xbf16>, vector<16x32xf32> -> vector<16x32xf32>
    %c0_139 = arith.constant 0 : index
    %c0_140 = arith.constant 0 : index
    %333 = vector.load %arg22[%c0_139, %c0_140] : memref<1x32xf32, #tpu.memory_space<vmem>>, vector<1x32xf32>
    %334 = vector.broadcast %333 : vector<1x32xf32> to vector<16x32xf32>
    %335 = arith.addf %332, %334 : vector<16x32xf32>
    %336 = arith.mulf %335, %335 : vector<16x32xf32>
    %337 = arith.mulf %335, %336 : vector<16x32xf32>
    %cst_141 = arith.constant 4.471500e-02 : f32
    %338 = vector.broadcast %cst_141 : f32 to vector<16x32xf32>
    %339 = arith.mulf %338, %337 : vector<16x32xf32>
    %340 = arith.addf %335, %339 : vector<16x32xf32>
    %cst_142 = arith.constant 0.797884583 : f32
    %341 = vector.broadcast %cst_142 : f32 to vector<16x32xf32>
    %342 = arith.mulf %341, %340 : vector<16x32xf32>
    %343 = math.tanh %342 : vector<16x32xf32>
    %cst_143 = arith.constant 1.000000e+00 : f32
    %344 = vector.broadcast %cst_143 : f32 to vector<16x32xf32>
    %345 = arith.addf %344, %343 : vector<16x32xf32>
    %cst_144 = arith.constant 5.000000e-01 : f32
    %346 = vector.broadcast %cst_144 : f32 to vector<16x32xf32>
    %347 = arith.mulf %346, %345 : vector<16x32xf32>
    %348 = arith.mulf %335, %347 : vector<16x32xf32>
    %c0_145 = arith.constant 0 : index
    %c0_146 = arith.constant 0 : index
    %349 = vector.load %arg23[%c0_145, %c0_146] : memref<1x32xf32, #tpu.memory_space<vmem>>, vector<1x32xf32>
    %c0_147 = arith.constant 0 : index
    %c0_148 = arith.constant 0 : index
    %350 = vector.load %arg24[%c0_147, %c0_148] : memref<1x32xf32, #tpu.memory_space<vmem>>, vector<1x32xf32>
    %cst_149 = arith.constant dense<0.000000e+00> : vector<16xf32>
    %351 = vector.multi_reduction <add>, %348, %cst_149 [1] : vector<16x32xf32> to vector<16xf32>
    %352 = vector.shape_cast %351 : vector<16xf32> to vector<16x1xf32>
    %cst_150 = arith.constant 3.200000e+01 : f32
    %353 = vector.broadcast %cst_150 : f32 to vector<16x1xf32>
    %354 = arith.divf %352, %353 : vector<16x1xf32>
    %355 = vector.broadcast %354 : vector<16x1xf32> to vector<16x32xf32>
    %356 = arith.subf %348, %355 : vector<16x32xf32>
    %357 = vector.broadcast %354 : vector<16x1xf32> to vector<16x32xf32>
    %358 = arith.subf %348, %357 : vector<16x32xf32>
    %359 = arith.mulf %356, %358 : vector<16x32xf32>
    %cst_151 = arith.constant dense<0.000000e+00> : vector<16xf32>
    %360 = vector.multi_reduction <add>, %359, %cst_151 [1] : vector<16x32xf32> to vector<16xf32>
    %361 = vector.shape_cast %360 : vector<16xf32> to vector<16x1xf32>
    %cst_152 = arith.constant 3.200000e+01 : f32
    %362 = vector.broadcast %cst_152 : f32 to vector<16x1xf32>
    %363 = arith.divf %361, %362 : vector<16x1xf32>
    %364 = vector.broadcast %354 : vector<16x1xf32> to vector<16x32xf32>
    %365 = arith.subf %348, %364 : vector<16x32xf32>
    %cst_153 = arith.constant 9.99999996E-13 : f32
    %366 = vector.broadcast %cst_153 : f32 to vector<16x1xf32>
    %367 = arith.addf %363, %366 : vector<16x1xf32>
    %368 = math.rsqrt %367 : vector<16x1xf32>
    %369 = vector.broadcast %368 : vector<16x1xf32> to vector<16x32xf32>
    %370 = arith.mulf %365, %369 : vector<16x32xf32>
    %371 = vector.broadcast %349 : vector<1x32xf32> to vector<16x32xf32>
    %372 = arith.mulf %370, %371 : vector<16x32xf32>
    %373 = vector.broadcast %350 : vector<1x32xf32> to vector<16x32xf32>
    %374 = arith.addf %372, %373 : vector<16x32xf32>
    %375 = arith.truncf %374 : vector<16x32xf32> to vector<16x32xbf16>
    %cst_154 = arith.constant dense<0.000000e+00> : vector<16x128xf32>
    %376 = tpu.matmul %375, %0, %cst_154 {dimension_numbers = #tpu.dot_dimension_numbers<[1], [1], [0], [0], [0, 0, 1, 0], [], []>} : vector<16x32xbf16>, vector<128x32xbf16>, vector<16x128xf32> -> vector<16x128xf32>
    %c0_155 = arith.constant 0 : index
    %c0_156 = arith.constant 0 : index
    %377 = vector.load %arg25[%c0_155, %c0_156] : memref<1x128xf32, #tpu.memory_space<vmem>>, vector<1x128xf32>
    %378 = vector.broadcast %377 : vector<1x128xf32> to vector<16x128xf32>
    %379 = arith.addf %376, %378 : vector<16x128xf32>
    %c0_157 = arith.constant 0 : index
    %c0_158 = arith.constant 0 : index
    %380 = vector.load %arg2[%c0_157, %c0_158] : memref<16x1xi32, #tpu.memory_space<vmem>>, vector<16x1xi32>
    %cst_159 = arith.constant dense<0xFF800000> : vector<16xf32>
    %381 = vector.multi_reduction <maximumf>, %379, %cst_159 [1] : vector<16x128xf32> to vector<16xf32>
    %382 = vector.shape_cast %381 : vector<16xf32> to vector<16x1xf32>
    %383 = vector.broadcast %382 : vector<16x1xf32> to vector<16x128xf32>
    %384 = arith.subf %379, %383 : vector<16x128xf32>
    %385 = math.exp %384 : vector<16x128xf32>
    %cst_160 = arith.constant dense<0.000000e+00> : vector<16xf32>
    %386 = vector.multi_reduction <add>, %385, %cst_160 [1] : vector<16x128xf32> to vector<16xf32>
    %387 = vector.shape_cast %386 : vector<16xf32> to vector<16x1xf32>
    %388 = math.log %387 : vector<16x1xf32>
    %389 = arith.addf %388, %382 : vector<16x1xf32>
    %390 = tpu.iota {dimensions = array<i32: 1>} : vector<16x128xi32>
    %391 = vector.broadcast %380 : vector<16x1xi32> to vector<16x128xi32>
    %392 = arith.cmpi eq, %390, %391 : vector<16x128xi32>
    %cst_161 = arith.constant 0.000000e+00 : f32
    %393 = vector.broadcast %cst_161 : f32 to vector<16x128xf32>
    %394 = arith.select %392, %379, %393 : vector<16x128xi1>, vector<16x128xf32>
    %cst_162 = arith.constant dense<0.000000e+00> : vector<16xf32>
    %395 = vector.multi_reduction <add>, %394, %cst_162 [1] : vector<16x128xf32> to vector<16xf32>
    %396 = vector.shape_cast %395 : vector<16xf32> to vector<16x1xf32>
    %c-100_i32 = arith.constant -100 : i32
    %397 = vector.broadcast %c-100_i32 : i32 to vector<16x1xi32>
    %398 = arith.cmpi ne, %380, %397 : vector<16x1xi32>
    %399 = arith.extui %398 : vector<16x1xi1> to vector<16x1xi32>
    %400 = arith.sitofp %399 : vector<16x1xi32> to vector<16x1xf32>
    %401 = arith.subf %389, %396 : vector<16x1xf32>
    %402 = arith.mulf %401, %400 : vector<16x1xf32>
    %403 = vector.shape_cast %402 : vector<16x1xf32> to vector<1x16x1xf32>
    %cst_163 = arith.constant dense<0.000000e+00> : vector<1xf32>
    %404 = vector.multi_reduction <add>, %403, %cst_163 [1, 2] : vector<1x16x1xf32> to vector<1xf32>
    %405 = vector.shape_cast %404 : vector<1xf32> to vector<1x1x1xf32>
    %406 = vector.extract %405[0, 0, 0] : f32 from vector<1x1x1xf32>
    %407 = vector.shape_cast %400 : vector<16x1xf32> to vector<1x16x1xf32>
    %cst_164 = arith.constant dense<0.000000e+00> : vector<1xf32>
    %408 = vector.multi_reduction <add>, %407, %cst_164 [1, 2] : vector<1x16x1xf32> to vector<1xf32>
    %409 = vector.shape_cast %408 : vector<1xf32> to vector<1x1x1xf32>
    %410 = vector.extract %409[0, 0, 0] : f32 from vector<1x1x1xf32>
    %cst_165 = arith.constant 1.000000e+00 : f32
    %411 = arith.maximumf %410, %cst_165 : f32
    %412 = arith.divf %406, %411 : f32
    %413 = vector.shape_cast %329 : vector<16x32xf32> to vector<2x8x32xf32>
    %414 = vector.extract_strided_slice %413 {offsets = [0, 0, 0], sizes = [2, 1, 32], strides = [1, 1, 1]} : vector<2x8x32xf32> to vector<2x1x32xf32>
    %415 = vector.shape_cast %414 : vector<2x1x32xf32> to vector<2x32xf32>
    %416 = arith.truncf %415 : vector<2x32xf32> to vector<2x32xbf16>
    %c0_166 = arith.constant 0 : index
    %c0_167 = arith.constant 0 : index
    %417 = vector.load %arg26[%c0_166, %c0_167] : memref<32x32xbf16, #tpu.memory_space<vmem>>, vector<32x32xbf16>
    %cst_168 = arith.constant dense<0.000000e+00> : vector<2x32xf32>
    %418 = tpu.matmul %416, %417, %cst_168 {dimension_numbers = #tpu.dot_dimension_numbers<[1], [0], [0], [1], [0, 0, 1, 1], [], []>} : vector<2x32xbf16>, vector<32x32xbf16>, vector<2x32xf32> -> vector<2x32xf32>
    %c0_169 = arith.constant 0 : index
    %c0_170 = arith.constant 0 : index
    %419 = vector.load %arg27[%c0_169, %c0_170] : memref<1x32xf32, #tpu.memory_space<vmem>>, vector<1x32xf32>
    %420 = vector.broadcast %419 : vector<1x32xf32> to vector<2x32xf32>
    %421 = arith.addf %418, %420 : vector<2x32xf32>
    %422 = math.tanh %421 : vector<2x32xf32>
    %423 = arith.truncf %422 : vector<2x32xf32> to vector<2x32xbf16>
    %c0_171 = arith.constant 0 : index
    %c0_172 = arith.constant 0 : index
    %424 = vector.load %arg28[%c0_171, %c0_172] : memref<32x2xbf16, #tpu.memory_space<vmem>>, vector<32x2xbf16>
    %cst_173 = arith.constant dense<0.000000e+00> : vector<2x2xf32>
    %425 = tpu.matmul %423, %424, %cst_173 {dimension_numbers = #tpu.dot_dimension_numbers<[1], [0], [0], [1], [0, 0, 1, 1], [], []>} : vector<2x32xbf16>, vector<32x2xbf16>, vector<2x2xf32> -> vector<2x2xf32>
    %c0_174 = arith.constant 0 : index
    %c0_175 = arith.constant 0 : index
    %426 = vector.load %arg29[%c0_174, %c0_175] : memref<1x2xf32, #tpu.memory_space<vmem>>, vector<1x2xf32>
    %427 = vector.broadcast %426 : vector<1x2xf32> to vector<2x2xf32>
    %428 = arith.addf %425, %427 : vector<2x2xf32>
    %c0_176 = arith.constant 0 : index
    %c0_177 = arith.constant 0 : index
    %429 = vector.load %arg3[%c0_176, %c0_177] : memref<2x1xi32, #tpu.memory_space<vmem>>, vector<2x1xi32>
    %cst_178 = arith.constant dense<0xFF800000> : vector<2xf32>
    %430 = vector.multi_reduction <maximumf>, %428, %cst_178 [1] : vector<2x2xf32> to vector<2xf32>
    %431 = vector.shape_cast %430 : vector<2xf32> to vector<2x1xf32>
    %432 = vector.broadcast %431 : vector<2x1xf32> to vector<2x2xf32>
    %433 = arith.subf %428, %432 : vector<2x2xf32>
    %434 = math.exp %433 : vector<2x2xf32>
    %cst_179 = arith.constant dense<0.000000e+00> : vector<2xf32>
    %435 = vector.multi_reduction <add>, %434, %cst_179 [1] : vector<2x2xf32> to vector<2xf32>
    %436 = vector.shape_cast %435 : vector<2xf32> to vector<2x1xf32>
    %437 = math.log %436 : vector<2x1xf32>
    %438 = arith.addf %437, %431 : vector<2x1xf32>
    %439 = tpu.iota {dimensions = array<i32: 1>} : vector<2x2xi32>
    %440 = vector.broadcast %429 : vector<2x1xi32> to vector<2x2xi32>
    %441 = arith.cmpi eq, %439, %440 : vector<2x2xi32>
    %cst_180 = arith.constant 0.000000e+00 : f32
    %442 = vector.broadcast %cst_180 : f32 to vector<2x2xf32>
    %443 = arith.select %441, %428, %442 : vector<2x2xi1>, vector<2x2xf32>
    %cst_181 = arith.constant dense<0.000000e+00> : vector<2xf32>
    %444 = vector.multi_reduction <add>, %443, %cst_181 [1] : vector<2x2xf32> to vector<2xf32>
    %445 = vector.shape_cast %444 : vector<2xf32> to vector<2x1xf32>
    %446 = arith.subf %438, %445 : vector<2x1xf32>
    %447 = vector.shape_cast %446 : vector<2x1xf32> to vector<1x2x1xf32>
    %cst_182 = arith.constant dense<0.000000e+00> : vector<1xf32>
    %448 = vector.multi_reduction <add>, %447, %cst_182 [1, 2] : vector<1x2x1xf32> to vector<1xf32>
    %449 = vector.shape_cast %448 : vector<1xf32> to vector<1x1x1xf32>
    %450 = vector.extract %449[0, 0, 0] : f32 from vector<1x1x1xf32>
    %cst_183 = arith.constant 2.000000e+00 : f32
    %451 = arith.divf %450, %cst_183 : f32
    %c0_184 = arith.constant 0 : index
    %c0_185 = arith.constant 0 : index
    %452 = memref.load %arg30[%c0_184, %c0_185] : memref<1x2xf32, #tpu.memory_space<smem>>
    memref.store %412, %arg30[%c0_184, %c0_185] : memref<1x2xf32, #tpu.memory_space<smem>>
    %c0_186 = arith.constant 0 : index
    %c1_187 = arith.constant 1 : index
    %453 = memref.load %arg30[%c0_186, %c1_187] : memref<1x2xf32, #tpu.memory_space<smem>>
    memref.store %451, %arg30[%c0_186, %c1_187] : memref<1x2xf32, #tpu.memory_space<smem>>
    return
  }
}

</mosaic_0001>

<llo_original>
// kernel: post_training_bert_forward.1
$region0: #{post_training_bert_forward.1}
  #allocation0 [shape = 'u32[]', space=smem, size = 0x4, offset = 0x4, fixed_abs, tag = 'smem constant byte address 0x4 - core index']
  #allocation1 [shape = 'u32[72,128]{1,0:T(1,128)}', space=vmem, size = 0x9000, scoped, tag = 'internal scratch']
  %s0 = inlined_call_operand.smem [shape: u32[31], index: -1, kind: input, shape index: {}]
  %s1 = sld [smem:[%s0]]
  %s2 = scalar_lea.smem %s0, 1
  %s3 = sld [smem:[%s2]]
  %s4 = scalar_lea.smem %s0, 2
  %s5 = sld [smem:[%s4]]
  %s6 = scalar_lea.smem %s0, 3
  %s7 = sld [smem:[%s6]]
  %s8 = scalar_lea.smem %s0, 4
  %s9 = sld [smem:[%s8]]
  %s10 = scalar_lea.smem %s0, 5
  %s11 = sld [smem:[%s10]]
  %s12 = scalar_lea.smem %s0, 6
  %s13 = sld [smem:[%s12]]
  %s14 = scalar_lea.smem %s0, 7
  %s15 = sld [smem:[%s14]]
  %s16 = scalar_lea.smem %s0, 8
  %s17 = sld [smem:[%s16]]
  %s18 = scalar_lea.smem %s0, 9
  %s19 = sld [smem:[%s18]]
  %s20 = scalar_lea.smem %s0, 10
  %s21 = sld [smem:[%s20]]
  %s22 = scalar_lea.smem %s0, 11
  %s23 = sld [smem:[%s22]]
  %s24 = scalar_lea.smem %s0, 12
  %s25 = sld [smem:[%s24]]
  %s26 = scalar_lea.smem %s0, 13
  %s27 = sld [smem:[%s26]]
  %s28 = scalar_lea.smem %s0, 14
  %s29 = sld [smem:[%s28]]
  %s30 = scalar_lea.smem %s0, 15
  %s31 = sld [smem:[%s30]]
  %s32 = scalar_lea.smem %s0, 16
  %s33 = sld [smem:[%s32]]
  %s34 = scalar_lea.smem %s0, 17
  %s35 = sld [smem:[%s34]]
  %s36 = scalar_lea.smem %s0, 18
  %s37 = sld [smem:[%s36]]
  %s38 = scalar_lea.smem %s0, 19
  %s39 = sld [smem:[%s38]]
  %s40 = scalar_lea.smem %s0, 20
  %s41 = sld [smem:[%s40]]
  %s42 = scalar_lea.smem %s0, 21
  %s43 = sld [smem:[%s42]]
  %s44 = scalar_lea.smem %s0, 22
  %s45 = sld [smem:[%s44]]
  %s46 = scalar_lea.smem %s0, 23
  %s47 = sld [smem:[%s46]]
  %s48 = scalar_lea.smem %s0, 24
  %s49 = sld [smem:[%s48]]
  %s50 = scalar_lea.smem %s0, 25
  %s51 = sld [smem:[%s50]]
  %s52 = scalar_lea.smem %s0, 26
  %s53 = sld [smem:[%s52]]
  %s54 = scalar_lea.smem %s0, 27
  %s55 = sld [smem:[%s54]]
  %s56 = scalar_lea.smem %s0, 28
  %s57 = sld [smem:[%s56]]
  %s58 = scalar_lea.smem %s0, 29
  %s59 = sld [smem:[%s58]]
  %s60 = scalar_lea.smem %s0, 30
  %s61 = sld [smem:[%s60]]
  %s62 = sld [smem:[#allocation0]]
  $region130: #{post_training_bert_forward.1} parent=0
    _
  %s64 = ssub.s32 1, %s62
  %s65 = scalar_select 0, %s64, %s62
  $region1: #{post_training_bert_forward.1} parent=0
    #allocation2 [shape = 'u8[512]{0}', space=smem, size = 0x200, scoped, tag = 'output window, operand 0, single buffered']
    #allocation3 [shape = 's32[1]{0}', space=sflag, size = 0x4, scoped, tag = 'scoped memory for post_training_bert_forward.1']
    %66 = vsyncpa [#allocation3], 0
    // Predicated region
    $region2: #{post_training_bert_forward.1} parent=1 // pred_check
      _
    $region3: #{post_training_bert_forward.1} parent=1 // pred_check_branch
      %68 = sbr.rel (0) target = $region5
    $region4: #{post_training_bert_forward.1} parent=1 // pred_region
      _
    $region5: #{post_training_bert_forward.1} parent=1 // pred_fallthru
      _
    // Predicated region
    $region6: #{post_training_bert_forward.1} parent=1 // pred_check
      _
    $region7: #{post_training_bert_forward.1} parent=1 // pred_check_branch
      %70 = sbr.rel (0) target = $region9
    $region8: #{post_training_bert_forward.1} parent=1 // pred_region
      _
    $region9: #{post_training_bert_forward.1} parent=1 // pred_fallthru
      _
    // Predicated region
    $region10: #{post_training_bert_forward.1} parent=1 // pred_check
      _
    $region11: #{post_training_bert_forward.1} parent=1 // pred_check_branch
      %72 = sbr.rel (0) target = $region13
    $region12: #{post_training_bert_forward.1} parent=1 // pred_region
      _
    $region13: #{post_training_bert_forward.1} parent=1 // pred_fallthru
      _
    // Predicated region
    $region14: #{post_training_bert_forward.1} parent=1 // pred_check
      _
    $region15: #{post_training_bert_forward.1} parent=1 // pred_check_branch
      %74 = sbr.rel (0) target = $region17
    $region16: #{post_training_bert_forward.1} parent=1 // pred_region
      _
    $region17: #{post_training_bert_forward.1} parent=1 // pred_fallthru
      _
    // Predicated region
    $region18: #{post_training_bert_forward.1} parent=1 // pred_check
      _
    $region19: #{post_training_bert_forward.1} parent=1 // pred_check_branch
      %76 = sbr.rel (0) target = $region21
    $region20: #{post_training_bert_forward.1} parent=1 // pred_region
      _
    $region21: #{post_training_bert_forward.1} parent=1 // pred_fallthru
      _
    // Predicated region
    $region22: #{post_training_bert_forward.1} parent=1 // pred_check
      _
    $region23: #{post_training_bert_forward.1} parent=1 // pred_check_branch
      %78 = sbr.rel (0) target = $region25
    $region24: #{post_training_bert_forward.1} parent=1 // pred_region
      _
    $region25: #{post_training_bert_forward.1} parent=1 // pred_fallthru
      _
    // Predicated region
    $region26: #{post_training_bert_forward.1} parent=1 // pred_check
      _
    $region27: #{post_training_bert_forward.1} parent=1 // pred_check_branch
      %80 = sbr.rel (0) target = $region29
    $region28: #{post_training_bert_forward.1} parent=1 // pred_region
      _
    $region29: #{post_training_bert_forward.1} parent=1 // pred_fallthru
      _
    // Predicated region
    $region30: #{post_training_bert_forward.1} parent=1 // pred_check
      _
    $region31: #{post_training_bert_forward.1} parent=1 // pred_check_branch
      %82 = sbr.rel (0) target = $region33
    $region32: #{post_training_bert_forward.1} parent=1 // pred_region
      _
    $region33: #{post_training_bert_forward.1} parent=1 // pred_fallthru
      _
    // Predicated region
    $region34: #{post_training_bert_forward.1} parent=1 // pred_check
      _
    $region35: #{post_training_bert_forward.1} parent=1 // pred_check_branch
      %84 = sbr.rel (0) target = $region37
    $region36: #{post_training_bert_forward.1} parent=1 // pred_region
      _
    $region37: #{post_training_bert_forward.1} parent=1 // pred_fallthru
      _
    // Predicated region
    $region38: #{post_training_bert_forward.1} parent=1 // pred_check
      _
    $region39: #{post_training_bert_forward.1} parent=1 // pred_check_branch
      %86 = sbr.rel (0) target = $region41
    $region40: #{post_training_bert_forward.1} parent=1 // pred_region
      _
    $region41: #{post_training_bert_forward.1} parent=1 // pred_fallthru
      _
    // Predicated region
    $region42: #{post_training_bert_forward.1} parent=1 // pred_check
      _
    $region43: #{post_training_bert_forward.1} parent=1 // pred_check_branch
      %88 = sbr.rel (0) target = $region45
    $region44: #{post_training_bert_forward.1} parent=1 // pred_region
      _
    $region45: #{post_training_bert_forward.1} parent=1 // pred_fallthru
      _
    // Predicated region
    $region46: #{post_training_bert_forward.1} parent=1 // pred_check
      _
    $region47: #{post_training_bert_forward.1} parent=1 // pred_check_branch
      %90 = sbr.rel (0) target = $region49
    $region48: #{post_training_bert_forward.1} parent=1 // pred_region
      _
    $region49: #{post_training_bert_forward.1} parent=1 // pred_fallthru
      _
    // Predicated region
    $region50: #{post_training_bert_forward.1} parent=1 // pred_check
      _
    $region51: #{post_training_bert_forward.1} parent=1 // pred_check_branch
      %92 = sbr.rel (0) target = $region53
    $region52: #{post_training_bert_forward.1} parent=1 // pred_region
      _
    $region53: #{post_training_bert_forward.1} parent=1 // pred_fallthru
      _
    // Predicated region
    $region54: #{post_training_bert_forward.1} parent=1 // pred_check
      _
    $region55: #{post_training_bert_forward.1} parent=1 // pred_check_branch
      %94 = sbr.rel (0) target = $region57
    $region56: #{post_training_bert_forward.1} parent=1 // pred_region
      _
    $region57: #{post_training_bert_forward.1} parent=1 // pred_fallthru
      _
    // Predicated region
    $region58: #{post_training_bert_forward.1} parent=1 // pred_check
      _
    $region59: #{post_training_bert_forward.1} parent=1 // pred_check_branch
      %96 = sbr.rel (0) target = $region61
    $region60: #{post_training_bert_forward.1} parent=1 // pred_region
      _
    $region61: #{post_training_bert_forward.1} parent=1 // pred_fallthru
      _
    // Predicated region
    $region62: #{post_training_bert_forward.1} parent=1 // pred_check
      _
    $region63: #{post_training_bert_forward.1} parent=1 // pred_check_branch
      %98 = sbr.rel (0) target = $region65
    $region64: #{post_training_bert_forward.1} parent=1 // pred_region
      _
    $region65: #{post_training_bert_forward.1} parent=1 // pred_fallthru
      _
    // Predicated region
    $region66: #{post_training_bert_forward.1} parent=1 // pred_check
      _
    $region67: #{post_training_bert_forward.1} parent=1 // pred_check_branch
      %100 = sbr.rel (0) target = $region69
    $region68: #{post_training_bert_forward.1} parent=1 // pred_region
      _
    $region69: #{post_training_bert_forward.1} parent=1 // pred_fallthru
      _
    // Predicated region
    $region70: #{post_training_bert_forward.1} parent=1 // pred_check
      _
    $region71: #{post_training_bert_forward.1} parent=1 // pred_check_branch
      %102 = sbr.rel (0) target = $region73
    $region72: #{post_training_bert_forward.1} parent=1 // pred_region
      _
    $region73: #{post_training_bert_forward.1} parent=1 // pred_fallthru
      _
    // Predicated region
    $region74: #{post_training_bert_forward.1} parent=1 // pred_check
      _
    $region75: #{post_training_bert_forward.1} parent=1 // pred_check_branch
      %104 = sbr.rel (0) target = $region77
    $region76: #{post_training_bert_forward.1} parent=1 // pred_region
      _
    $region77: #{post_training_bert_forward.1} parent=1 // pred_fallthru
      _
    // Predicated region
    $region78: #{post_training_bert_forward.1} parent=1 // pred_check
      _
    $region79: #{post_training_bert_forward.1} parent=1 // pred_check_branch
      %106 = sbr.rel (0) target = $region81
    $region80: #{post_training_bert_forward.1} parent=1 // pred_region
      _
    $region81: #{post_training_bert_forward.1} parent=1 // pred_fallthru
      _
    // Predicated region
    $region82: #{post_training_bert_forward.1} parent=1 // pred_check
      _
    $region83: #{post_training_bert_forward.1} parent=1 // pred_check_branch
      %108 = sbr.rel (0) target = $region85
    $region84: #{post_training_bert_forward.1} parent=1 // pred_region
      _
    $region85: #{post_training_bert_forward.1} parent=1 // pred_fallthru
      _
    // Predicated region
    $region86: #{post_training_bert_forward.1} parent=1 // pred_check
      _
    $region87: #{post_training_bert_forward.1} parent=1 // pred_check_branch
      %110 = sbr.rel (0) target = $region89
    $region88: #{post_training_bert_forward.1} parent=1 // pred_region
      _
    $region89: #{post_training_bert_forward.1} parent=1 // pred_fallthru
      _
    // Predicated region
    $region90: #{post_training_bert_forward.1} parent=1 // pred_check
      _
    $region91: #{post_training_bert_forward.1} parent=1 // pred_check_branch
      %112 = sbr.rel (0) target = $region93
    $region92: #{post_training_bert_forward.1} parent=1 // pred_region
      _
    $region93: #{post_training_bert_forward.1} parent=1 // pred_fallthru
      _
    // Predicated region
    $region94: #{post_training_bert_forward.1} parent=1 // pred_check
      _
    $region95: #{post_training_bert_forward.1} parent=1 // pred_check_branch
      %114 = sbr.rel (0) target = $region97
    $region96: #{post_training_bert_forward.1} parent=1 // pred_region
      _
    $region97: #{post_training_bert_forward.1} parent=1 // pred_fallthru
      _
    // Predicated region
    $region98: #{post_training_bert_forward.1} parent=1 // pred_check
      _
    $region99: #{post_training_bert_forward.1} parent=1 // pred_check_branch
      %116 = sbr.rel (0) target = $region101
    $region100: #{post_training_bert_forward.1} parent=1 // pred_region
      _
    $region101: #{post_training_bert_forward.1} parent=1 // pred_fallthru
      _
    // Predicated region
    $region102: #{post_training_bert_forward.1} parent=1 // pred_check
      _
    $region103: #{post_training_bert_forward.1} parent=1 // pred_check_branch
      %118 = sbr.rel (0) target = $region105
    $region104: #{post_training_bert_forward.1} parent=1 // pred_region
      _
    $region105: #{post_training_bert_forward.1} parent=1 // pred_fallthru
      _
    // Predicated region
    $region106: #{post_training_bert_forward.1} parent=1 // pred_check
      _
    $region107: #{post_training_bert_forward.1} parent=1 // pred_check_branch
      %120 = sbr.rel (0) target = $region109
    $region108: #{post_training_bert_forward.1} parent=1 // pred_region
      _
    $region109: #{post_training_bert_forward.1} parent=1 // pred_fallthru
      _
    // Predicated region
    $region110: #{post_training_bert_forward.1} parent=1 // pred_check
      _
    $region111: #{post_training_bert_forward.1} parent=1 // pred_check_branch
      %122 = sbr.rel (0) target = $region113
    $region112: #{post_training_bert_forward.1} parent=1 // pred_region
      _
    $region113: #{post_training_bert_forward.1} parent=1 // pred_fallthru
      _
    // Predicated region
    $region114: #{post_training_bert_forward.1} parent=1 // pred_check
      _
    $region115: #{post_training_bert_forward.1} parent=1 // pred_check_branch
      %124 = sbr.rel (0) target = $region117
    $region116: #{post_training_bert_forward.1} parent=1 // pred_region
      _
    $region117: #{post_training_bert_forward.1} parent=1 // pred_fallthru
      _
    // Predicated region
    $region118: #{post_training_bert_forward.1} parent=1 // pred_check
      _
    $region119: #{post_training_bert_forward.1} parent=1 // pred_check_branch
      %126 = sbr.rel (0) target = $region121
    $region120: #{post_training_bert_forward.1} parent=1 // pred_region
      _
    $region121: #{post_training_bert_forward.1} parent=1 // pred_fallthru
      _
    %v128 = vld [vmem:[%s9] sm:$0xf]
    %v129 = vld [vmem:[%s9 + $0x4] sm:$0xf]
    %v130 = vld [vmem:[%s9 + $0x8] sm:$0xf]
    %v131 = vld [vmem:[%s9 + $0xc] sm:$0xf]
    %v132 = vld [vmem:[%s9 + $0x10] sm:$0xf]
    %v133 = vld [vmem:[%s9 + $0x14] sm:$0xf]
    %v134 = vld [vmem:[%s9 + $0x18] sm:$0xf]
    %v135 = vld [vmem:[%s9 + $0x1c] sm:$0xf]
    %v136 = vld [vmem:[%s9 + $0x20] sm:$0xf]
    %v137 = vld [vmem:[%s9 + $0x24] sm:$0xf]
    %v138 = vld [vmem:[%s9 + $0x28] sm:$0xf]
    %v139 = vld [vmem:[%s9 + $0x2c] sm:$0xf]
    %v140 = vld [vmem:[%s9 + $0x30] sm:$0xf]
    %v141 = vld [vmem:[%s9 + $0x34] sm:$0xf]
    %v142 = vld [vmem:[%s9 + $0x38] sm:$0xf]
    %v143 = vld [vmem:[%s9 + $0x3c] sm:$0xf]
    %v144 = vlaneseq
    %v145 = vand.u32 %v144, 127
    %v146 = vld [vmem:[%s1] sm:$0xff]
    %v147 = vld [vmem:[%s1 + $0x8] sm:$0xff]
    %148 = vset.pattern.permute.xlu0 0
    %149 = vperm.xlu0 %148, %v146
    %v150 = vpop.permute.xlu0 %149
    %151 = vset.pattern.permute.xlu0 0
    %152 = vperm.xlu0 %151, %v147
    %v153 = vpop.permute.xlu0 %152
    %vm154 = vcmp.eq.s32.totalorder %v145, %v150
    %vm155 = vcmp.eq.s32.totalorder %v145, %v153
    %v156 = vsel %vm154, 1, 0
    %v157 = vsel %vm155, 1, 0
    %v158 = vcvt.s32.f32 %v156
    %v159 = vcvt.s32.f32 %v157
    %v160 = vpack.c.bf16 %v159, %v158
    %v177 = vunpack.c.l.b16 %v128
    %v178 = vunpack.c.l.b16 %v129
    %v179 = vunpack.c.l.b16 %v130
    %v180 = vunpack.c.l.b16 %v131
    %v181 = vunpack.c.l.b16 %v132
    %v182 = vunpack.c.l.b16 %v133
    %v183 = vunpack.c.l.b16 %v134
    %v184 = vunpack.c.l.b16 %v135
    %v185 = vunpack.c.l.b16 %v136
    %v186 = vunpack.c.l.b16 %v137
    %v187 = vunpack.c.l.b16 %v138
    %v188 = vunpack.c.l.b16 %v139
    %v189 = vunpack.c.l.b16 %v140
    %v190 = vunpack.c.l.b16 %v141
    %v191 = vunpack.c.l.b16 %v142
    %v192 = vunpack.c.l.b16 %v143
    %v193 = vpack.c.b16 %v178, %v177
    %v194 = vpack.c.b16 %v180, %v179
    %v195 = vpack.c.b16 %v182, %v181
    %v196 = vpack.c.b16 %v184, %v183
    %v197 = vpack.c.b16 %v186, %v185
    %v198 = vpack.c.b16 %v188, %v187
    %v199 = vpack.c.b16 %v190, %v189
    %v200 = vpack.c.b16 %v192, %v191
    %209 = vmatpush.bf16.msra.mxu0 %v200
    %210 = vmatpush.bf16.msra.mxu0 %v199
    %211 = vmatpush.bf16.msra.mxu0 %v198
    %212 = vmatpush.bf16.msra.mxu0 %v197
    %213 = vmatpush.bf16.msra.mxu0 %v196
    %214 = vmatpush.bf16.msra.mxu0 %v195
    %215 = vmatpush.bf16.msra.mxu0 %v194
    %216 = vmatpush.bf16.msra.mxu0 %v193
    %217 = vmatmul.bf16.gmra.mxu0 %v160
    %v218 = vpop.f32.mrf.mxu0
    %v219 = vadd.f32 0.0, %v218
    %v220 = vpop.f32.mrf.mxu0
    %v221 = vadd.f32 0.0, %v220
    %222 = vdwg.mxu0
    %v223 = vld [vmem:[%s11] sm:$0xff]
    %v224 = vld [vmem:[%s13] sm:$0x1]
    %v225 = vperm.slane %v224, 0
    %v226 = vadd.f32 %v223, %v225
    %v227 = vadd.f32 %v219, %v226
    %v228 = vadd.f32 %v221, %v226
    %v229 = vld [vmem:[%s15] sm:$0x1]
    %v230 = vld [vmem:[%s17] sm:$0x1]
    %vm231 = vcmask 261120
    %v232 = vsel %vm231, %v227, 0.0
    %233 = vadd.xlane.f32.xlu0 %v232
    %v234 = vpop.xlane.xlu0 %233
    %v235 = vsel %vm231, %v228, 0.0
    %236 = vadd.xlane.f32.xlu0 %v235
    %v237 = vpop.xlane.xlu0 %236
    %v238 = vrcp.pop 32.0
    %v239 = vmul.f32 32.0, %v238
    %v240 = vsub.f32 1.0, %v239
    %v241 = vmul.f32 %v238, %v240
    %v242 = vadd.f32 %v238, %v241
    %vm243 = vweird.f32 %v238
    %v244 = vsel %vm243, %v238, %v242
    %v245 = vmul.f32 %v234, %v244
    %v246 = vmul.f32 %v237, %v244
    %v247 = vsub.f32 %v227, %v245
    %v248 = vsub.f32 %v228, %v246
    %v249 = vmul.f32 %v247, %v247
    %v250 = vmul.f32 %v248, %v248
    %v251 = vsel %vm231, %v249, 0.0
    %252 = vadd.xlane.f32.xlu0 %v251
    %v253 = vpop.xlane.xlu0 %252
    %v254 = vsel %vm231, %v250, 0.0
    %255 = vadd.xlane.f32.xlu0 %v254
    %v256 = vpop.xlane.xlu0 %255
    %v257 = vmul.f32 %v253, %v244
    %v258 = vmul.f32 %v256, %v244
    %v259 = vadd.f32 %v257, 1e-12
    %v260 = vadd.f32 %v258, 1e-12
    %v261 = vrsqrt.pop %v259
    %v262 = vmul.f32 %v261, %v259
    %v263 = vmul.f32 %v262, %v261
    %v264 = vmul.f32 0.5, %v263
    %v265 = vsub.f32 1.5, %v264
    %v266 = vmul.f32 %v261, %v265
    %vm267 = vweird.f32 %v259
    %vm268 = vweird.f32 %v261
    %vm269 = vmor %vm267, %vm268
    %v270 = vsel %vm269, %v261, %v266
    %v271 = vrsqrt.pop %v260
    %v272 = vmul.f32 %v271, %v260
    %v273 = vmul.f32 %v272, %v271
    %v274 = vmul.f32 0.5, %v273
    %v275 = vsub.f32 1.5, %v274
    %v276 = vmul.f32 %v271, %v275
    %vm277 = vweird.f32 %v260
    %vm278 = vweird.f32 %v271
    %vm279 = vmor %vm277, %vm278
    %v280 = vsel %vm279, %v271, %v276
    %v281 = vmul.f32 %v247, %v270
    %v282 = vmul.f32 %v248, %v280
    %v284 = vperm.slane %v229, 0
    %v286 = vmul.f32 %v281, %v284
    %v287 = vmul.f32 %v282, %v284
    %v289 = vperm.slane %v230, 0
    %v291 = vadd.f32 %v286, %v289
    %v292 = vadd.f32 %v287, %v289
    %v293 = vld [vmem:[%s3] sm:$0x3]
    %v294 = vsub.s32 1, %v293
    %v295 = vcvt.s32.f32 %v294
    %v296 = vmul.f32 %v295, -1e+09
    %v298 = vrot.slane %v296, 1
    %v299 = vpack.c.bf16 %v292, %v291
    %v300 = vld [vmem:[%s19] sm:$0xf]
    %v301 = vld [vmem:[%s19 + $0x4] sm:$0xf]
    %v302 = vld [vmem:[%s19 + $0x8] sm:$0xf]
    %v303 = vld [vmem:[%s19 + $0xc] sm:$0xf]
    %v304 = vld [vmem:[%s21] sm:$0x1]
    %v306 = vperm.slane %v304, 0
    %v312 = vunpack.c.l.b16 %v300
    %v313 = vunpack.c.l.b16 %v301
    %v314 = vunpack.c.l.b16 %v302
    %v315 = vunpack.c.l.b16 %v303
    %v316 = vpack.c.b16 %v313, %v312
    %v317 = vpack.c.b16 %v315, %v314
    %v321 = vsel %vm231, %v299, 0
    %323 = vmatpush.bf16.msra.mxu0 0
    %324 = vmatpush.bf16.msra.mxu0 0
    %325 = vmatpush.bf16.msra.mxu0 0
    %326 = vmatpush.bf16.msra.mxu0 0
    %327 = vmatpush.bf16.msra.mxu0 0
    %328 = vmatpush.bf16.msra.mxu0 0
    %329 = vmatpush.bf16.msra.mxu0 %v317
    %330 = vmatpush.bf16.msra.mxu0 %v316
    %331 = vmatmul.bf16.gmra.mxu0 %v321
    %v332 = vpop.f32.mrf.mxu0
    %v333 = vadd.f32 %v306, %v332
    %v334 = vpop.f32.mrf.mxu0
    %v335 = vadd.f32 %v306, %v334
    %336 = vdwg.mxu0
    %339 = vrot.lane.b32.xlu0 %v333, 120
    %v340 = vpop.permute.xlu0 %339
    %341 = vrot.lane.b32.xlu0 %v335, 120
    %v342 = vpop.permute.xlu0 %341
    %345 = vrot.lane.b32.xlu0 %v333, 112
    %v346 = vpop.permute.xlu0 %345
    %347 = vrot.lane.b32.xlu0 %v335, 112
    %v348 = vpop.permute.xlu0 %347
    %351 = vrot.lane.b32.xlu0 %v333, 104
    %v352 = vpop.permute.xlu0 %351
    %353 = vrot.lane.b32.xlu0 %v335, 104
    %v354 = vpop.permute.xlu0 %353
    %v357 = vrot.slane %v346, 4
    %vm358 = vcmask 1047556
    %v359 = vsel %vm358, %v357, %v333
    %v360 = vrot.slane %v333, 4
    %v361 = vsel %vm358, %v346, %v360
    %v363 = vunpack.c.l.s4 1983009808
    %v364 = vunpack.c.0.s8 %v363
    %v365 = vperm.slane %v359, %v364
    %v367 = vunpack.c.l.s4 1983009808
    %v368 = vunpack.c.0.s8 %v367
    %v369 = vperm.slane %v361, %v368
    %v370 = vrot.slane %v352, 4
    %v371 = vsel %vm358, %v370, %v340
    %v372 = vrot.slane %v340, 4
    %v373 = vsel %vm358, %v352, %v372
    %v375 = vunpack.c.l.s4 1983009808
    %v376 = vunpack.c.0.s8 %v375
    %v377 = vperm.slane %v371, %v376
    %v379 = vunpack.c.l.s4 1983009808
    %v380 = vunpack.c.0.s8 %v379
    %v381 = vperm.slane %v373, %v380
    %v382 = vrot.slane %v377, 4
    %v383 = vsel %vm358, %v382, %v365
    %v384 = vrot.slane %v365, 4
    %v385 = vsel %vm358, %v377, %v384
    %v387 = vunpack.c.l.s4 1934713408
    %v388 = vunpack.c.0.s8 %v387
    %v389 = vperm.slane %v383, %v388
    %v391 = vunpack.c.l.s4 1934713408
    %v392 = vunpack.c.0.s8 %v391
    %v393 = vperm.slane %v385, %v392
    %v394 = vrot.slane %v381, 4
    %v395 = vsel %vm358, %v394, %v369
    %v396 = vrot.slane %v369, 4
    %v397 = vsel %vm358, %v381, %v396
    %v399 = vunpack.c.l.s4 1934713408
    %v400 = vunpack.c.0.s8 %v399
    %v401 = vperm.slane %v395, %v400
    %v403 = vunpack.c.l.s4 1934713408
    %v404 = vunpack.c.0.s8 %v403
    %v405 = vperm.slane %v397, %v404
    %v406 = vrot.slane %v389, 4
    %v407 = vsel %vm358, 0.0, %v406
    %v408 = vrot.slane %v393, 4
    %v409 = vsel %vm358, 0.0, %v408
    %v410 = vrot.slane %v401, 4
    %v411 = vsel %vm358, 0.0, %v410
    %v412 = vrot.slane %v405, 4
    %v413 = vsel %vm358, 0.0, %v412
    %v414 = vrot.slane %v348, 4
    %v415 = vsel %vm358, %v414, %v335
    %v416 = vrot.slane %v335, 4
    %v417 = vsel %vm358, %v348, %v416
    %v419 = vunpack.c.l.s4 1983009808
    %v420 = vunpack.c.0.s8 %v419
    %v421 = vperm.slane %v415, %v420
    %v423 = vunpack.c.l.s4 1983009808
    %v424 = vunpack.c.0.s8 %v423
    %v425 = vperm.slane %v417, %v424
    %v426 = vrot.slane %v354, 4
    %v427 = vsel %vm358, %v426, %v342
    %v428 = vrot.slane %v342, 4
    %v429 = vsel %vm358, %v354, %v428
    %v431 = vunpack.c.l.s4 1983009808
    %v432 = vunpack.c.0.s8 %v431
    %v433 = vperm.slane %v427, %v432
    %v435 = vunpack.c.l.s4 1983009808
    %v436 = vunpack.c.0.s8 %v435
    %v437 = vperm.slane %v429, %v436
    %v438 = vrot.slane %v433, 4
    %v439 = vsel %vm358, %v438, %v421
    %v440 = vrot.slane %v421, 4
    %v441 = vsel %vm358, %v433, %v440
    %v443 = vunpack.c.l.s4 1934713408
    %v444 = vunpack.c.0.s8 %v443
    %v445 = vperm.slane %v439, %v444
    %v447 = vunpack.c.l.s4 1934713408
    %v448 = vunpack.c.0.s8 %v447
    %v449 = vperm.slane %v441, %v448
    %v450 = vrot.slane %v437, 4
    %v451 = vsel %vm358, %v450, %v425
    %v452 = vrot.slane %v425, 4
    %v453 = vsel %vm358, %v437, %v452
    %v455 = vunpack.c.l.s4 1934713408
    %v456 = vunpack.c.0.s8 %v455
    %v457 = vperm.slane %v451, %v456
    %v459 = vunpack.c.l.s4 1934713408
    %v460 = vunpack.c.0.s8 %v459
    %v461 = vperm.slane %v453, %v460
    %v462 = vrot.slane %v445, 4
    %v463 = vsel %vm358, 0.0, %v462
    %v464 = vrot.slane %v449, 4
    %v465 = vsel %vm358, 0.0, %v464
    %v466 = vrot.slane %v457, 4
    %v467 = vsel %vm358, 0.0, %v466
    %v468 = vrot.slane %v461, 4
    %v469 = vsel %vm358, 0.0, %v468
    %v470 = vsel %vm358, %v408, %v389
    %v472 = vunpack.c.l.s4 1983009808
    %v473 = vunpack.c.0.s8 %v472
    %v474 = vperm.slane %v470, %v473
    %v475 = vrot.slane %v409, 4
    %v476 = vsel %vm358, %v475, %v407
    %v478 = vunpack.c.l.s4 1983009808
    %v479 = vunpack.c.0.s8 %v478
    %v480 = vperm.slane %v476, %v479
    %v481 = vsel %vm358, %v412, %v401
    %v483 = vunpack.c.l.s4 1983009808
    %v484 = vunpack.c.0.s8 %v483
    %v485 = vperm.slane %v481, %v484
    %v486 = vrot.slane %v413, 4
    %v487 = vsel %vm358, %v486, %v411
    %v489 = vunpack.c.l.s4 1983009808
    %v490 = vunpack.c.0.s8 %v489
    %v491 = vperm.slane %v487, %v490
    %v492 = vrot.slane %v480, 4
    %v493 = vsel %vm358, %v492, %v474
    %v494 = vrot.slane %v474, 4
    %v495 = vsel %vm358, %v480, %v494
    %v497 = vunpack.c.l.s4 1934713408
    %v498 = vunpack.c.0.s8 %v497
    %v499 = vperm.slane %v493, %v498
    %v501 = vunpack.c.l.s4 1934713408
    %v502 = vunpack.c.0.s8 %v501
    %v503 = vperm.slane %v495, %v502
    %v504 = vrot.slane %v491, 4
    %v505 = vsel %vm358, %v504, %v485
    %v506 = vrot.slane %v485, 4
    %v507 = vsel %vm358, %v491, %v506
    %v509 = vunpack.c.l.s4 1934713408
    %v510 = vunpack.c.0.s8 %v509
    %v511 = vperm.slane %v505, %v510
    %v513 = vunpack.c.l.s4 1934713408
    %v514 = vunpack.c.0.s8 %v513
    %v515 = vperm.slane %v507, %v514
    %v516 = vrot.slane %v511, 4
    %v517 = vsel %vm358, %v516, %v499
    %v518 = vrot.slane %v499, 4
    %v519 = vsel %vm358, %v511, %v518
    %v520 = vrot.slane %v515, 4
    %v521 = vsel %vm358, %v520, %v503
    %v522 = vrot.slane %v503, 4
    %v523 = vsel %vm358, %v515, %v522
    %v524 = vsel %vm358, %v464, %v445
    %v526 = vunpack.c.l.s4 1983009808
    %v527 = vunpack.c.0.s8 %v526
    %v528 = vperm.slane %v524, %v527
    %v529 = vrot.slane %v465, 4
    %v530 = vsel %vm358, %v529, %v463
    %v532 = vunpack.c.l.s4 1983009808
    %v533 = vunpack.c.0.s8 %v532
    %v534 = vperm.slane %v530, %v533
    %v535 = vsel %vm358, %v468, %v457
    %v537 = vunpack.c.l.s4 1983009808
    %v538 = vunpack.c.0.s8 %v537
    %v539 = vperm.slane %v535, %v538
    %v540 = vrot.slane %v469, 4
    %v541 = vsel %vm358, %v540, %v467
    %v543 = vunpack.c.l.s4 1983009808
    %v544 = vunpack.c.0.s8 %v543
    %v545 = vperm.slane %v541, %v544
    %v546 = vrot.slane %v534, 4
    %v547 = vsel %vm358, %v546, %v528
    %v548 = vrot.slane %v528, 4
    %v549 = vsel %vm358, %v534, %v548
    %v551 = vunpack.c.l.s4 1934713408
    %v552 = vunpack.c.0.s8 %v551
    %v553 = vperm.slane %v547, %v552
    %v555 = vunpack.c.l.s4 1934713408
    %v556 = vunpack.c.0.s8 %v555
    %v557 = vperm.slane %v549, %v556
    %v558 = vrot.slane %v545, 4
    %v559 = vsel %vm358, %v558, %v539
    %v560 = vrot.slane %v539, 4
    %v561 = vsel %vm358, %v545, %v560
    %v563 = vunpack.c.l.s4 1934713408
    %v564 = vunpack.c.0.s8 %v563
    %v565 = vperm.slane %v559, %v564
    %v567 = vunpack.c.l.s4 1934713408
    %v568 = vunpack.c.0.s8 %v567
    %v569 = vperm.slane %v561, %v568
    %v570 = vrot.slane %v565, 4
    %v571 = vsel %vm358, %v570, %v553
    %v572 = vrot.slane %v553, 4
    %v573 = vsel %vm358, %v565, %v572
    %v574 = vrot.slane %v569, 4
    %v575 = vsel %vm358, %v574, %v557
    %v576 = vrot.slane %v557, 4
    %v577 = vsel %vm358, %v569, %v576
    %v578 = vpack.c.bf16 %v517, %v517
    %v579 = vpack.c.bf16 %v519, %v519
    %v580 = vpack.c.bf16 %v521, %v521
    %v581 = vpack.c.bf16 %v523, %v523
    %v582 = vpack.c.bf16 %v571, %v571
    %v583 = vpack.c.bf16 %v573, %v573
    %v584 = vpack.c.bf16 %v575, %v575
    %v585 = vpack.c.bf16 %v577, %v577
    %586 = vrot.lane.b32.xlu0 %v333, 96
    %v587 = vpop.permute.xlu0 %586
    %588 = vrot.lane.b32.xlu0 %v335, 96
    %v589 = vpop.permute.xlu0 %588
    %590 = vrot.lane.b32.xlu0 %v340, 96
    %v591 = vpop.permute.xlu0 %590
    %592 = vrot.lane.b32.xlu0 %v342, 96
    %v593 = vpop.permute.xlu0 %592
    %594 = vrot.lane.b32.xlu0 %v346, 96
    %v595 = vpop.permute.xlu0 %594
    %596 = vrot.lane.b32.xlu0 %v348, 96
    %v597 = vpop.permute.xlu0 %596
    %598 = vrot.lane.b32.xlu0 %v352, 96
    %v599 = vpop.permute.xlu0 %598
    %600 = vrot.lane.b32.xlu0 %v354, 96
    %v601 = vpop.permute.xlu0 %600
    %v610 = vrot.slane %v595, 4
    %v611 = vsel %vm358, %v610, %v587
    %v612 = vrot.slane %v587, 4
    %v613 = vsel %vm358, %v595, %v612
    %v615 = vunpack.c.l.s4 1983009808
    %v616 = vunpack.c.0.s8 %v615
    %v617 = vperm.slane %v611, %v616
    %v619 = vunpack.c.l.s4 1983009808
    %v620 = vunpack.c.0.s8 %v619
    %v621 = vperm.slane %v613, %v620
    %v622 = vrot.slane %v599, 4
    %v623 = vsel %vm358, %v622, %v591
    %v624 = vrot.slane %v591, 4
    %v625 = vsel %vm358, %v599, %v624
    %v627 = vunpack.c.l.s4 1983009808
    %v628 = vunpack.c.0.s8 %v627
    %v629 = vperm.slane %v623, %v628
    %v631 = vunpack.c.l.s4 1983009808
    %v632 = vunpack.c.0.s8 %v631
    %v633 = vperm.slane %v625, %v632
    %v634 = vrot.slane %v629, 4
    %v635 = vsel %vm358, %v634, %v617
    %v636 = vrot.slane %v617, 4
    %v637 = vsel %vm358, %v629, %v636
    %v639 = vunpack.c.l.s4 1934713408
    %v640 = vunpack.c.0.s8 %v639
    %v641 = vperm.slane %v635, %v640
    %v643 = vunpack.c.l.s4 1934713408
    %v644 = vunpack.c.0.s8 %v643
    %v645 = vperm.slane %v637, %v644
    %v646 = vrot.slane %v633, 4
    %v647 = vsel %vm358, %v646, %v621
    %v648 = vrot.slane %v621, 4
    %v649 = vsel %vm358, %v633, %v648
    %v651 = vunpack.c.l.s4 1934713408
    %v652 = vunpack.c.0.s8 %v651
    %v653 = vperm.slane %v647, %v652
    %v655 = vunpack.c.l.s4 1934713408
    %v656 = vunpack.c.0.s8 %v655
    %v657 = vperm.slane %v649, %v656
    %v658 = vrot.slane %v641, 4
    %v659 = vsel %vm358, 0.0, %v658
    %v660 = vrot.slane %v645, 4
    %v661 = vsel %vm358, 0.0, %v660
    %v662 = vrot.slane %v653, 4
    %v663 = vsel %vm358, 0.0, %v662
    %v664 = vrot.slane %v657, 4
    %v665 = vsel %vm358, 0.0, %v664
    %v666 = vrot.slane %v597, 4
    %v667 = vsel %vm358, %v666, %v589
    %v668 = vrot.slane %v589, 4
    %v669 = vsel %vm358, %v597, %v668
    %v671 = vunpack.c.l.s4 1983009808
    %v672 = vunpack.c.0.s8 %v671
    %v673 = vperm.slane %v667, %v672
    %v675 = vunpack.c.l.s4 1983009808
    %v676 = vunpack.c.0.s8 %v675
    %v677 = vperm.slane %v669, %v676
    %v678 = vrot.slane %v601, 4
    %v679 = vsel %vm358, %v678, %v593
    %v680 = vrot.slane %v593, 4
    %v681 = vsel %vm358, %v601, %v680
    %v683 = vunpack.c.l.s4 1983009808
    %v684 = vunpack.c.0.s8 %v683
    %v685 = vperm.slane %v679, %v684
    %v687 = vunpack.c.l.s4 1983009808
    %v688 = vunpack.c.0.s8 %v687
    %v689 = vperm.slane %v681, %v688
    %v690 = vrot.slane %v685, 4
    %v691 = vsel %vm358, %v690, %v673
    %v692 = vrot.slane %v673, 4
    %v693 = vsel %vm358, %v685, %v692
    %v695 = vunpack.c.l.s4 1934713408
    %v696 = vunpack.c.0.s8 %v695
    %v697 = vperm.slane %v691, %v696
    %v699 = vunpack.c.l.s4 1934713408
    %v700 = vunpack.c.0.s8 %v699
    %v701 = vperm.slane %v693, %v700
    %v702 = vrot.slane %v689, 4
    %v703 = vsel %vm358, %v702, %v677
    %v704 = vrot.slane %v677, 4
    %v705 = vsel %vm358, %v689, %v704
    %v707 = vunpack.c.l.s4 1934713408
    %v708 = vunpack.c.0.s8 %v707
    %v709 = vperm.slane %v703, %v708
    %v711 = vunpack.c.l.s4 1934713408
    %v712 = vunpack.c.0.s8 %v711
    %v713 = vperm.slane %v705, %v712
    %v714 = vrot.slane %v697, 4
    %v715 = vsel %vm358, 0.0, %v714
    %v716 = vrot.slane %v701, 4
    %v717 = vsel %vm358, 0.0, %v716
    %v718 = vrot.slane %v709, 4
    %v719 = vsel %vm358, 0.0, %v718
    %v720 = vrot.slane %v713, 4
    %v721 = vsel %vm358, 0.0, %v720
    %v722 = vsel %vm358, %v660, %v641
    %v724 = vunpack.c.l.s4 1983009808
    %v725 = vunpack.c.0.s8 %v724
    %v726 = vperm.slane %v722, %v725
    %v727 = vrot.slane %v661, 4
    %v728 = vsel %vm358, %v727, %v659
    %v730 = vunpack.c.l.s4 1983009808
    %v731 = vunpack.c.0.s8 %v730
    %v732 = vperm.slane %v728, %v731
    %v733 = vsel %vm358, %v664, %v653
    %v735 = vunpack.c.l.s4 1983009808
    %v736 = vunpack.c.0.s8 %v735
    %v737 = vperm.slane %v733, %v736
    %v738 = vrot.slane %v665, 4
    %v739 = vsel %vm358, %v738, %v663
    %v741 = vunpack.c.l.s4 1983009808
    %v742 = vunpack.c.0.s8 %v741
    %v743 = vperm.slane %v739, %v742
    %v744 = vrot.slane %v732, 4
    %v745 = vsel %vm358, %v744, %v726
    %v746 = vrot.slane %v726, 4
    %v747 = vsel %vm358, %v732, %v746
    %v749 = vunpack.c.l.s4 1934713408
    %v750 = vunpack.c.0.s8 %v749
    %v751 = vperm.slane %v745, %v750
    %v753 = vunpack.c.l.s4 1934713408
    %v754 = vunpack.c.0.s8 %v753
    %v755 = vperm.slane %v747, %v754
    %v756 = vrot.slane %v743, 4
    %v757 = vsel %vm358, %v756, %v737
    %v758 = vrot.slane %v737, 4
    %v759 = vsel %vm358, %v743, %v758
    %v761 = vunpack.c.l.s4 1934713408
    %v762 = vunpack.c.0.s8 %v761
    %v763 = vperm.slane %v757, %v762
    %v765 = vunpack.c.l.s4 1934713408
    %v766 = vunpack.c.0.s8 %v765
    %v767 = vperm.slane %v759, %v766
    %v768 = vrot.slane %v763, 4
    %v769 = vsel %vm358, %v768, %v751
    %v770 = vrot.slane %v751, 4
    %v771 = vsel %vm358, %v763, %v770
    %v772 = vrot.slane %v767, 4
    %v773 = vsel %vm358, %v772, %v755
    %v774 = vrot.slane %v755, 4
    %v775 = vsel %vm358, %v767, %v774
    %v776 = vsel %vm358, %v716, %v697
    %v778 = vunpack.c.l.s4 1983009808
    %v779 = vunpack.c.0.s8 %v778
    %v780 = vperm.slane %v776, %v779
    %v781 = vrot.slane %v717, 4
    %v782 = vsel %vm358, %v781, %v715
    %v784 = vunpack.c.l.s4 1983009808
    %v785 = vunpack.c.0.s8 %v784
    %v786 = vperm.slane %v782, %v785
    %v787 = vsel %vm358, %v720, %v709
    %v789 = vunpack.c.l.s4 1983009808
    %v790 = vunpack.c.0.s8 %v789
    %v791 = vperm.slane %v787, %v790
    %v792 = vrot.slane %v721, 4
    %v793 = vsel %vm358, %v792, %v719
    %v795 = vunpack.c.l.s4 1983009808
    %v796 = vunpack.c.0.s8 %v795
    %v797 = vperm.slane %v793, %v796
    %v798 = vrot.slane %v786, 4
    %v799 = vsel %vm358, %v798, %v780
    %v800 = vrot.slane %v780, 4
    %v801 = vsel %vm358, %v786, %v800
    %v803 = vunpack.c.l.s4 1934713408
    %v804 = vunpack.c.0.s8 %v803
    %v805 = vperm.slane %v799, %v804
    %v807 = vunpack.c.l.s4 1934713408
    %v808 = vunpack.c.0.s8 %v807
    %v809 = vperm.slane %v801, %v808
    %v810 = vrot.slane %v797, 4
    %v811 = vsel %vm358, %v810, %v791
    %v812 = vrot.slane %v791, 4
    %v813 = vsel %vm358, %v797, %v812
    %v815 = vunpack.c.l.s4 1934713408
    %v816 = vunpack.c.0.s8 %v815
    %v817 = vperm.slane %v811, %v816
    %v819 = vunpack.c.l.s4 1934713408
    %v820 = vunpack.c.0.s8 %v819
    %v821 = vperm.slane %v813, %v820
    %v822 = vrot.slane %v817, 4
    %v823 = vsel %vm358, %v822, %v805
    %v824 = vrot.slane %v805, 4
    %v825 = vsel %vm358, %v817, %v824
    %v826 = vrot.slane %v821, 4
    %v827 = vsel %vm358, %v826, %v809
    %v828 = vrot.slane %v809, 4
    %v829 = vsel %vm358, %v821, %v828
    %v830 = vpack.c.bf16 %v769, %v769
    %v831 = vpack.c.bf16 %v771, %v771
    %v832 = vpack.c.bf16 %v773, %v773
    %v833 = vpack.c.bf16 %v775, %v775
    %v834 = vpack.c.bf16 %v823, %v823
    %v835 = vpack.c.bf16 %v825, %v825
    %v836 = vpack.c.bf16 %v827, %v827
    %v837 = vpack.c.bf16 %v829, %v829
    %838 = vrot.lane.b32.xlu0 %v333, 64
    %v839 = vpop.permute.xlu0 %838
    %840 = vrot.lane.b32.xlu0 %v335, 64
    %v841 = vpop.permute.xlu0 %840
    %842 = vrot.lane.b32.xlu0 %v340, 64
    %v843 = vpop.permute.xlu0 %842
    %844 = vrot.lane.b32.xlu0 %v342, 64
    %v845 = vpop.permute.xlu0 %844
    %846 = vrot.lane.b32.xlu0 %v346, 64
    %v847 = vpop.permute.xlu0 %846
    %848 = vrot.lane.b32.xlu0 %v348, 64
    %v849 = vpop.permute.xlu0 %848
    %850 = vrot.lane.b32.xlu0 %v352, 64
    %v851 = vpop.permute.xlu0 %850
    %852 = vrot.lane.b32.xlu0 %v354, 64
    %v853 = vpop.permute.xlu0 %852
    %v862 = vrot.slane %v847, 4
    %v863 = vsel %vm358, %v862, %v839
    %v864 = vrot.slane %v839, 4
    %v865 = vsel %vm358, %v847, %v864
    %v867 = vunpack.c.l.s4 1983009808
    %v868 = vunpack.c.0.s8 %v867
    %v869 = vperm.slane %v863, %v868
    %v871 = vunpack.c.l.s4 1983009808
    %v872 = vunpack.c.0.s8 %v871
    %v873 = vperm.slane %v865, %v872
    %v874 = vrot.slane %v851, 4
    %v875 = vsel %vm358, %v874, %v843
    %v876 = vrot.slane %v843, 4
    %v877 = vsel %vm358, %v851, %v876
    %v879 = vunpack.c.l.s4 1983009808
    %v880 = vunpack.c.0.s8 %v879
    %v881 = vperm.slane %v875, %v880
    %v883 = vunpack.c.l.s4 1983009808
    %v884 = vunpack.c.0.s8 %v883
    %v885 = vperm.slane %v877, %v884
    %v886 = vrot.slane %v881, 4
    %v887 = vsel %vm358, %v886, %v869
    %v888 = vrot.slane %v869, 4
    %v889 = vsel %vm358, %v881, %v888
    %v891 = vunpack.c.l.s4 1934713408
    %v892 = vunpack.c.0.s8 %v891
    %v893 = vperm.slane %v887, %v892
    %v895 = vunpack.c.l.s4 1934713408
    %v896 = vunpack.c.0.s8 %v895
    %v897 = vperm.slane %v889, %v896
    %v898 = vrot.slane %v885, 4
    %v899 = vsel %vm358, %v898, %v873
    %v900 = vrot.slane %v873, 4
    %v901 = vsel %vm358, %v885, %v900
    %v903 = vunpack.c.l.s4 1934713408
    %v904 = vunpack.c.0.s8 %v903
    %v905 = vperm.slane %v899, %v904
    %v907 = vunpack.c.l.s4 1934713408
    %v908 = vunpack.c.0.s8 %v907
    %v909 = vperm.slane %v901, %v908
    %v910 = vrot.slane %v893, 4
    %v911 = vsel %vm358, 0.0, %v910
    %v912 = vrot.slane %v897, 4
    %v913 = vsel %vm358, 0.0, %v912
    %v914 = vrot.slane %v905, 4
    %v915 = vsel %vm358, 0.0, %v914
    %v916 = vrot.slane %v909, 4
    %v917 = vsel %vm358, 0.0, %v916
    %v918 = vrot.slane %v849, 4
    %v919 = vsel %vm358, %v918, %v841
    %v920 = vrot.slane %v841, 4
    %v921 = vsel %vm358, %v849, %v920
    %v923 = vunpack.c.l.s4 1983009808
    %v924 = vunpack.c.0.s8 %v923
    %v925 = vperm.slane %v919, %v924
    %v927 = vunpack.c.l.s4 1983009808
    %v928 = vunpack.c.0.s8 %v927
    %v929 = vperm.slane %v921, %v928
    %v930 = vrot.slane %v853, 4
    %v931 = vsel %vm358, %v930, %v845
    %v932 = vrot.slane %v845, 4
    %v933 = vsel %vm358, %v853, %v932
    %v935 = vunpack.c.l.s4 1983009808
    %v936 = vunpack.c.0.s8 %v935
    %v937 = vperm.slane %v931, %v936
    %v939 = vunpack.c.l.s4 1983009808
    %v940 = vunpack.c.0.s8 %v939
    %v941 = vperm.slane %v933, %v940
    %v942 = vrot.slane %v937, 4
    %v943 = vsel %vm358, %v942, %v925
    %v944 = vrot.slane %v925, 4
    %v945 = vsel %vm358, %v937, %v944
    %v947 = vunpack.c.l.s4 1934713408
    %v948 = vunpack.c.0.s8 %v947
    %v949 = vperm.slane %v943, %v948
    %v951 = vunpack.c.l.s4 1934713408
    %v952 = vunpack.c.0.s8 %v951
    %v953 = vperm.slane %v945, %v952
    %v954 = vrot.slane %v941, 4
    %v955 = vsel %vm358, %v954, %v929
    %v956 = vrot.slane %v929, 4
    %v957 = vsel %vm358, %v941, %v956
    %v959 = vunpack.c.l.s4 1934713408
    %v960 = vunpack.c.0.s8 %v959
    %v961 = vperm.slane %v955, %v960
    %v963 = vunpack.c.l.s4 1934713408
    %v964 = vunpack.c.0.s8 %v963
    %v965 = vperm.slane %v957, %v964
    %v966 = vrot.slane %v949, 4
    %v967 = vsel %vm358, 0.0, %v966
    %v968 = vrot.slane %v953, 4
    %v969 = vsel %vm358, 0.0, %v968
    %v970 = vrot.slane %v961, 4
    %v971 = vsel %vm358, 0.0, %v970
    %v972 = vrot.slane %v965, 4
    %v973 = vsel %vm358, 0.0, %v972
    %v974 = vsel %vm358, %v912, %v893
    %v976 = vunpack.c.l.s4 1983009808
    %v977 = vunpack.c.0.s8 %v976
    %v978 = vperm.slane %v974, %v977
    %v979 = vrot.slane %v913, 4
    %v980 = vsel %vm358, %v979, %v911
    %v982 = vunpack.c.l.s4 1983009808
    %v983 = vunpack.c.0.s8 %v982
    %v984 = vperm.slane %v980, %v983
    %v985 = vsel %vm358, %v916, %v905
    %v987 = vunpack.c.l.s4 1983009808
    %v988 = vunpack.c.0.s8 %v987
    %v989 = vperm.slane %v985, %v988
    %v990 = vrot.slane %v917, 4
    %v991 = vsel %vm358, %v990, %v915
    %v993 = vunpack.c.l.s4 1983009808
    %v994 = vunpack.c.0.s8 %v993
    %v995 = vperm.slane %v991, %v994
    %v996 = vrot.slane %v984, 4
    %v997 = vsel %vm358, %v996, %v978
    %v998 = vrot.slane %v978, 4
    %v999 = vsel %vm358, %v984, %v998
    %v1001 = vunpack.c.l.s4 1934713408
    %v1002 = vunpack.c.0.s8 %v1001
    %v1003 = vperm.slane %v997, %v1002
    %v1005 = vunpack.c.l.s4 1934713408
    %v1006 = vunpack.c.0.s8 %v1005
    %v1007 = vperm.slane %v999, %v1006
    %v1008 = vrot.slane %v995, 4
    %v1009 = vsel %vm358, %v1008, %v989
    %v1010 = vrot.slane %v989, 4
    %v1011 = vsel %vm358, %v995, %v1010
    %v1013 = vunpack.c.l.s4 1934713408
    %v1014 = vunpack.c.0.s8 %v1013
    %v1015 = vperm.slane %v1009, %v1014
    %v1017 = vunpack.c.l.s4 1934713408
    %v1018 = vunpack.c.0.s8 %v1017
    %v1019 = vperm.slane %v1011, %v1018
    %v1020 = vrot.slane %v1015, 4
    %v1021 = vsel %vm358, %v1020, %v1003
    %v1022 = vrot.slane %v1003, 4
    %v1023 = vsel %vm358, %v1015, %v1022
    %v1024 = vrot.slane %v1019, 4
    %v1025 = vsel %vm358, %v1024, %v1007
    %v1026 = vrot.slane %v1007, 4
    %v1027 = vsel %vm358, %v1019, %v1026
    %v1028 = vsel %vm358, %v968, %v949
    %v1030 = vunpack.c.l.s4 1983009808
    %v1031 = vunpack.c.0.s8 %v1030
    %v1032 = vperm.slane %v1028, %v1031
    %v1033 = vrot.slane %v969, 4
    %v1034 = vsel %vm358, %v1033, %v967
    %v1036 = vunpack.c.l.s4 1983009808
    %v1037 = vunpack.c.0.s8 %v1036
    %v1038 = vperm.slane %v1034, %v1037
    %v1039 = vsel %vm358, %v972, %v961
    %v1041 = vunpack.c.l.s4 1983009808
    %v1042 = vunpack.c.0.s8 %v1041
    %v1043 = vperm.slane %v1039, %v1042
    %v1044 = vrot.slane %v973, 4
    %v1045 = vsel %vm358, %v1044, %v971
    %v1047 = vunpack.c.l.s4 1983009808
    %v1048 = vunpack.c.0.s8 %v1047
    %v1049 = vperm.slane %v1045, %v1048
    %v1050 = vrot.slane %v1038, 4
    %v1051 = vsel %vm358, %v1050, %v1032
    %v1052 = vrot.slane %v1032, 4
    %v1053 = vsel %vm358, %v1038, %v1052
    %v1055 = vunpack.c.l.s4 1934713408
    %v1056 = vunpack.c.0.s8 %v1055
    %v1057 = vperm.slane %v1051, %v1056
    %v1059 = vunpack.c.l.s4 1934713408
    %v1060 = vunpack.c.0.s8 %v1059
    %v1061 = vperm.slane %v1053, %v1060
    %v1062 = vrot.slane %v1049, 4
    %v1063 = vsel %vm358, %v1062, %v1043
    %v1064 = vrot.slane %v1043, 4
    %v1065 = vsel %vm358, %v1049, %v1064
    %v1067 = vunpack.c.l.s4 1934713408
    %v1068 = vunpack.c.0.s8 %v1067
    %v1069 = vperm.slane %v1063, %v1068
    %v1071 = vunpack.c.l.s4 1934713408
    %v1072 = vunpack.c.0.s8 %v1071
    %v1073 = vperm.slane %v1065, %v1072
    %v1074 = vrot.slane %v1069, 4
    %v1075 = vsel %vm358, %v1074, %v1057
    %v1076 = vrot.slane %v1057, 4
    %v1077 = vsel %vm358, %v1069, %v1076
    %v1078 = vrot.slane %v1073, 4
    %v1079 = vsel %vm358, %v1078, %v1061
    %v1080 = vrot.slane %v1061, 4
    %v1081 = vsel %vm358, %v1073, %v1080
    %v1082 = vpack.c.bf16 %v1021, %v1021
    %v1083 = vpack.c.bf16 %v1023, %v1023
    %v1084 = vpack.c.bf16 %v1025, %v1025
    %v1085 = vpack.c.bf16 %v1027, %v1027
    %v1086 = vpack.c.bf16 %v1075, %v1075
    %v1087 = vpack.c.bf16 %v1077, %v1077
    %v1088 = vpack.c.bf16 %v1079, %v1079
    %v1089 = vpack.c.bf16 %v1081, %v1081
    %vm1090 = vcmask 64512
    %v1092 = vsel %vm1090, %v578, 0
    %v1095 = vsel %vm1090, %v830, 0
    %1097 = vmatpush.bf16.xpose.msra.mxu0 0
    %1098 = vmatpush.bf16.xpose.msra.mxu0 0
    %1099 = vmatpush.bf16.xpose.msra.mxu0 0
    %1100 = vmatpush.bf16.xpose.msra.mxu0 0
    %1101 = vmatpush.bf16.xpose.msra.mxu0 0
    %1102 = vmatpush.bf16.xpose.msra.mxu0 0
    %1103 = vmatpush.bf16.xpose.msra.mxu0 0
    %1104 = vmatpush.bf16.xpose.msra.mxu0 %v1095
    %1105 = vmatmul.bf16.gmra.mxu0 %v1092
    %v1106 = vpop.f32.mrf.mxu0
    %v1107 = vadd.f32 0.0, %v1106
    %v1108 = vpop.f32.mrf.mxu0
    %1109 = vdwg.mxu0
    %v1111 = vsel %vm1090, %v579, 0
    %v1114 = vsel %vm1090, %v831, 0
    %1116 = vmatpush.bf16.xpose.msra.mxu0 0
    %1117 = vmatpush.bf16.xpose.msra.mxu0 0
    %1118 = vmatpush.bf16.xpose.msra.mxu0 0
    %1119 = vmatpush.bf16.xpose.msra.mxu0 0
    %1120 = vmatpush.bf16.xpose.msra.mxu0 0
    %1121 = vmatpush.bf16.xpose.msra.mxu0 0
    %1122 = vmatpush.bf16.xpose.msra.mxu0 0
    %1123 = vmatpush.bf16.xpose.msra.mxu0 %v1114
    %1124 = vmatmul.bf16.gmra.mxu0 %v1111
    %v1125 = vpop.f32.mrf.mxu0
    %v1126 = vadd.f32 0.0, %v1125
    %v1127 = vpop.f32.mrf.mxu0
    %1128 = vdwg.mxu0
    %v1130 = vsel %vm1090, %v580, 0
    %v1133 = vsel %vm1090, %v832, 0
    %1135 = vmatpush.bf16.xpose.msra.mxu0 0
    %1136 = vmatpush.bf16.xpose.msra.mxu0 0
    %1137 = vmatpush.bf16.xpose.msra.mxu0 0
    %1138 = vmatpush.bf16.xpose.msra.mxu0 0
    %1139 = vmatpush.bf16.xpose.msra.mxu0 0
    %1140 = vmatpush.bf16.xpose.msra.mxu0 0
    %1141 = vmatpush.bf16.xpose.msra.mxu0 0
    %1142 = vmatpush.bf16.xpose.msra.mxu0 %v1133
    %1143 = vmatmul.bf16.gmra.mxu0 %v1130
    %v1144 = vpop.f32.mrf.mxu0
    %v1145 = vadd.f32 0.0, %v1144
    %v1146 = vpop.f32.mrf.mxu0
    %1147 = vdwg.mxu0
    %v1149 = vsel %vm1090, %v581, 0
    %v1152 = vsel %vm1090, %v833, 0
    %1154 = vmatpush.bf16.xpose.msra.mxu0 0
    %1155 = vmatpush.bf16.xpose.msra.mxu0 0
    %1156 = vmatpush.bf16.xpose.msra.mxu0 0
    %1157 = vmatpush.bf16.xpose.msra.mxu0 0
    %1158 = vmatpush.bf16.xpose.msra.mxu0 0
    %1159 = vmatpush.bf16.xpose.msra.mxu0 0
    %1160 = vmatpush.bf16.xpose.msra.mxu0 0
    %1161 = vmatpush.bf16.xpose.msra.mxu0 %v1152
    %1162 = vmatmul.bf16.gmra.mxu0 %v1149
    %v1163 = vpop.f32.mrf.mxu0
    %v1164 = vadd.f32 0.0, %v1163
    %v1165 = vpop.f32.mrf.mxu0
    %1166 = vdwg.mxu0
    %v1168 = vsel %vm1090, %v582, 0
    %v1171 = vsel %vm1090, %v834, 0
    %1173 = vmatpush.bf16.xpose.msra.mxu0 0
    %1174 = vmatpush.bf16.xpose.msra.mxu0 0
    %1175 = vmatpush.bf16.xpose.msra.mxu0 0
    %1176 = vmatpush.bf16.xpose.msra.mxu0 0
    %1177 = vmatpush.bf16.xpose.msra.mxu0 0
    %1178 = vmatpush.bf16.xpose.msra.mxu0 0
    %1179 = vmatpush.bf16.xpose.msra.mxu0 0
    %1180 = vmatpush.bf16.xpose.msra.mxu0 %v1171
    %1181 = vmatmul.bf16.gmra.mxu0 %v1168
    %v1182 = vpop.f32.mrf.mxu0
    %v1183 = vadd.f32 0.0, %v1182
    %v1184 = vpop.f32.mrf.mxu0
    %1185 = vdwg.mxu0
    %v1187 = vsel %vm1090, %v583, 0
    %v1190 = vsel %vm1090, %v835, 0
    %1192 = vmatpush.bf16.xpose.msra.mxu0 0
    %1193 = vmatpush.bf16.xpose.msra.mxu0 0
    %1194 = vmatpush.bf16.xpose.msra.mxu0 0
    %1195 = vmatpush.bf16.xpose.msra.mxu0 0
    %1196 = vmatpush.bf16.xpose.msra.mxu0 0
    %1197 = vmatpush.bf16.xpose.msra.mxu0 0
    %1198 = vmatpush.bf16.xpose.msra.mxu0 0
    %1199 = vmatpush.bf16.xpose.msra.mxu0 %v1190
    %1200 = vmatmul.bf16.gmra.mxu0 %v1187
    %v1201 = vpop.f32.mrf.mxu0
    %v1202 = vadd.f32 0.0, %v1201
    %v1203 = vpop.f32.mrf.mxu0
    %1204 = vdwg.mxu0
    %v1206 = vsel %vm1090, %v584, 0
    %v1209 = vsel %vm1090, %v836, 0
    %1211 = vmatpush.bf16.xpose.msra.mxu0 0
    %1212 = vmatpush.bf16.xpose.msra.mxu0 0
    %1213 = vmatpush.bf16.xpose.msra.mxu0 0
    %1214 = vmatpush.bf16.xpose.msra.mxu0 0
    %1215 = vmatpush.bf16.xpose.msra.mxu0 0
    %1216 = vmatpush.bf16.xpose.msra.mxu0 0
    %1217 = vmatpush.bf16.xpose.msra.mxu0 0
    %1218 = vmatpush.bf16.xpose.msra.mxu0 %v1209
    %1219 = vmatmul.bf16.gmra.mxu0 %v1206
    %v1220 = vpop.f32.mrf.mxu0
    %v1221 = vadd.f32 0.0, %v1220
    %v1222 = vpop.f32.mrf.mxu0
    %1223 = vdwg.mxu0
    %v1225 = vsel %vm1090, %v585, 0
    %v1228 = vsel %vm1090, %v837, 0
    %1230 = vmatpush.bf16.xpose.msra.mxu0 0
    %1231 = vmatpush.bf16.xpose.msra.mxu0 0
    %1232 = vmatpush.bf16.xpose.msra.mxu0 0
    %1233 = vmatpush.bf16.xpose.msra.mxu0 0
    %1234 = vmatpush.bf16.xpose.msra.mxu0 0
    %1235 = vmatpush.bf16.xpose.msra.mxu0 0
    %1236 = vmatpush.bf16.xpose.msra.mxu0 0
    %1237 = vmatpush.bf16.xpose.msra.mxu0 %v1228
    %1238 = vmatmul.bf16.gmra.mxu0 %v1225
    %v1239 = vpop.f32.mrf.mxu0
    %v1240 = vadd.f32 0.0, %v1239
    %v1241 = vpop.f32.mrf.mxu0
    %1242 = vdwg.mxu0
    %v1243 = vmul.f32 %v1107, 0.35355338
    %v1244 = vmul.f32 %v1126, 0.35355338
    %v1245 = vmul.f32 %v1145, 0.35355338
    %v1246 = vmul.f32 %v1164, 0.35355338
    %v1247 = vmul.f32 %v1183, 0.35355338
    %v1248 = vmul.f32 %v1202, 0.35355338
    %v1249 = vmul.f32 %v1221, 0.35355338
    %v1250 = vmul.f32 %v1240, 0.35355338
    %v1251 = vperm.slane %v296, 0
    %v1252 = vperm.slane %v298, 0
    %v1255 = vadd.f32 %v1243, %v1251
    %v1256 = vadd.f32 %v1244, %v1251
    %v1257 = vadd.f32 %v1245, %v1251
    %v1258 = vadd.f32 %v1246, %v1251
    %v1259 = vadd.f32 %v1247, %v1252
    %v1260 = vadd.f32 %v1248, %v1252
    %v1261 = vadd.f32 %v1249, %v1252
    %v1262 = vadd.f32 %v1250, %v1252
    %v1263 = vsel %vm1090, %v1255, -inf
    %1264 = vmax.xlane.f32.xlu0 %v1263
    %v1265 = vpop.xlane.xlu0 %1264
    %v1266 = vsel %vm1090, %v1256, -inf
    %1267 = vmax.xlane.f32.xlu0 %v1266
    %v1268 = vpop.xlane.xlu0 %1267
    %v1269 = vsel %vm1090, %v1257, -inf
    %1270 = vmax.xlane.f32.xlu0 %v1269
    %v1271 = vpop.xlane.xlu0 %1270
    %v1272 = vsel %vm1090, %v1258, -inf
    %1273 = vmax.xlane.f32.xlu0 %v1272
    %v1274 = vpop.xlane.xlu0 %1273
    %v1275 = vsel %vm1090, %v1259, -inf
    %1276 = vmax.xlane.f32.xlu0 %v1275
    %v1277 = vpop.xlane.xlu0 %1276
    %v1278 = vsel %vm1090, %v1260, -inf
    %1279 = vmax.xlane.f32.xlu0 %v1278
    %v1280 = vpop.xlane.xlu0 %1279
    %v1281 = vsel %vm1090, %v1261, -inf
    %1282 = vmax.xlane.f32.xlu0 %v1281
    %v1283 = vpop.xlane.xlu0 %1282
    %v1284 = vsel %vm1090, %v1262, -inf
    %1285 = vmax.xlane.f32.xlu0 %v1284
    %v1286 = vpop.xlane.xlu0 %1285
    %v1287 = vsub.f32 %v1255, %v1265
    %v1288 = vsub.f32 %v1256, %v1268
    %v1289 = vsub.f32 %v1257, %v1271
    %v1290 = vsub.f32 %v1258, %v1274
    %v1291 = vsub.f32 %v1259, %v1277
    %v1292 = vsub.f32 %v1260, %v1280
    %v1293 = vsub.f32 %v1261, %v1283
    %v1294 = vsub.f32 %v1262, %v1286
    %v1295 = vmul.f32 %v1287, 1.442695
    %v1296 = vpow.pop %v1295
    %v1297 = vmul.f32 %v1288, 1.442695
    %v1298 = vpow.pop %v1297
    %v1299 = vmul.f32 %v1289, 1.442695
    %v1300 = vpow.pop %v1299
    %v1301 = vmul.f32 %v1290, 1.442695
    %v1302 = vpow.pop %v1301
    %v1303 = vmul.f32 %v1291, 1.442695
    %v1304 = vpow.pop %v1303
    %v1305 = vmul.f32 %v1292, 1.442695
    %v1306 = vpow.pop %v1305
    %v1307 = vmul.f32 %v1293, 1.442695
    %v1308 = vpow.pop %v1307
    %v1309 = vmul.f32 %v1294, 1.442695
    %v1310 = vpow.pop %v1309
    %v1311 = vsel %vm1090, %v1296, 0.0
    %1312 = vadd.xlane.f32.xlu0 %v1311
    %v1313 = vpop.xlane.xlu0 %1312
    %v1314 = vsel %vm1090, %v1298, 0.0
    %1315 = vadd.xlane.f32.xlu0 %v1314
    %v1316 = vpop.xlane.xlu0 %1315
    %v1317 = vsel %vm1090, %v1300, 0.0
    %1318 = vadd.xlane.f32.xlu0 %v1317
    %v1319 = vpop.xlane.xlu0 %1318
    %v1320 = vsel %vm1090, %v1302, 0.0
    %1321 = vadd.xlane.f32.xlu0 %v1320
    %v1322 = vpop.xlane.xlu0 %1321
    %v1323 = vsel %vm1090, %v1304, 0.0
    %1324 = vadd.xlane.f32.xlu0 %v1323
    %v1325 = vpop.xlane.xlu0 %1324
    %v1326 = vsel %vm1090, %v1306, 0.0
    %1327 = vadd.xlane.f32.xlu0 %v1326
    %v1328 = vpop.xlane.xlu0 %1327
    %v1329 = vsel %vm1090, %v1308, 0.0
    %1330 = vadd.xlane.f32.xlu0 %v1329
    %v1331 = vpop.xlane.xlu0 %1330
    %v1332 = vsel %vm1090, %v1310, 0.0
    %1333 = vadd.xlane.f32.xlu0 %v1332
    %v1334 = vpop.xlane.xlu0 %1333
    %v1335 = vrcp.pop %v1313
    %v1336 = vrcp.pop %v1316
    %v1337 = vrcp.pop %v1319
    %v1338 = vrcp.pop %v1322
    %v1339 = vrcp.pop %v1325
    %v1340 = vrcp.pop %v1328
    %v1341 = vrcp.pop %v1331
    %v1342 = vrcp.pop %v1334
    %v1343 = vmul.f32 %v1296, %v1335
    %v1344 = vmul.f32 %v1298, %v1336
    %v1345 = vmul.f32 %v1300, %v1337
    %v1346 = vmul.f32 %v1302, %v1338
    %v1347 = vmul.f32 %v1304, %v1339
    %v1348 = vmul.f32 %v1306, %v1340
    %v1349 = vmul.f32 %v1308, %v1341
    %v1350 = vmul.f32 %v1310, %v1342
    %v1351 = vpack.c.bf16 %v1343, %v1343
    %v1352 = vpack.c.bf16 %v1344, %v1344
    %v1353 = vpack.c.bf16 %v1345, %v1345
    %v1354 = vpack.c.bf16 %v1346, %v1346
    %v1355 = vpack.c.bf16 %v1347, %v1347
    %v1356 = vpack.c.bf16 %v1348, %v1348
    %v1357 = vpack.c.bf16 %v1349, %v1349
    %v1358 = vpack.c.bf16 %v1350, %v1350
    %v1360 = vsel %vm1090, %v1351, 0
    %vm1362 = vcmask 1043456
    %v1364 = vsel %vm1362, %v1082, 0
    %1366 = vmatpush.bf16.msra.mxu0 0
    %1367 = vmatpush.bf16.msra.mxu0 0
    %1368 = vmatpush.bf16.msra.mxu0 0
    %1369 = vmatpush.bf16.msra.mxu0 0
    %1370 = vmatpush.bf16.msra.mxu0 0
    %1371 = vmatpush.bf16.msra.mxu0 0
    %1372 = vmatpush.bf16.msra.mxu0 0
    %1373 = vmatpush.bf16.msra.mxu0 %v1364
    %1374 = vmatmul.bf16.gmra.mxu0 %v1360
    %v1375 = vpop.f32.mrf.mxu0
    %v1376 = vadd.f32 0.0, %v1375
    %v1377 = vpop.f32.mrf.mxu0
    %1378 = vdwg.mxu0
    %v1380 = vsel %vm1090, %v1352, 0
    %v1383 = vsel %vm1362, %v1083, 0
    %1385 = vmatpush.bf16.msra.mxu0 0
    %1386 = vmatpush.bf16.msra.mxu0 0
    %1387 = vmatpush.bf16.msra.mxu0 0
    %1388 = vmatpush.bf16.msra.mxu0 0
    %1389 = vmatpush.bf16.msra.mxu0 0
    %1390 = vmatpush.bf16.msra.mxu0 0
    %1391 = vmatpush.bf16.msra.mxu0 0
    %1392 = vmatpush.bf16.msra.mxu0 %v1383
    %1393 = vmatmul.bf16.gmra.mxu0 %v1380
    %v1394 = vpop.f32.mrf.mxu0
    %v1395 = vadd.f32 0.0, %v1394
    %v1396 = vpop.f32.mrf.mxu0
    %1397 = vdwg.mxu0
    %v1399 = vsel %vm1090, %v1353, 0
    %v1402 = vsel %vm1362, %v1084, 0
    %1404 = vmatpush.bf16.msra.mxu0 0
    %1405 = vmatpush.bf16.msra.mxu0 0
    %1406 = vmatpush.bf16.msra.mxu0 0
    %1407 = vmatpush.bf16.msra.mxu0 0
    %1408 = vmatpush.bf16.msra.mxu0 0
    %1409 = vmatpush.bf16.msra.mxu0 0
    %1410 = vmatpush.bf16.msra.mxu0 0
    %1411 = vmatpush.bf16.msra.mxu0 %v1402
    %1412 = vmatmul.bf16.gmra.mxu0 %v1399
    %v1413 = vpop.f32.mrf.mxu0
    %v1414 = vadd.f32 0.0, %v1413
    %v1415 = vpop.f32.mrf.mxu0
    %1416 = vdwg.mxu0
    %v1418 = vsel %vm1090, %v1354, 0
    %v1421 = vsel %vm1362, %v1085, 0
    %1423 = vmatpush.bf16.msra.mxu0 0
    %1424 = vmatpush.bf16.msra.mxu0 0
    %1425 = vmatpush.bf16.msra.mxu0 0
    %1426 = vmatpush.bf16.msra.mxu0 0
    %1427 = vmatpush.bf16.msra.mxu0 0
    %1428 = vmatpush.bf16.msra.mxu0 0
    %1429 = vmatpush.bf16.msra.mxu0 0
    %1430 = vmatpush.bf16.msra.mxu0 %v1421
    %1431 = vmatmul.bf16.gmra.mxu0 %v1418
    %v1432 = vpop.f32.mrf.mxu0
    %v1433 = vadd.f32 0.0, %v1432
    %v1434 = vpop.f32.mrf.mxu0
    %1435 = vdwg.mxu0
    %v1437 = vsel %vm1090, %v1355, 0
    %v1440 = vsel %vm1362, %v1086, 0
    %1442 = vmatpush.bf16.msra.mxu0 0
    %1443 = vmatpush.bf16.msra.mxu0 0
    %1444 = vmatpush.bf16.msra.mxu0 0
    %1445 = vmatpush.bf16.msra.mxu0 0
    %1446 = vmatpush.bf16.msra.mxu0 0
    %1447 = vmatpush.bf16.msra.mxu0 0
    %1448 = vmatpush.bf16.msra.mxu0 0
    %1449 = vmatpush.bf16.msra.mxu0 %v1440
    %1450 = vmatmul.bf16.gmra.mxu0 %v1437
    %v1451 = vpop.f32.mrf.mxu0
    %v1452 = vadd.f32 0.0, %v1451
    %v1453 = vpop.f32.mrf.mxu0
    %1454 = vdwg.mxu0
    %v1456 = vsel %vm1090, %v1356, 0
    %v1459 = vsel %vm1362, %v1087, 0
    %1461 = vmatpush.bf16.msra.mxu0 0
    %1462 = vmatpush.bf16.msra.mxu0 0
    %1463 = vmatpush.bf16.msra.mxu0 0
    %1464 = vmatpush.bf16.msra.mxu0 0
    %1465 = vmatpush.bf16.msra.mxu0 0
    %1466 = vmatpush.bf16.msra.mxu0 0
    %1467 = vmatpush.bf16.msra.mxu0 0
    %1468 = vmatpush.bf16.msra.mxu0 %v1459
    %1469 = vmatmul.bf16.gmra.mxu0 %v1456
    %v1470 = vpop.f32.mrf.mxu0
    %v1471 = vadd.f32 0.0, %v1470
    %v1472 = vpop.f32.mrf.mxu0
    %1473 = vdwg.mxu0
    %v1475 = vsel %vm1090, %v1357, 0
    %v1478 = vsel %vm1362, %v1088, 0
    %1480 = vmatpush.bf16.msra.mxu0 0
    %1481 = vmatpush.bf16.msra.mxu0 0
    %1482 = vmatpush.bf16.msra.mxu0 0
    %1483 = vmatpush.bf16.msra.mxu0 0
    %1484 = vmatpush.bf16.msra.mxu0 0
    %1485 = vmatpush.bf16.msra.mxu0 0
    %1486 = vmatpush.bf16.msra.mxu0 0
    %1487 = vmatpush.bf16.msra.mxu0 %v1478
    %1488 = vmatmul.bf16.gmra.mxu0 %v1475
    %v1489 = vpop.f32.mrf.mxu0
    %v1490 = vadd.f32 0.0, %v1489
    %v1491 = vpop.f32.mrf.mxu0
    %1492 = vdwg.mxu0
    %v1494 = vsel %vm1090, %v1358, 0
    %v1497 = vsel %vm1362, %v1089, 0
    %1499 = vmatpush.bf16.msra.mxu0 0
    %1500 = vmatpush.bf16.msra.mxu0 0
    %1501 = vmatpush.bf16.msra.mxu0 0
    %1502 = vmatpush.bf16.msra.mxu0 0
    %1503 = vmatpush.bf16.msra.mxu0 0
    %1504 = vmatpush.bf16.msra.mxu0 0
    %1505 = vmatpush.bf16.msra.mxu0 0
    %1506 = vmatpush.bf16.msra.mxu0 %v1497
    %1507 = vmatmul.bf16.gmra.mxu0 %v1494
    %v1508 = vpop.f32.mrf.mxu0
    %v1509 = vadd.f32 0.0, %v1508
    %v1510 = vpop.f32.mrf.mxu0
    %1511 = vdwg.mxu0
    %v1512 = vrot.slane %v1414, 4
    %v1513 = vsel %vm358, %v1512, %v1376
    %v1514 = vrot.slane %v1376, 4
    %v1515 = vsel %vm358, %v1414, %v1514
    %v1517 = vunpack.c.l.s4 1983009808
    %v1518 = vunpack.c.0.s8 %v1517
    %v1519 = vperm.slane %v1513, %v1518
    %v1521 = vunpack.c.l.s4 1983009808
    %v1522 = vunpack.c.0.s8 %v1521
    %v1523 = vperm.slane %v1515, %v1522
    %v1524 = vrot.slane %v1433, 4
    %v1525 = vsel %vm358, %v1524, %v1395
    %v1526 = vrot.slane %v1395, 4
    %v1527 = vsel %vm358, %v1433, %v1526
    %v1529 = vunpack.c.l.s4 1983009808
    %v1530 = vunpack.c.0.s8 %v1529
    %v1531 = vperm.slane %v1525, %v1530
    %v1533 = vunpack.c.l.s4 1983009808
    %v1534 = vunpack.c.0.s8 %v1533
    %v1535 = vperm.slane %v1527, %v1534
    %v1536 = vrot.slane %v1531, 4
    %v1537 = vsel %vm358, %v1536, %v1519
    %v1538 = vrot.slane %v1519, 4
    %v1539 = vsel %vm358, %v1531, %v1538
    %v1541 = vunpack.c.l.s4 1934713408
    %v1542 = vunpack.c.0.s8 %v1541
    %v1543 = vperm.slane %v1537, %v1542
    %v1545 = vunpack.c.l.s4 1934713408
    %v1546 = vunpack.c.0.s8 %v1545
    %v1547 = vperm.slane %v1539, %v1546
    %v1548 = vrot.slane %v1535, 4
    %v1549 = vsel %vm358, %v1548, %v1523
    %v1550 = vrot.slane %v1523, 4
    %v1551 = vsel %vm358, %v1535, %v1550
    %v1553 = vunpack.c.l.s4 1934713408
    %v1554 = vunpack.c.0.s8 %v1553
    %v1555 = vperm.slane %v1549, %v1554
    %v1557 = vunpack.c.l.s4 1934713408
    %v1558 = vunpack.c.0.s8 %v1557
    %v1559 = vperm.slane %v1551, %v1558
    %v1560 = vrot.slane %v1543, 4
    %v1561 = vsel %vm358, 0.0, %v1560
    %v1562 = vrot.slane %v1547, 4
    %v1563 = vsel %vm358, 0.0, %v1562
    %v1564 = vrot.slane %v1555, 4
    %v1565 = vsel %vm358, 0.0, %v1564
    %v1566 = vrot.slane %v1559, 4
    %v1567 = vsel %vm358, 0.0, %v1566
    %v1568 = vrot.slane %v1490, 4
    %v1569 = vsel %vm358, %v1568, %v1452
    %v1570 = vrot.slane %v1452, 4
    %v1571 = vsel %vm358, %v1490, %v1570
    %v1573 = vunpack.c.l.s4 1983009808
    %v1574 = vunpack.c.0.s8 %v1573
    %v1575 = vperm.slane %v1569, %v1574
    %v1577 = vunpack.c.l.s4 1983009808
    %v1578 = vunpack.c.0.s8 %v1577
    %v1579 = vperm.slane %v1571, %v1578
    %v1580 = vrot.slane %v1509, 4
    %v1581 = vsel %vm358, %v1580, %v1471
    %v1582 = vrot.slane %v1471, 4
    %v1583 = vsel %vm358, %v1509, %v1582
    %v1585 = vunpack.c.l.s4 1983009808
    %v1586 = vunpack.c.0.s8 %v1585
    %v1587 = vperm.slane %v1581, %v1586
    %v1589 = vunpack.c.l.s4 1983009808
    %v1590 = vunpack.c.0.s8 %v1589
    %v1591 = vperm.slane %v1583, %v1590
    %v1592 = vrot.slane %v1587, 4
    %v1593 = vsel %vm358, %v1592, %v1575
    %v1594 = vrot.slane %v1575, 4
    %v1595 = vsel %vm358, %v1587, %v1594
    %v1597 = vunpack.c.l.s4 1934713408
    %v1598 = vunpack.c.0.s8 %v1597
    %v1599 = vperm.slane %v1593, %v1598
    %v1601 = vunpack.c.l.s4 1934713408
    %v1602 = vunpack.c.0.s8 %v1601
    %v1603 = vperm.slane %v1595, %v1602
    %v1604 = vrot.slane %v1591, 4
    %v1605 = vsel %vm358, %v1604, %v1579
    %v1606 = vrot.slane %v1579, 4
    %v1607 = vsel %vm358, %v1591, %v1606
    %v1609 = vunpack.c.l.s4 1934713408
    %v1610 = vunpack.c.0.s8 %v1609
    %v1611 = vperm.slane %v1605, %v1610
    %v1613 = vunpack.c.l.s4 1934713408
    %v1614 = vunpack.c.0.s8 %v1613
    %v1615 = vperm.slane %v1607, %v1614
    %v1616 = vrot.slane %v1599, 4
    %v1617 = vsel %vm358, 0.0, %v1616
    %v1618 = vrot.slane %v1603, 4
    %v1619 = vsel %vm358, 0.0, %v1618
    %v1620 = vrot.slane %v1611, 4
    %v1621 = vsel %vm358, 0.0, %v1620
    %v1622 = vrot.slane %v1615, 4
    %v1623 = vsel %vm358, 0.0, %v1622
    %v1624 = vsel %vm358, %v1562, %v1543
    %v1626 = vunpack.c.l.s4 1983009808
    %v1627 = vunpack.c.0.s8 %v1626
    %v1628 = vperm.slane %v1624, %v1627
    %v1629 = vrot.slane %v1563, 4
    %v1630 = vsel %vm358, %v1629, %v1561
    %v1632 = vunpack.c.l.s4 1983009808
    %v1633 = vunpack.c.0.s8 %v1632
    %v1634 = vperm.slane %v1630, %v1633
    %v1635 = vsel %vm358, %v1566, %v1555
    %v1637 = vunpack.c.l.s4 1983009808
    %v1638 = vunpack.c.0.s8 %v1637
    %v1639 = vperm.slane %v1635, %v1638
    %v1640 = vrot.slane %v1567, 4
    %v1641 = vsel %vm358, %v1640, %v1565
    %v1643 = vunpack.c.l.s4 1983009808
    %v1644 = vunpack.c.0.s8 %v1643
    %v1645 = vperm.slane %v1641, %v1644
    %v1646 = vrot.slane %v1634, 4
    %v1647 = vsel %vm358, %v1646, %v1628
    %v1648 = vrot.slane %v1628, 4
    %v1649 = vsel %vm358, %v1634, %v1648
    %v1651 = vunpack.c.l.s4 1934713408
    %v1652 = vunpack.c.0.s8 %v1651
    %v1653 = vperm.slane %v1647, %v1652
    %v1655 = vunpack.c.l.s4 1934713408
    %v1656 = vunpack.c.0.s8 %v1655
    %v1657 = vperm.slane %v1649, %v1656
    %v1658 = vrot.slane %v1645, 4
    %v1659 = vsel %vm358, %v1658, %v1639
    %v1660 = vrot.slane %v1639, 4
    %v1661 = vsel %vm358, %v1645, %v1660
    %v1663 = vunpack.c.l.s4 1934713408
    %v1664 = vunpack.c.0.s8 %v1663
    %v1665 = vperm.slane %v1659, %v1664
    %v1667 = vunpack.c.l.s4 1934713408
    %v1668 = vunpack.c.0.s8 %v1667
    %v1669 = vperm.slane %v1661, %v1668
    %v1670 = vrot.slane %v1665, 4
    %v1671 = vsel %vm358, %v1670, %v1653
    %v1672 = vrot.slane %v1653, 4
    %v1673 = vsel %vm358, %v1665, %v1672
    %v1674 = vrot.slane %v1669, 4
    %v1675 = vsel %vm358, %v1674, %v1657
    %v1676 = vrot.slane %v1657, 4
    %v1677 = vsel %vm358, %v1669, %v1676
    %v1678 = vsel %vm358, %v1618, %v1599
    %v1680 = vunpack.c.l.s4 1983009808
    %v1681 = vunpack.c.0.s8 %v1680
    %v1682 = vperm.slane %v1678, %v1681
    %v1683 = vrot.slane %v1619, 4
    %v1684 = vsel %vm358, %v1683, %v1617
    %v1686 = vunpack.c.l.s4 1983009808
    %v1687 = vunpack.c.0.s8 %v1686
    %v1688 = vperm.slane %v1684, %v1687
    %v1689 = vsel %vm358, %v1622, %v1611
    %v1691 = vunpack.c.l.s4 1983009808
    %v1692 = vunpack.c.0.s8 %v1691
    %v1693 = vperm.slane %v1689, %v1692
    %v1694 = vrot.slane %v1623, 4
    %v1695 = vsel %vm358, %v1694, %v1621
    %v1697 = vunpack.c.l.s4 1983009808
    %v1698 = vunpack.c.0.s8 %v1697
    %v1699 = vperm.slane %v1695, %v1698
    %v1700 = vrot.slane %v1688, 4
    %v1701 = vsel %vm358, %v1700, %v1682
    %v1702 = vrot.slane %v1682, 4
    %v1703 = vsel %vm358, %v1688, %v1702
    %v1705 = vunpack.c.l.s4 1934713408
    %v1706 = vunpack.c.0.s8 %v1705
    %v1707 = vperm.slane %v1701, %v1706
    %v1709 = vunpack.c.l.s4 1934713408
    %v1710 = vunpack.c.0.s8 %v1709
    %v1711 = vperm.slane %v1703, %v1710
    %v1712 = vrot.slane %v1699, 4
    %v1713 = vsel %vm358, %v1712, %v1693
    %v1714 = vrot.slane %v1693, 4
    %v1715 = vsel %vm358, %v1699, %v1714
    %v1717 = vunpack.c.l.s4 1934713408
    %v1718 = vunpack.c.0.s8 %v1717
    %v1719 = vperm.slane %v1713, %v1718
    %v1721 = vunpack.c.l.s4 1934713408
    %v1722 = vunpack.c.0.s8 %v1721
    %v1723 = vperm.slane %v1715, %v1722
    %v1724 = vrot.slane %v1719, 4
    %v1725 = vsel %vm358, %v1724, %v1707
    %v1726 = vrot.slane %v1707, 4
    %v1727 = vsel %vm358, %v1719, %v1726
    %v1728 = vrot.slane %v1723, 4
    %v1729 = vsel %vm358, %v1728, %v1711
    %v1730 = vrot.slane %v1711, 4
    %v1731 = vsel %vm358, %v1723, %v1730
    %1734 = vrot.lane.b32.xlu0 %v1673, 8
    %v1735 = vpop.permute.xlu0 %1734
    %1736 = vrot.lane.b32.xlu0 %v1727, 8
    %v1737 = vpop.permute.xlu0 %1736
    %1742 = vrot.lane.b32.xlu0 %v1675, 16
    %v1743 = vpop.permute.xlu0 %1742
    %1744 = vrot.lane.b32.xlu0 %v1729, 16
    %v1745 = vpop.permute.xlu0 %1744
    %1750 = vrot.lane.b32.xlu0 %v1677, 24
    %v1751 = vpop.permute.xlu0 %1750
    %1752 = vrot.lane.b32.xlu0 %v1731, 24
    %v1753 = vpop.permute.xlu0 %1752
    %v1756 = vsel %vm1090, %v1671, %v1735
    %v1757 = vsel %vm1090, %v1725, %v1737
    %vm1758 = vcmask 130048
    %v1759 = vsel %vm1758, %v1756, %v1743
    %v1760 = vsel %vm1758, %v1757, %v1745
    %vm1761 = vcmask 195584
    %v1762 = vsel %vm1761, %v1759, %v1751
    %v1763 = vsel %vm1761, %v1760, %v1753
    %v1764 = vpack.c.bf16 %v1763, %v1762
    %v1765 = vld [vmem:[%s23] sm:$0xf]
    %v1766 = vld [vmem:[%s23 + $0x4] sm:$0xf]
    %v1767 = vld [vmem:[%s23 + $0x8] sm:$0xf]
    %v1768 = vld [vmem:[%s23 + $0xc] sm:$0xf]
    %v1769 = vld [vmem:[%s25] sm:$0x1]
    %v1771 = vperm.slane %v1769, 0
    %v1777 = vunpack.c.l.b16 %v1765
    %v1778 = vunpack.c.l.b16 %v1766
    %v1779 = vunpack.c.l.b16 %v1767
    %v1780 = vunpack.c.l.b16 %v1768
    %v1781 = vpack.c.b16 %v1778, %v1777
    %v1782 = vpack.c.b16 %v1780, %v1779
    %v1786 = vsel %vm231, %v1764, 0
    %1788 = vmatpush.bf16.msra.mxu0 0
    %1789 = vmatpush.bf16.msra.mxu0 0
    %1790 = vmatpush.bf16.msra.mxu0 0
    %1791 = vmatpush.bf16.msra.mxu0 0
    %1792 = vmatpush.bf16.msra.mxu0 0
    %1793 = vmatpush.bf16.msra.mxu0 0
    %1794 = vmatpush.bf16.msra.mxu0 %v1782
    %1795 = vmatpush.bf16.msra.mxu0 %v1781
    %1796 = vmatmul.bf16.gmra.mxu0 %v1786
    %v1797 = vpop.f32.mrf.mxu0
    %v1798 = vadd.f32 %v1771, %v1797
    %v1799 = vpop.f32.mrf.mxu0
    %v1800 = vadd.f32 %v1771, %v1799
    %1801 = vdwg.mxu0
    %v1802 = vadd.f32 %v1798, %v291
    %v1803 = vadd.f32 %v1800, %v292
    %v1804 = vld [vmem:[%s27] sm:$0x1]
    %v1805 = vld [vmem:[%s29] sm:$0x1]
    %v1806 = vsel %vm231, %v1802, 0.0
    %1807 = vadd.xlane.f32.xlu0 %v1806
    %v1808 = vpop.xlane.xlu0 %1807
    %v1809 = vsel %vm231, %v1803, 0.0
    %1810 = vadd.xlane.f32.xlu0 %v1809
    %v1811 = vpop.xlane.xlu0 %1810
    %v1812 = vmul.f32 %v1808, %v244
    %v1813 = vmul.f32 %v1811, %v244
    %v1814 = vsub.f32 %v1802, %v1812
    %v1815 = vsub.f32 %v1803, %v1813
    %v1816 = vmul.f32 %v1814, %v1814
    %v1817 = vmul.f32 %v1815, %v1815
    %v1818 = vsel %vm231, %v1816, 0.0
    %1819 = vadd.xlane.f32.xlu0 %v1818
    %v1820 = vpop.xlane.xlu0 %1819
    %v1821 = vsel %vm231, %v1817, 0.0
    %1822 = vadd.xlane.f32.xlu0 %v1821
    %v1823 = vpop.xlane.xlu0 %1822
    %v1824 = vmul.f32 %v1820, %v244
    %v1825 = vmul.f32 %v1823, %v244
    %v1826 = vadd.f32 %v1824, 1e-12
    %v1827 = vadd.f32 %v1825, 1e-12
    %v1828 = vrsqrt.pop %v1826
    %v1829 = vmul.f32 %v1828, %v1826
    %v1830 = vmul.f32 %v1829, %v1828
    %v1831 = vmul.f32 0.5, %v1830
    %v1832 = vsub.f32 1.5, %v1831
    %v1833 = vmul.f32 %v1828, %v1832
    %vm1834 = vweird.f32 %v1826
    %vm1835 = vweird.f32 %v1828
    %vm1836 = vmor %vm1834, %vm1835
    %v1837 = vsel %vm1836, %v1828, %v1833
    %v1838 = vrsqrt.pop %v1827
    %v1839 = vmul.f32 %v1838, %v1827
    %v1840 = vmul.f32 %v1839, %v1838
    %v1841 = vmul.f32 0.5, %v1840
    %v1842 = vsub.f32 1.5, %v1841
    %v1843 = vmul.f32 %v1838, %v1842
    %vm1844 = vweird.f32 %v1827
    %vm1845 = vweird.f32 %v1838
    %vm1846 = vmor %vm1844, %vm1845
    %v1847 = vsel %vm1846, %v1838, %v1843
    %v1848 = vmul.f32 %v1814, %v1837
    %v1849 = vmul.f32 %v1815, %v1847
    %v1851 = vperm.slane %v1804, 0
    %v1853 = vmul.f32 %v1848, %v1851
    %v1854 = vmul.f32 %v1849, %v1851
    %v1856 = vperm.slane %v1805, 0
    %v1858 = vadd.f32 %v1853, %v1856
    %v1859 = vadd.f32 %v1854, %v1856
    %v1860 = vpack.c.bf16 %v1859, %v1858
    %v1861 = vld [vmem:[%s31] sm:$0xf]
    %v1862 = vld [vmem:[%s31 + $0x4] sm:$0xf]
    %v1863 = vld [vmem:[%s31 + $0x8] sm:$0xf]
    %v1864 = vld [vmem:[%s31 + $0xc] sm:$0xf]
    %v1865 = vld [vmem:[%s33] sm:$0x1]
    %v1867 = vperm.slane %v1865, 0
    %v1873 = vunpack.c.l.b16 %v1861
    %v1874 = vunpack.c.l.b16 %v1862
    %v1875 = vunpack.c.l.b16 %v1863
    %v1876 = vunpack.c.l.b16 %v1864
    %v1877 = vpack.c.b16 %v1874, %v1873
    %v1878 = vpack.c.b16 %v1876, %v1875
    %v1882 = vsel %vm231, %v1860, 0
    %1884 = vmatpush.bf16.msra.mxu0 0
    %1885 = vmatpush.bf16.msra.mxu0 0
    %1886 = vmatpush.bf16.msra.mxu0 0
    %1887 = vmatpush.bf16.msra.mxu0 0
    %1888 = vmatpush.bf16.msra.mxu0 0
    %1889 = vmatpush.bf16.msra.mxu0 0
    %1890 = vmatpush.bf16.msra.mxu0 %v1878
    %1891 = vmatpush.bf16.msra.mxu0 %v1877
    %1892 = vmatmul.bf16.gmra.mxu0 %v1882
    %v1893 = vpop.f32.mrf.mxu0
    %v1894 = vadd.f32 %v1867, %v1893
    %v1895 = vpop.f32.mrf.mxu0
    %v1896 = vadd.f32 %v1867, %v1895
    %1897 = vdwg.mxu0
    %v1898 = vmul.f32 %v1894, %v1894
    %v1899 = vmul.f32 %v1896, %v1896
    %v1900 = vmul.f32 %v1894, %v1898
    %v1901 = vmul.f32 %v1896, %v1899
    %v1902 = vmul.f32 %v1900, 0.044715
    %v1903 = vmul.f32 %v1901, 0.044715
    %v1904 = vadd.f32 %v1894, %v1902
    %v1905 = vadd.f32 %v1896, %v1903
    %v1906 = vmul.f32 %v1904, 0.7978846
    %v1907 = vmul.f32 %v1905, 0.7978846
    %v1908 = vtanh.pop %v1906
    %v1909 = vtanh.pop %v1907
    %v1910 = vadd.f32 %v1908, 1.0
    %v1911 = vadd.f32 %v1909, 1.0
    %v1912 = vmul.f32 %v1910, 0.5
    %v1913 = vmul.f32 %v1911, 0.5
    %v1914 = vmul.f32 %v1894, %v1912
    %v1915 = vmul.f32 %v1896, %v1913
    %v1916 = vpack.c.bf16 %v1915, %v1914
    %v1917 = vld [vmem:[%s35] sm:$0xf]
    %v1918 = vld [vmem:[%s35 + $0x4] sm:$0xf]
    %v1919 = vld [vmem:[%s35 + $0x8] sm:$0xf]
    %v1920 = vld [vmem:[%s35 + $0xc] sm:$0xf]
    %v1921 = vld [vmem:[%s35 + $0x10] sm:$0xf]
    %v1922 = vld [vmem:[%s35 + $0x14] sm:$0xf]
    %v1923 = vld [vmem:[%s35 + $0x18] sm:$0xf]
    %v1924 = vld [vmem:[%s35 + $0x1c] sm:$0xf]
    %v1925 = vld [vmem:[%s37] sm:$0x1]
    %v1927 = vperm.slane %v1925, 0
    %v1937 = vunpack.c.l.b16 %v1917
    %v1938 = vunpack.c.l.b16 %v1918
    %v1939 = vunpack.c.l.b16 %v1919
    %v1940 = vunpack.c.l.b16 %v1920
    %v1941 = vunpack.c.l.b16 %v1921
    %v1942 = vunpack.c.l.b16 %v1922
    %v1943 = vunpack.c.l.b16 %v1923
    %v1944 = vunpack.c.l.b16 %v1924
    %v1945 = vpack.c.b16 %v1938, %v1937
    %v1946 = vpack.c.b16 %v1940, %v1939
    %v1947 = vpack.c.b16 %v1942, %v1941
    %v1948 = vpack.c.b16 %v1944, %v1943
    %vm1953 = vcmask 523264
    %v1955 = vsel %vm1953, %v1916, 0
    %1957 = vmatpush.bf16.msra.mxu0 0
    %1958 = vmatpush.bf16.msra.mxu0 0
    %1959 = vmatpush.bf16.msra.mxu0 0
    %1960 = vmatpush.bf16.msra.mxu0 0
    %1961 = vmatpush.bf16.msra.mxu0 %v1948
    %1962 = vmatpush.bf16.msra.mxu0 %v1947
    %1963 = vmatpush.bf16.msra.mxu0 %v1946
    %1964 = vmatpush.bf16.msra.mxu0 %v1945
    %1965 = vmatmul.bf16.gmra.mxu0 %v1955
    %v1966 = vpop.f32.mrf.mxu0
    %v1967 = vadd.f32 %v1927, %v1966
    %v1968 = vpop.f32.mrf.mxu0
    %v1969 = vadd.f32 %v1927, %v1968
    %1970 = vdwg.mxu0
    %v1971 = vadd.f32 %v1967, %v1858
    %v1972 = vadd.f32 %v1969, %v1859
    %v1973 = vld [vmem:[%s39] sm:$0x1]
    %v1974 = vld [vmem:[%s41] sm:$0x1]
    %v1975 = vsel %vm231, %v1971, 0.0
    %1976 = vadd.xlane.f32.xlu0 %v1975
    %v1977 = vpop.xlane.xlu0 %1976
    %v1978 = vsel %vm231, %v1972, 0.0
    %1979 = vadd.xlane.f32.xlu0 %v1978
    %v1980 = vpop.xlane.xlu0 %1979
    %v1981 = vmul.f32 %v1977, %v244
    %v1982 = vmul.f32 %v1980, %v244
    %v1983 = vsub.f32 %v1971, %v1981
    %v1984 = vsub.f32 %v1972, %v1982
    %v1985 = vmul.f32 %v1983, %v1983
    %v1986 = vmul.f32 %v1984, %v1984
    %v1987 = vsel %vm231, %v1985, 0.0
    %1988 = vadd.xlane.f32.xlu0 %v1987
    %v1989 = vpop.xlane.xlu0 %1988
    %v1990 = vsel %vm231, %v1986, 0.0
    %1991 = vadd.xlane.f32.xlu0 %v1990
    %v1992 = vpop.xlane.xlu0 %1991
    %v1993 = vmul.f32 %v1989, %v244
    %v1994 = vmul.f32 %v1992, %v244
    %v1995 = vadd.f32 %v1993, 1e-12
    %v1996 = vadd.f32 %v1994, 1e-12
    %v1997 = vrsqrt.pop %v1995
    %v1998 = vmul.f32 %v1997, %v1995
    %v1999 = vmul.f32 %v1998, %v1997
    %v2000 = vmul.f32 0.5, %v1999
    %v2001 = vsub.f32 1.5, %v2000
    %v2002 = vmul.f32 %v1997, %v2001
    %vm2003 = vweird.f32 %v1995
    %vm2004 = vweird.f32 %v1997
    %vm2005 = vmor %vm2003, %vm2004
    %v2006 = vsel %vm2005, %v1997, %v2002
    %v2007 = vrsqrt.pop %v1996
    %v2008 = vmul.f32 %v2007, %v1996
    %v2009 = vmul.f32 %v2008, %v2007
    %v2010 = vmul.f32 0.5, %v2009
    %v2011 = vsub.f32 1.5, %v2010
    %v2012 = vmul.f32 %v2007, %v2011
    %vm2013 = vweird.f32 %v1996
    %vm2014 = vweird.f32 %v2007
    %vm2015 = vmor %vm2013, %vm2014
    %v2016 = vsel %vm2015, %v2007, %v2012
    %v2017 = vmul.f32 %v1983, %v2006
    %v2018 = vmul.f32 %v1984, %v2016
    %v2020 = vperm.slane %v1973, 0
    %v2022 = vmul.f32 %v2017, %v2020
    %v2023 = vmul.f32 %v2018, %v2020
    %v2025 = vperm.slane %v1974, 0
    %v2027 = vadd.f32 %v2022, %v2025
    %v2028 = vadd.f32 %v2023, %v2025
    %v2029 = vpack.c.bf16 %v2028, %v2027
    %s2030 = scalar_lea.vmem %s19, 16
    %v2031 = vld [vmem:[%s2030] sm:$0xf]
    %v2032 = vld [vmem:[%s2030 + $0x4] sm:$0xf]
    %v2033 = vld [vmem:[%s2030 + $0x8] sm:$0xf]
    %v2034 = vld [vmem:[%s2030 + $0xc] sm:$0xf]
    %s2035 = scalar_lea.vmem %s21, 1
    %v2036 = vld [vmem:[%s2035] sm:$0x1]
    %v2038 = vperm.slane %v2036, 0
    %v2044 = vunpack.c.l.b16 %v2031
    %v2045 = vunpack.c.l.b16 %v2032
    %v2046 = vunpack.c.l.b16 %v2033
    %v2047 = vunpack.c.l.b16 %v2034
    %v2048 = vpack.c.b16 %v2045, %v2044
    %v2049 = vpack.c.b16 %v2047, %v2046
    %v2053 = vsel %vm231, %v2029, 0
    %2055 = vmatpush.bf16.msra.mxu0 0
    %2056 = vmatpush.bf16.msra.mxu0 0
    %2057 = vmatpush.bf16.msra.mxu0 0
    %2058 = vmatpush.bf16.msra.mxu0 0
    %2059 = vmatpush.bf16.msra.mxu0 0
    %2060 = vmatpush.bf16.msra.mxu0 0
    %2061 = vmatpush.bf16.msra.mxu0 %v2049
    %2062 = vmatpush.bf16.msra.mxu0 %v2048
    %2063 = vmatmul.bf16.gmra.mxu0 %v2053
    %v2064 = vpop.f32.mrf.mxu0
    %v2065 = vadd.f32 %v2038, %v2064
    %v2066 = vpop.f32.mrf.mxu0
    %v2067 = vadd.f32 %v2038, %v2066
    %2068 = vdwg.mxu0
    %2071 = vrot.lane.b32.xlu0 %v2065, 120
    %v2072 = vpop.permute.xlu0 %2071
    %2073 = vrot.lane.b32.xlu0 %v2067, 120
    %v2074 = vpop.permute.xlu0 %2073
    %2077 = vrot.lane.b32.xlu0 %v2065, 112
    %v2078 = vpop.permute.xlu0 %2077
    %2079 = vrot.lane.b32.xlu0 %v2067, 112
    %v2080 = vpop.permute.xlu0 %2079
    %2083 = vrot.lane.b32.xlu0 %v2065, 104
    %v2084 = vpop.permute.xlu0 %2083
    %2085 = vrot.lane.b32.xlu0 %v2067, 104
    %v2086 = vpop.permute.xlu0 %2085
    %v2089 = vrot.slane %v2078, 4
    %v2090 = vsel %vm358, %v2089, %v2065
    %v2091 = vrot.slane %v2065, 4
    %v2092 = vsel %vm358, %v2078, %v2091
    %v2094 = vunpack.c.l.s4 1983009808
    %v2095 = vunpack.c.0.s8 %v2094
    %v2096 = vperm.slane %v2090, %v2095
    %v2098 = vunpack.c.l.s4 1983009808
    %v2099 = vunpack.c.0.s8 %v2098
    %v2100 = vperm.slane %v2092, %v2099
    %v2101 = vrot.slane %v2084, 4
    %v2102 = vsel %vm358, %v2101, %v2072
    %v2103 = vrot.slane %v2072, 4
    %v2104 = vsel %vm358, %v2084, %v2103
    %v2106 = vunpack.c.l.s4 1983009808
    %v2107 = vunpack.c.0.s8 %v2106
    %v2108 = vperm.slane %v2102, %v2107
    %v2110 = vunpack.c.l.s4 1983009808
    %v2111 = vunpack.c.0.s8 %v2110
    %v2112 = vperm.slane %v2104, %v2111
    %v2113 = vrot.slane %v2108, 4
    %v2114 = vsel %vm358, %v2113, %v2096
    %v2115 = vrot.slane %v2096, 4
    %v2116 = vsel %vm358, %v2108, %v2115
    %v2118 = vunpack.c.l.s4 1934713408
    %v2119 = vunpack.c.0.s8 %v2118
    %v2120 = vperm.slane %v2114, %v2119
    %v2122 = vunpack.c.l.s4 1934713408
    %v2123 = vunpack.c.0.s8 %v2122
    %v2124 = vperm.slane %v2116, %v2123
    %v2125 = vrot.slane %v2112, 4
    %v2126 = vsel %vm358, %v2125, %v2100
    %v2127 = vrot.slane %v2100, 4
    %v2128 = vsel %vm358, %v2112, %v2127
    %v2130 = vunpack.c.l.s4 1934713408
    %v2131 = vunpack.c.0.s8 %v2130
    %v2132 = vperm.slane %v2126, %v2131
    %v2134 = vunpack.c.l.s4 1934713408
    %v2135 = vunpack.c.0.s8 %v2134
    %v2136 = vperm.slane %v2128, %v2135
    %v2137 = vrot.slane %v2120, 4
    %v2138 = vsel %vm358, 0.0, %v2137
    %v2139 = vrot.slane %v2124, 4
    %v2140 = vsel %vm358, 0.0, %v2139
    %v2141 = vrot.slane %v2132, 4
    %v2142 = vsel %vm358, 0.0, %v2141
    %v2143 = vrot.slane %v2136, 4
    %v2144 = vsel %vm358, 0.0, %v2143
    %v2145 = vrot.slane %v2080, 4
    %v2146 = vsel %vm358, %v2145, %v2067
    %v2147 = vrot.slane %v2067, 4
    %v2148 = vsel %vm358, %v2080, %v2147
    %v2150 = vunpack.c.l.s4 1983009808
    %v2151 = vunpack.c.0.s8 %v2150
    %v2152 = vperm.slane %v2146, %v2151
    %v2154 = vunpack.c.l.s4 1983009808
    %v2155 = vunpack.c.0.s8 %v2154
    %v2156 = vperm.slane %v2148, %v2155
    %v2157 = vrot.slane %v2086, 4
    %v2158 = vsel %vm358, %v2157, %v2074
    %v2159 = vrot.slane %v2074, 4
    %v2160 = vsel %vm358, %v2086, %v2159
    %v2162 = vunpack.c.l.s4 1983009808
    %v2163 = vunpack.c.0.s8 %v2162
    %v2164 = vperm.slane %v2158, %v2163
    %v2166 = vunpack.c.l.s4 1983009808
    %v2167 = vunpack.c.0.s8 %v2166
    %v2168 = vperm.slane %v2160, %v2167
    %v2169 = vrot.slane %v2164, 4
    %v2170 = vsel %vm358, %v2169, %v2152
    %v2171 = vrot.slane %v2152, 4
    %v2172 = vsel %vm358, %v2164, %v2171
    %v2174 = vunpack.c.l.s4 1934713408
    %v2175 = vunpack.c.0.s8 %v2174
    %v2176 = vperm.slane %v2170, %v2175
    %v2178 = vunpack.c.l.s4 1934713408
    %v2179 = vunpack.c.0.s8 %v2178
    %v2180 = vperm.slane %v2172, %v2179
    %v2181 = vrot.slane %v2168, 4
    %v2182 = vsel %vm358, %v2181, %v2156
    %v2183 = vrot.slane %v2156, 4
    %v2184 = vsel %vm358, %v2168, %v2183
    %v2186 = vunpack.c.l.s4 1934713408
    %v2187 = vunpack.c.0.s8 %v2186
    %v2188 = vperm.slane %v2182, %v2187
    %v2190 = vunpack.c.l.s4 1934713408
    %v2191 = vunpack.c.0.s8 %v2190
    %v2192 = vperm.slane %v2184, %v2191
    %v2193 = vrot.slane %v2176, 4
    %v2194 = vsel %vm358, 0.0, %v2193
    %v2195 = vrot.slane %v2180, 4
    %v2196 = vsel %vm358, 0.0, %v2195
    %v2197 = vrot.slane %v2188, 4
    %v2198 = vsel %vm358, 0.0, %v2197
    %v2199 = vrot.slane %v2192, 4
    %v2200 = vsel %vm358, 0.0, %v2199
    %v2201 = vsel %vm358, %v2139, %v2120
    %v2203 = vunpack.c.l.s4 1983009808
    %v2204 = vunpack.c.0.s8 %v2203
    %v2205 = vperm.slane %v2201, %v2204
    %v2206 = vrot.slane %v2140, 4
    %v2207 = vsel %vm358, %v2206, %v2138
    %v2209 = vunpack.c.l.s4 1983009808
    %v2210 = vunpack.c.0.s8 %v2209
    %v2211 = vperm.slane %v2207, %v2210
    %v2212 = vsel %vm358, %v2143, %v2132
    %v2214 = vunpack.c.l.s4 1983009808
    %v2215 = vunpack.c.0.s8 %v2214
    %v2216 = vperm.slane %v2212, %v2215
    %v2217 = vrot.slane %v2144, 4
    %v2218 = vsel %vm358, %v2217, %v2142
    %v2220 = vunpack.c.l.s4 1983009808
    %v2221 = vunpack.c.0.s8 %v2220
    %v2222 = vperm.slane %v2218, %v2221
    %v2223 = vrot.slane %v2211, 4
    %v2224 = vsel %vm358, %v2223, %v2205
    %v2225 = vrot.slane %v2205, 4
    %v2226 = vsel %vm358, %v2211, %v2225
    %v2228 = vunpack.c.l.s4 1934713408
    %v2229 = vunpack.c.0.s8 %v2228
    %v2230 = vperm.slane %v2224, %v2229
    %v2232 = vunpack.c.l.s4 1934713408
    %v2233 = vunpack.c.0.s8 %v2232
    %v2234 = vperm.slane %v2226, %v2233
    %v2235 = vrot.slane %v2222, 4
    %v2236 = vsel %vm358, %v2235, %v2216
    %v2237 = vrot.slane %v2216, 4
    %v2238 = vsel %vm358, %v2222, %v2237
    %v2240 = vunpack.c.l.s4 1934713408
    %v2241 = vunpack.c.0.s8 %v2240
    %v2242 = vperm.slane %v2236, %v2241
    %v2244 = vunpack.c.l.s4 1934713408
    %v2245 = vunpack.c.0.s8 %v2244
    %v2246 = vperm.slane %v2238, %v2245
    %v2247 = vrot.slane %v2242, 4
    %v2248 = vsel %vm358, %v2247, %v2230
    %v2249 = vrot.slane %v2230, 4
    %v2250 = vsel %vm358, %v2242, %v2249
    %v2251 = vrot.slane %v2246, 4
    %v2252 = vsel %vm358, %v2251, %v2234
    %v2253 = vrot.slane %v2234, 4
    %v2254 = vsel %vm358, %v2246, %v2253
    %v2255 = vsel %vm358, %v2195, %v2176
    %v2257 = vunpack.c.l.s4 1983009808
    %v2258 = vunpack.c.0.s8 %v2257
    %v2259 = vperm.slane %v2255, %v2258
    %v2260 = vrot.slane %v2196, 4
    %v2261 = vsel %vm358, %v2260, %v2194
    %v2263 = vunpack.c.l.s4 1983009808
    %v2264 = vunpack.c.0.s8 %v2263
    %v2265 = vperm.slane %v2261, %v2264
    %v2266 = vsel %vm358, %v2199, %v2188
    %v2268 = vunpack.c.l.s4 1983009808
    %v2269 = vunpack.c.0.s8 %v2268
    %v2270 = vperm.slane %v2266, %v2269
    %v2271 = vrot.slane %v2200, 4
    %v2272 = vsel %vm358, %v2271, %v2198
    %v2274 = vunpack.c.l.s4 1983009808
    %v2275 = vunpack.c.0.s8 %v2274
    %v2276 = vperm.slane %v2272, %v2275
    %v2277 = vrot.slane %v2265, 4
    %v2278 = vsel %vm358, %v2277, %v2259
    %v2279 = vrot.slane %v2259, 4
    %v2280 = vsel %vm358, %v2265, %v2279
    %v2282 = vunpack.c.l.s4 1934713408
    %v2283 = vunpack.c.0.s8 %v2282
    %v2284 = vperm.slane %v2278, %v2283
    %v2286 = vunpack.c.l.s4 1934713408
    %v2287 = vunpack.c.0.s8 %v2286
    %v2288 = vperm.slane %v2280, %v2287
    %v2289 = vrot.slane %v2276, 4
    %v2290 = vsel %vm358, %v2289, %v2270
    %v2291 = vrot.slane %v2270, 4
    %v2292 = vsel %vm358, %v2276, %v2291
    %v2294 = vunpack.c.l.s4 1934713408
    %v2295 = vunpack.c.0.s8 %v2294
    %v2296 = vperm.slane %v2290, %v2295
    %v2298 = vunpack.c.l.s4 1934713408
    %v2299 = vunpack.c.0.s8 %v2298
    %v2300 = vperm.slane %v2292, %v2299
    %v2301 = vrot.slane %v2296, 4
    %v2302 = vsel %vm358, %v2301, %v2284
    %v2303 = vrot.slane %v2284, 4
    %v2304 = vsel %vm358, %v2296, %v2303
    %v2305 = vrot.slane %v2300, 4
    %v2306 = vsel %vm358, %v2305, %v2288
    %v2307 = vrot.slane %v2288, 4
    %v2308 = vsel %vm358, %v2300, %v2307
    %v2309 = vpack.c.bf16 %v2248, %v2248
    %v2310 = vpack.c.bf16 %v2250, %v2250
    %v2311 = vpack.c.bf16 %v2252, %v2252
    %v2312 = vpack.c.bf16 %v2254, %v2254
    %v2313 = vpack.c.bf16 %v2302, %v2302
    %v2314 = vpack.c.bf16 %v2304, %v2304
    %v2315 = vpack.c.bf16 %v2306, %v2306
    %v2316 = vpack.c.bf16 %v2308, %v2308
    %2317 = vrot.lane.b32.xlu0 %v2065, 96
    %v2318 = vpop.permute.xlu0 %2317
    %2319 = vrot.lane.b32.xlu0 %v2067, 96
    %v2320 = vpop.permute.xlu0 %2319
    %2321 = vrot.lane.b32.xlu0 %v2072, 96
    %v2322 = vpop.permute.xlu0 %2321
    %2323 = vrot.lane.b32.xlu0 %v2074, 96
    %v2324 = vpop.permute.xlu0 %2323
    %2325 = vrot.lane.b32.xlu0 %v2078, 96
    %v2326 = vpop.permute.xlu0 %2325
    %2327 = vrot.lane.b32.xlu0 %v2080, 96
    %v2328 = vpop.permute.xlu0 %2327
    %2329 = vrot.lane.b32.xlu0 %v2084, 96
    %v2330 = vpop.permute.xlu0 %2329
    %2331 = vrot.lane.b32.xlu0 %v2086, 96
    %v2332 = vpop.permute.xlu0 %2331
    %v2341 = vrot.slane %v2326, 4
    %v2342 = vsel %vm358, %v2341, %v2318
    %v2343 = vrot.slane %v2318, 4
    %v2344 = vsel %vm358, %v2326, %v2343
    %v2346 = vunpack.c.l.s4 1983009808
    %v2347 = vunpack.c.0.s8 %v2346
    %v2348 = vperm.slane %v2342, %v2347
    %v2350 = vunpack.c.l.s4 1983009808
    %v2351 = vunpack.c.0.s8 %v2350
    %v2352 = vperm.slane %v2344, %v2351
    %v2353 = vrot.slane %v2330, 4
    %v2354 = vsel %vm358, %v2353, %v2322
    %v2355 = vrot.slane %v2322, 4
    %v2356 = vsel %vm358, %v2330, %v2355
    %v2358 = vunpack.c.l.s4 1983009808
    %v2359 = vunpack.c.0.s8 %v2358
    %v2360 = vperm.slane %v2354, %v2359
    %v2362 = vunpack.c.l.s4 1983009808
    %v2363 = vunpack.c.0.s8 %v2362
    %v2364 = vperm.slane %v2356, %v2363
    %v2365 = vrot.slane %v2360, 4
    %v2366 = vsel %vm358, %v2365, %v2348
    %v2367 = vrot.slane %v2348, 4
    %v2368 = vsel %vm358, %v2360, %v2367
    %v2370 = vunpack.c.l.s4 1934713408
    %v2371 = vunpack.c.0.s8 %v2370
    %v2372 = vperm.slane %v2366, %v2371
    %v2374 = vunpack.c.l.s4 1934713408
    %v2375 = vunpack.c.0.s8 %v2374
    %v2376 = vperm.slane %v2368, %v2375
    %v2377 = vrot.slane %v2364, 4
    %v2378 = vsel %vm358, %v2377, %v2352
    %v2379 = vrot.slane %v2352, 4
    %v2380 = vsel %vm358, %v2364, %v2379
    %v2382 = vunpack.c.l.s4 1934713408
    %v2383 = vunpack.c.0.s8 %v2382
    %v2384 = vperm.slane %v2378, %v2383
    %v2386 = vunpack.c.l.s4 1934713408
    %v2387 = vunpack.c.0.s8 %v2386
    %v2388 = vperm.slane %v2380, %v2387
    %v2389 = vrot.slane %v2372, 4
    %v2390 = vsel %vm358, 0.0, %v2389
    %v2391 = vrot.slane %v2376, 4
    %v2392 = vsel %vm358, 0.0, %v2391
    %v2393 = vrot.slane %v2384, 4
    %v2394 = vsel %vm358, 0.0, %v2393
    %v2395 = vrot.slane %v2388, 4
    %v2396 = vsel %vm358, 0.0, %v2395
    %v2397 = vrot.slane %v2328, 4
    %v2398 = vsel %vm358, %v2397, %v2320
    %v2399 = vrot.slane %v2320, 4
    %v2400 = vsel %vm358, %v2328, %v2399
    %v2402 = vunpack.c.l.s4 1983009808
    %v2403 = vunpack.c.0.s8 %v2402
    %v2404 = vperm.slane %v2398, %v2403
    %v2406 = vunpack.c.l.s4 1983009808
    %v2407 = vunpack.c.0.s8 %v2406
    %v2408 = vperm.slane %v2400, %v2407
    %v2409 = vrot.slane %v2332, 4
    %v2410 = vsel %vm358, %v2409, %v2324
    %v2411 = vrot.slane %v2324, 4
    %v2412 = vsel %vm358, %v2332, %v2411
    %v2414 = vunpack.c.l.s4 1983009808
    %v2415 = vunpack.c.0.s8 %v2414
    %v2416 = vperm.slane %v2410, %v2415
    %v2418 = vunpack.c.l.s4 1983009808
    %v2419 = vunpack.c.0.s8 %v2418
    %v2420 = vperm.slane %v2412, %v2419
    %v2421 = vrot.slane %v2416, 4
    %v2422 = vsel %vm358, %v2421, %v2404
    %v2423 = vrot.slane %v2404, 4
    %v2424 = vsel %vm358, %v2416, %v2423
    %v2426 = vunpack.c.l.s4 1934713408
    %v2427 = vunpack.c.0.s8 %v2426
    %v2428 = vperm.slane %v2422, %v2427
    %v2430 = vunpack.c.l.s4 1934713408
    %v2431 = vunpack.c.0.s8 %v2430
    %v2432 = vperm.slane %v2424, %v2431
    %v2433 = vrot.slane %v2420, 4
    %v2434 = vsel %vm358, %v2433, %v2408
    %v2435 = vrot.slane %v2408, 4
    %v2436 = vsel %vm358, %v2420, %v2435
    %v2438 = vunpack.c.l.s4 1934713408
    %v2439 = vunpack.c.0.s8 %v2438
    %v2440 = vperm.slane %v2434, %v2439
    %v2442 = vunpack.c.l.s4 1934713408
    %v2443 = vunpack.c.0.s8 %v2442
    %v2444 = vperm.slane %v2436, %v2443
    %v2445 = vrot.slane %v2428, 4
    %v2446 = vsel %vm358, 0.0, %v2445
    %v2447 = vrot.slane %v2432, 4
    %v2448 = vsel %vm358, 0.0, %v2447
    %v2449 = vrot.slane %v2440, 4
    %v2450 = vsel %vm358, 0.0, %v2449
    %v2451 = vrot.slane %v2444, 4
    %v2452 = vsel %vm358, 0.0, %v2451
    %v2453 = vsel %vm358, %v2391, %v2372
    %v2455 = vunpack.c.l.s4 1983009808
    %v2456 = vunpack.c.0.s8 %v2455
    %v2457 = vperm.slane %v2453, %v2456
    %v2458 = vrot.slane %v2392, 4
    %v2459 = vsel %vm358, %v2458, %v2390
    %v2461 = vunpack.c.l.s4 1983009808
    %v2462 = vunpack.c.0.s8 %v2461
    %v2463 = vperm.slane %v2459, %v2462
    %v2464 = vsel %vm358, %v2395, %v2384
    %v2466 = vunpack.c.l.s4 1983009808
    %v2467 = vunpack.c.0.s8 %v2466
    %v2468 = vperm.slane %v2464, %v2467
    %v2469 = vrot.slane %v2396, 4
    %v2470 = vsel %vm358, %v2469, %v2394
    %v2472 = vunpack.c.l.s4 1983009808
    %v2473 = vunpack.c.0.s8 %v2472
    %v2474 = vperm.slane %v2470, %v2473
    %v2475 = vrot.slane %v2463, 4
    %v2476 = vsel %vm358, %v2475, %v2457
    %v2477 = vrot.slane %v2457, 4
    %v2478 = vsel %vm358, %v2463, %v2477
    %v2480 = vunpack.c.l.s4 1934713408
    %v2481 = vunpack.c.0.s8 %v2480
    %v2482 = vperm.slane %v2476, %v2481
    %v2484 = vunpack.c.l.s4 1934713408
    %v2485 = vunpack.c.0.s8 %v2484
    %v2486 = vperm.slane %v2478, %v2485
    %v2487 = vrot.slane %v2474, 4
    %v2488 = vsel %vm358, %v2487, %v2468
    %v2489 = vrot.slane %v2468, 4
    %v2490 = vsel %vm358, %v2474, %v2489
    %v2492 = vunpack.c.l.s4 1934713408
    %v2493 = vunpack.c.0.s8 %v2492
    %v2494 = vperm.slane %v2488, %v2493
    %v2496 = vunpack.c.l.s4 1934713408
    %v2497 = vunpack.c.0.s8 %v2496
    %v2498 = vperm.slane %v2490, %v2497
    %v2499 = vrot.slane %v2494, 4
    %v2500 = vsel %vm358, %v2499, %v2482
    %v2501 = vrot.slane %v2482, 4
    %v2502 = vsel %vm358, %v2494, %v2501
    %v2503 = vrot.slane %v2498, 4
    %v2504 = vsel %vm358, %v2503, %v2486
    %v2505 = vrot.slane %v2486, 4
    %v2506 = vsel %vm358, %v2498, %v2505
    %v2507 = vsel %vm358, %v2447, %v2428
    %v2509 = vunpack.c.l.s4 1983009808
    %v2510 = vunpack.c.0.s8 %v2509
    %v2511 = vperm.slane %v2507, %v2510
    %v2512 = vrot.slane %v2448, 4
    %v2513 = vsel %vm358, %v2512, %v2446
    %v2515 = vunpack.c.l.s4 1983009808
    %v2516 = vunpack.c.0.s8 %v2515
    %v2517 = vperm.slane %v2513, %v2516
    %v2518 = vsel %vm358, %v2451, %v2440
    %v2520 = vunpack.c.l.s4 1983009808
    %v2521 = vunpack.c.0.s8 %v2520
    %v2522 = vperm.slane %v2518, %v2521
    %v2523 = vrot.slane %v2452, 4
    %v2524 = vsel %vm358, %v2523, %v2450
    %v2526 = vunpack.c.l.s4 1983009808
    %v2527 = vunpack.c.0.s8 %v2526
    %v2528 = vperm.slane %v2524, %v2527
    %v2529 = vrot.slane %v2517, 4
    %v2530 = vsel %vm358, %v2529, %v2511
    %v2531 = vrot.slane %v2511, 4
    %v2532 = vsel %vm358, %v2517, %v2531
    %v2534 = vunpack.c.l.s4 1934713408
    %v2535 = vunpack.c.0.s8 %v2534
    %v2536 = vperm.slane %v2530, %v2535
    %v2538 = vunpack.c.l.s4 1934713408
    %v2539 = vunpack.c.0.s8 %v2538
    %v2540 = vperm.slane %v2532, %v2539
    %v2541 = vrot.slane %v2528, 4
    %v2542 = vsel %vm358, %v2541, %v2522
    %v2543 = vrot.slane %v2522, 4
    %v2544 = vsel %vm358, %v2528, %v2543
    %v2546 = vunpack.c.l.s4 1934713408
    %v2547 = vunpack.c.0.s8 %v2546
    %v2548 = vperm.slane %v2542, %v2547
    %v2550 = vunpack.c.l.s4 1934713408
    %v2551 = vunpack.c.0.s8 %v2550
    %v2552 = vperm.slane %v2544, %v2551
    %v2553 = vrot.slane %v2548, 4
    %v2554 = vsel %vm358, %v2553, %v2536
    %v2555 = vrot.slane %v2536, 4
    %v2556 = vsel %vm358, %v2548, %v2555
    %v2557 = vrot.slane %v2552, 4
    %v2558 = vsel %vm358, %v2557, %v2540
    %v2559 = vrot.slane %v2540, 4
    %v2560 = vsel %vm358, %v2552, %v2559
    %v2561 = vpack.c.bf16 %v2500, %v2500
    %v2562 = vpack.c.bf16 %v2502, %v2502
    %v2563 = vpack.c.bf16 %v2504, %v2504
    %v2564 = vpack.c.bf16 %v2506, %v2506
    %v2565 = vpack.c.bf16 %v2554, %v2554
    %v2566 = vpack.c.bf16 %v2556, %v2556
    %v2567 = vpack.c.bf16 %v2558, %v2558
    %v2568 = vpack.c.bf16 %v2560, %v2560
    %2569 = vrot.lane.b32.xlu0 %v2065, 64
    %v2570 = vpop.permute.xlu0 %2569
    %2571 = vrot.lane.b32.xlu0 %v2067, 64
    %v2572 = vpop.permute.xlu0 %2571
    %2573 = vrot.lane.b32.xlu0 %v2072, 64
    %v2574 = vpop.permute.xlu0 %2573
    %2575 = vrot.lane.b32.xlu0 %v2074, 64
    %v2576 = vpop.permute.xlu0 %2575
    %2577 = vrot.lane.b32.xlu0 %v2078, 64
    %v2578 = vpop.permute.xlu0 %2577
    %2579 = vrot.lane.b32.xlu0 %v2080, 64
    %v2580 = vpop.permute.xlu0 %2579
    %2581 = vrot.lane.b32.xlu0 %v2084, 64
    %v2582 = vpop.permute.xlu0 %2581
    %2583 = vrot.lane.b32.xlu0 %v2086, 64
    %v2584 = vpop.permute.xlu0 %2583
    %v2593 = vrot.slane %v2578, 4
    %v2594 = vsel %vm358, %v2593, %v2570
    %v2595 = vrot.slane %v2570, 4
    %v2596 = vsel %vm358, %v2578, %v2595
    %v2598 = vunpack.c.l.s4 1983009808
    %v2599 = vunpack.c.0.s8 %v2598
    %v2600 = vperm.slane %v2594, %v2599
    %v2602 = vunpack.c.l.s4 1983009808
    %v2603 = vunpack.c.0.s8 %v2602
    %v2604 = vperm.slane %v2596, %v2603
    %v2605 = vrot.slane %v2582, 4
    %v2606 = vsel %vm358, %v2605, %v2574
    %v2607 = vrot.slane %v2574, 4
    %v2608 = vsel %vm358, %v2582, %v2607
    %v2610 = vunpack.c.l.s4 1983009808
    %v2611 = vunpack.c.0.s8 %v2610
    %v2612 = vperm.slane %v2606, %v2611
    %v2614 = vunpack.c.l.s4 1983009808
    %v2615 = vunpack.c.0.s8 %v2614
    %v2616 = vperm.slane %v2608, %v2615
    %v2617 = vrot.slane %v2612, 4
    %v2618 = vsel %vm358, %v2617, %v2600
    %v2619 = vrot.slane %v2600, 4
    %v2620 = vsel %vm358, %v2612, %v2619
    %v2622 = vunpack.c.l.s4 1934713408
    %v2623 = vunpack.c.0.s8 %v2622
    %v2624 = vperm.slane %v2618, %v2623
    %v2626 = vunpack.c.l.s4 1934713408
    %v2627 = vunpack.c.0.s8 %v2626
    %v2628 = vperm.slane %v2620, %v2627
    %v2629 = vrot.slane %v2616, 4
    %v2630 = vsel %vm358, %v2629, %v2604
    %v2631 = vrot.slane %v2604, 4
    %v2632 = vsel %vm358, %v2616, %v2631
    %v2634 = vunpack.c.l.s4 1934713408
    %v2635 = vunpack.c.0.s8 %v2634
    %v2636 = vperm.slane %v2630, %v2635
    %v2638 = vunpack.c.l.s4 1934713408
    %v2639 = vunpack.c.0.s8 %v2638
    %v2640 = vperm.slane %v2632, %v2639
    %v2641 = vrot.slane %v2624, 4
    %v2642 = vsel %vm358, 0.0, %v2641
    %v2643 = vrot.slane %v2628, 4
    %v2644 = vsel %vm358, 0.0, %v2643
    %v2645 = vrot.slane %v2636, 4
    %v2646 = vsel %vm358, 0.0, %v2645
    %v2647 = vrot.slane %v2640, 4
    %v2648 = vsel %vm358, 0.0, %v2647
    %v2649 = vrot.slane %v2580, 4
    %v2650 = vsel %vm358, %v2649, %v2572
    %v2651 = vrot.slane %v2572, 4
    %v2652 = vsel %vm358, %v2580, %v2651
    %v2654 = vunpack.c.l.s4 1983009808
    %v2655 = vunpack.c.0.s8 %v2654
    %v2656 = vperm.slane %v2650, %v2655
    %v2658 = vunpack.c.l.s4 1983009808
    %v2659 = vunpack.c.0.s8 %v2658
    %v2660 = vperm.slane %v2652, %v2659
    %v2661 = vrot.slane %v2584, 4
    %v2662 = vsel %vm358, %v2661, %v2576
    %v2663 = vrot.slane %v2576, 4
    %v2664 = vsel %vm358, %v2584, %v2663
    %v2666 = vunpack.c.l.s4 1983009808
    %v2667 = vunpack.c.0.s8 %v2666
    %v2668 = vperm.slane %v2662, %v2667
    %v2670 = vunpack.c.l.s4 1983009808
    %v2671 = vunpack.c.0.s8 %v2670
    %v2672 = vperm.slane %v2664, %v2671
    %v2673 = vrot.slane %v2668, 4
    %v2674 = vsel %vm358, %v2673, %v2656
    %v2675 = vrot.slane %v2656, 4
    %v2676 = vsel %vm358, %v2668, %v2675
    %v2678 = vunpack.c.l.s4 1934713408
    %v2679 = vunpack.c.0.s8 %v2678
    %v2680 = vperm.slane %v2674, %v2679
    %v2682 = vunpack.c.l.s4 1934713408
    %v2683 = vunpack.c.0.s8 %v2682
    %v2684 = vperm.slane %v2676, %v2683
    %v2685 = vrot.slane %v2672, 4
    %v2686 = vsel %vm358, %v2685, %v2660
    %v2687 = vrot.slane %v2660, 4
    %v2688 = vsel %vm358, %v2672, %v2687
    %v2690 = vunpack.c.l.s4 1934713408
    %v2691 = vunpack.c.0.s8 %v2690
    %v2692 = vperm.slane %v2686, %v2691
    %v2694 = vunpack.c.l.s4 1934713408
    %v2695 = vunpack.c.0.s8 %v2694
    %v2696 = vperm.slane %v2688, %v2695
    %v2697 = vrot.slane %v2680, 4
    %v2698 = vsel %vm358, 0.0, %v2697
    %v2699 = vrot.slane %v2684, 4
    %v2700 = vsel %vm358, 0.0, %v2699
    %v2701 = vrot.slane %v2692, 4
    %v2702 = vsel %vm358, 0.0, %v2701
    %v2703 = vrot.slane %v2696, 4
    %v2704 = vsel %vm358, 0.0, %v2703
    %v2705 = vsel %vm358, %v2643, %v2624
    %v2707 = vunpack.c.l.s4 1983009808
    %v2708 = vunpack.c.0.s8 %v2707
    %v2709 = vperm.slane %v2705, %v2708
    %v2710 = vrot.slane %v2644, 4
    %v2711 = vsel %vm358, %v2710, %v2642
    %v2713 = vunpack.c.l.s4 1983009808
    %v2714 = vunpack.c.0.s8 %v2713
    %v2715 = vperm.slane %v2711, %v2714
    %v2716 = vsel %vm358, %v2647, %v2636
    %v2718 = vunpack.c.l.s4 1983009808
    %v2719 = vunpack.c.0.s8 %v2718
    %v2720 = vperm.slane %v2716, %v2719
    %v2721 = vrot.slane %v2648, 4
    %v2722 = vsel %vm358, %v2721, %v2646
    %v2724 = vunpack.c.l.s4 1983009808
    %v2725 = vunpack.c.0.s8 %v2724
    %v2726 = vperm.slane %v2722, %v2725
    %v2727 = vrot.slane %v2715, 4
    %v2728 = vsel %vm358, %v2727, %v2709
    %v2729 = vrot.slane %v2709, 4
    %v2730 = vsel %vm358, %v2715, %v2729
    %v2732 = vunpack.c.l.s4 1934713408
    %v2733 = vunpack.c.0.s8 %v2732
    %v2734 = vperm.slane %v2728, %v2733
    %v2736 = vunpack.c.l.s4 1934713408
    %v2737 = vunpack.c.0.s8 %v2736
    %v2738 = vperm.slane %v2730, %v2737
    %v2739 = vrot.slane %v2726, 4
    %v2740 = vsel %vm358, %v2739, %v2720
    %v2741 = vrot.slane %v2720, 4
    %v2742 = vsel %vm358, %v2726, %v2741
    %v2744 = vunpack.c.l.s4 1934713408
    %v2745 = vunpack.c.0.s8 %v2744
    %v2746 = vperm.slane %v2740, %v2745
    %v2748 = vunpack.c.l.s4 1934713408
    %v2749 = vunpack.c.0.s8 %v2748
    %v2750 = vperm.slane %v2742, %v2749
    %v2751 = vrot.slane %v2746, 4
    %v2752 = vsel %vm358, %v2751, %v2734
    %v2753 = vrot.slane %v2734, 4
    %v2754 = vsel %vm358, %v2746, %v2753
    %v2755 = vrot.slane %v2750, 4
    %v2756 = vsel %vm358, %v2755, %v2738
    %v2757 = vrot.slane %v2738, 4
    %v2758 = vsel %vm358, %v2750, %v2757
    %v2759 = vsel %vm358, %v2699, %v2680
    %v2761 = vunpack.c.l.s4 1983009808
    %v2762 = vunpack.c.0.s8 %v2761
    %v2763 = vperm.slane %v2759, %v2762
    %v2764 = vrot.slane %v2700, 4
    %v2765 = vsel %vm358, %v2764, %v2698
    %v2767 = vunpack.c.l.s4 1983009808
    %v2768 = vunpack.c.0.s8 %v2767
    %v2769 = vperm.slane %v2765, %v2768
    %v2770 = vsel %vm358, %v2703, %v2692
    %v2772 = vunpack.c.l.s4 1983009808
    %v2773 = vunpack.c.0.s8 %v2772
    %v2774 = vperm.slane %v2770, %v2773
    %v2775 = vrot.slane %v2704, 4
    %v2776 = vsel %vm358, %v2775, %v2702
    %v2778 = vunpack.c.l.s4 1983009808
    %v2779 = vunpack.c.0.s8 %v2778
    %v2780 = vperm.slane %v2776, %v2779
    %v2781 = vrot.slane %v2769, 4
    %v2782 = vsel %vm358, %v2781, %v2763
    %v2783 = vrot.slane %v2763, 4
    %v2784 = vsel %vm358, %v2769, %v2783
    %v2786 = vunpack.c.l.s4 1934713408
    %v2787 = vunpack.c.0.s8 %v2786
    %v2788 = vperm.slane %v2782, %v2787
    %v2790 = vunpack.c.l.s4 1934713408
    %v2791 = vunpack.c.0.s8 %v2790
    %v2792 = vperm.slane %v2784, %v2791
    %v2793 = vrot.slane %v2780, 4
    %v2794 = vsel %vm358, %v2793, %v2774
    %v2795 = vrot.slane %v2774, 4
    %v2796 = vsel %vm358, %v2780, %v2795
    %v2798 = vunpack.c.l.s4 1934713408
    %v2799 = vunpack.c.0.s8 %v2798
    %v2800 = vperm.slane %v2794, %v2799
    %v2802 = vunpack.c.l.s4 1934713408
    %v2803 = vunpack.c.0.s8 %v2802
    %v2804 = vperm.slane %v2796, %v2803
    %v2805 = vrot.slane %v2800, 4
    %v2806 = vsel %vm358, %v2805, %v2788
    %v2807 = vrot.slane %v2788, 4
    %v2808 = vsel %vm358, %v2800, %v2807
    %v2809 = vrot.slane %v2804, 4
    %v2810 = vsel %vm358, %v2809, %v2792
    %v2811 = vrot.slane %v2792, 4
    %v2812 = vsel %vm358, %v2804, %v2811
    %v2813 = vpack.c.bf16 %v2752, %v2752
    %v2814 = vpack.c.bf16 %v2754, %v2754
    %v2815 = vpack.c.bf16 %v2756, %v2756
    %v2816 = vpack.c.bf16 %v2758, %v2758
    %v2817 = vpack.c.bf16 %v2806, %v2806
    %v2818 = vpack.c.bf16 %v2808, %v2808
    %v2819 = vpack.c.bf16 %v2810, %v2810
    %v2820 = vpack.c.bf16 %v2812, %v2812
    %v2822 = vsel %vm1090, %v2309, 0
    %v2825 = vsel %vm1090, %v2561, 0
    %2827 = vmatpush.bf16.xpose.msra.mxu0 0
    %2828 = vmatpush.bf16.xpose.msra.mxu0 0
    %2829 = vmatpush.bf16.xpose.msra.mxu0 0
    %2830 = vmatpush.bf16.xpose.msra.mxu0 0
    %2831 = vmatpush.bf16.xpose.msra.mxu0 0
    %2832 = vmatpush.bf16.xpose.msra.mxu0 0
    %2833 = vmatpush.bf16.xpose.msra.mxu0 0
    %2834 = vmatpush.bf16.xpose.msra.mxu0 %v2825
    %2835 = vmatmul.bf16.gmra.mxu0 %v2822
    %v2836 = vpop.f32.mrf.mxu0
    %v2837 = vadd.f32 0.0, %v2836
    %v2838 = vpop.f32.mrf.mxu0
    %2839 = vdwg.mxu0
    %v2841 = vsel %vm1090, %v2310, 0
    %v2844 = vsel %vm1090, %v2562, 0
    %2846 = vmatpush.bf16.xpose.msra.mxu0 0
    %2847 = vmatpush.bf16.xpose.msra.mxu0 0
    %2848 = vmatpush.bf16.xpose.msra.mxu0 0
    %2849 = vmatpush.bf16.xpose.msra.mxu0 0
    %2850 = vmatpush.bf16.xpose.msra.mxu0 0
    %2851 = vmatpush.bf16.xpose.msra.mxu0 0
    %2852 = vmatpush.bf16.xpose.msra.mxu0 0
    %2853 = vmatpush.bf16.xpose.msra.mxu0 %v2844
    %2854 = vmatmul.bf16.gmra.mxu0 %v2841
    %v2855 = vpop.f32.mrf.mxu0
    %v2856 = vadd.f32 0.0, %v2855
    %v2857 = vpop.f32.mrf.mxu0
    %2858 = vdwg.mxu0
    %v2860 = vsel %vm1090, %v2311, 0
    %v2863 = vsel %vm1090, %v2563, 0
    %2865 = vmatpush.bf16.xpose.msra.mxu0 0
    %2866 = vmatpush.bf16.xpose.msra.mxu0 0
    %2867 = vmatpush.bf16.xpose.msra.mxu0 0
    %2868 = vmatpush.bf16.xpose.msra.mxu0 0
    %2869 = vmatpush.bf16.xpose.msra.mxu0 0
    %2870 = vmatpush.bf16.xpose.msra.mxu0 0
    %2871 = vmatpush.bf16.xpose.msra.mxu0 0
    %2872 = vmatpush.bf16.xpose.msra.mxu0 %v2863
    %2873 = vmatmul.bf16.gmra.mxu0 %v2860
    %v2874 = vpop.f32.mrf.mxu0
    %v2875 = vadd.f32 0.0, %v2874
    %v2876 = vpop.f32.mrf.mxu0
    %2877 = vdwg.mxu0
    %v2879 = vsel %vm1090, %v2312, 0
    %v2882 = vsel %vm1090, %v2564, 0
    %2884 = vmatpush.bf16.xpose.msra.mxu0 0
    %2885 = vmatpush.bf16.xpose.msra.mxu0 0
    %2886 = vmatpush.bf16.xpose.msra.mxu0 0
    %2887 = vmatpush.bf16.xpose.msra.mxu0 0
    %2888 = vmatpush.bf16.xpose.msra.mxu0 0
    %2889 = vmatpush.bf16.xpose.msra.mxu0 0
    %2890 = vmatpush.bf16.xpose.msra.mxu0 0
    %2891 = vmatpush.bf16.xpose.msra.mxu0 %v2882
    %2892 = vmatmul.bf16.gmra.mxu0 %v2879
    %v2893 = vpop.f32.mrf.mxu0
    %v2894 = vadd.f32 0.0, %v2893
    %v2895 = vpop.f32.mrf.mxu0
    %2896 = vdwg.mxu0
    %v2898 = vsel %vm1090, %v2313, 0
    %v2901 = vsel %vm1090, %v2565, 0
    %2903 = vmatpush.bf16.xpose.msra.mxu0 0
    %2904 = vmatpush.bf16.xpose.msra.mxu0 0
    %2905 = vmatpush.bf16.xpose.msra.mxu0 0
    %2906 = vmatpush.bf16.xpose.msra.mxu0 0
    %2907 = vmatpush.bf16.xpose.msra.mxu0 0
    %2908 = vmatpush.bf16.xpose.msra.mxu0 0
    %2909 = vmatpush.bf16.xpose.msra.mxu0 0
    %2910 = vmatpush.bf16.xpose.msra.mxu0 %v2901
    %2911 = vmatmul.bf16.gmra.mxu0 %v2898
    %v2912 = vpop.f32.mrf.mxu0
    %v2913 = vadd.f32 0.0, %v2912
    %v2914 = vpop.f32.mrf.mxu0
    %2915 = vdwg.mxu0
    %v2917 = vsel %vm1090, %v2314, 0
    %v2920 = vsel %vm1090, %v2566, 0
    %2922 = vmatpush.bf16.xpose.msra.mxu0 0
    %2923 = vmatpush.bf16.xpose.msra.mxu0 0
    %2924 = vmatpush.bf16.xpose.msra.mxu0 0
    %2925 = vmatpush.bf16.xpose.msra.mxu0 0
    %2926 = vmatpush.bf16.xpose.msra.mxu0 0
    %2927 = vmatpush.bf16.xpose.msra.mxu0 0
    %2928 = vmatpush.bf16.xpose.msra.mxu0 0
    %2929 = vmatpush.bf16.xpose.msra.mxu0 %v2920
    %2930 = vmatmul.bf16.gmra.mxu0 %v2917
    %v2931 = vpop.f32.mrf.mxu0
    %v2932 = vadd.f32 0.0, %v2931
    %v2933 = vpop.f32.mrf.mxu0
    %2934 = vdwg.mxu0
    %v2936 = vsel %vm1090, %v2315, 0
    %v2939 = vsel %vm1090, %v2567, 0
    %2941 = vmatpush.bf16.xpose.msra.mxu0 0
    %2942 = vmatpush.bf16.xpose.msra.mxu0 0
    %2943 = vmatpush.bf16.xpose.msra.mxu0 0
    %2944 = vmatpush.bf16.xpose.msra.mxu0 0
    %2945 = vmatpush.bf16.xpose.msra.mxu0 0
    %2946 = vmatpush.bf16.xpose.msra.mxu0 0
    %2947 = vmatpush.bf16.xpose.msra.mxu0 0
    %2948 = vmatpush.bf16.xpose.msra.mxu0 %v2939
    %2949 = vmatmul.bf16.gmra.mxu0 %v2936
    %v2950 = vpop.f32.mrf.mxu0
    %v2951 = vadd.f32 0.0, %v2950
    %v2952 = vpop.f32.mrf.mxu0
    %2953 = vdwg.mxu0
    %v2955 = vsel %vm1090, %v2316, 0
    %v2958 = vsel %vm1090, %v2568, 0
    %2960 = vmatpush.bf16.xpose.msra.mxu0 0
    %2961 = vmatpush.bf16.xpose.msra.mxu0 0
    %2962 = vmatpush.bf16.xpose.msra.mxu0 0
    %2963 = vmatpush.bf16.xpose.msra.mxu0 0
    %2964 = vmatpush.bf16.xpose.msra.mxu0 0
    %2965 = vmatpush.bf16.xpose.msra.mxu0 0
    %2966 = vmatpush.bf16.xpose.msra.mxu0 0
    %2967 = vmatpush.bf16.xpose.msra.mxu0 %v2958
    %2968 = vmatmul.bf16.gmra.mxu0 %v2955
    %v2969 = vpop.f32.mrf.mxu0
    %v2970 = vadd.f32 0.0, %v2969
    %v2971 = vpop.f32.mrf.mxu0
    %2972 = vdwg.mxu0
    %v2973 = vmul.f32 %v2837, 0.35355338
    %v2974 = vmul.f32 %v2856, 0.35355338
    %v2975 = vmul.f32 %v2875, 0.35355338
    %v2976 = vmul.f32 %v2894, 0.35355338
    %v2977 = vmul.f32 %v2913, 0.35355338
    %v2978 = vmul.f32 %v2932, 0.35355338
    %v2979 = vmul.f32 %v2951, 0.35355338
    %v2980 = vmul.f32 %v2970, 0.35355338
    %v2981 = vadd.f32 %v2973, %v1251
    %v2982 = vadd.f32 %v2974, %v1251
    %v2983 = vadd.f32 %v2975, %v1251
    %v2984 = vadd.f32 %v2976, %v1251
    %v2985 = vadd.f32 %v2977, %v1252
    %v2986 = vadd.f32 %v2978, %v1252
    %v2987 = vadd.f32 %v2979, %v1252
    %v2988 = vadd.f32 %v2980, %v1252
    %v2989 = vsel %vm1090, %v2981, -inf
    %2990 = vmax.xlane.f32.xlu0 %v2989
    %v2991 = vpop.xlane.xlu0 %2990
    %v2992 = vsel %vm1090, %v2982, -inf
    %2993 = vmax.xlane.f32.xlu0 %v2992
    %v2994 = vpop.xlane.xlu0 %2993
    %v2995 = vsel %vm1090, %v2983, -inf
    %2996 = vmax.xlane.f32.xlu0 %v2995
    %v2997 = vpop.xlane.xlu0 %2996
    %v2998 = vsel %vm1090, %v2984, -inf
    %2999 = vmax.xlane.f32.xlu0 %v2998
    %v3000 = vpop.xlane.xlu0 %2999
    %v3001 = vsel %vm1090, %v2985, -inf
    %3002 = vmax.xlane.f32.xlu0 %v3001
    %v3003 = vpop.xlane.xlu0 %3002
    %v3004 = vsel %vm1090, %v2986, -inf
    %3005 = vmax.xlane.f32.xlu0 %v3004
    %v3006 = vpop.xlane.xlu0 %3005
    %v3007 = vsel %vm1090, %v2987, -inf
    %3008 = vmax.xlane.f32.xlu0 %v3007
    %v3009 = vpop.xlane.xlu0 %3008
    %v3010 = vsel %vm1090, %v2988, -inf
    %3011 = vmax.xlane.f32.xlu0 %v3010
    %v3012 = vpop.xlane.xlu0 %3011
    %v3013 = vsub.f32 %v2981, %v2991
    %v3014 = vsub.f32 %v2982, %v2994
    %v3015 = vsub.f32 %v2983, %v2997
    %v3016 = vsub.f32 %v2984, %v3000
    %v3017 = vsub.f32 %v2985, %v3003
    %v3018 = vsub.f32 %v2986, %v3006
    %v3019 = vsub.f32 %v2987, %v3009
    %v3020 = vsub.f32 %v2988, %v3012
    %v3021 = vmul.f32 %v3013, 1.442695
    %v3022 = vpow.pop %v3021
    %v3023 = vmul.f32 %v3014, 1.442695
    %v3024 = vpow.pop %v3023
    %v3025 = vmul.f32 %v3015, 1.442695
    %v3026 = vpow.pop %v3025
    %v3027 = vmul.f32 %v3016, 1.442695
    %v3028 = vpow.pop %v3027
    %v3029 = vmul.f32 %v3017, 1.442695
    %v3030 = vpow.pop %v3029
    %v3031 = vmul.f32 %v3018, 1.442695
    %v3032 = vpow.pop %v3031
    %v3033 = vmul.f32 %v3019, 1.442695
    %v3034 = vpow.pop %v3033
    %v3035 = vmul.f32 %v3020, 1.442695
    %v3036 = vpow.pop %v3035
    %v3037 = vsel %vm1090, %v3022, 0.0
    %3038 = vadd.xlane.f32.xlu0 %v3037
    %v3039 = vpop.xlane.xlu0 %3038
    %v3040 = vsel %vm1090, %v3024, 0.0
    %3041 = vadd.xlane.f32.xlu0 %v3040
    %v3042 = vpop.xlane.xlu0 %3041
    %v3043 = vsel %vm1090, %v3026, 0.0
    %3044 = vadd.xlane.f32.xlu0 %v3043
    %v3045 = vpop.xlane.xlu0 %3044
    %v3046 = vsel %vm1090, %v3028, 0.0
    %3047 = vadd.xlane.f32.xlu0 %v3046
    %v3048 = vpop.xlane.xlu0 %3047
    %v3049 = vsel %vm1090, %v3030, 0.0
    %3050 = vadd.xlane.f32.xlu0 %v3049
    %v3051 = vpop.xlane.xlu0 %3050
    %v3052 = vsel %vm1090, %v3032, 0.0
    %3053 = vadd.xlane.f32.xlu0 %v3052
    %v3054 = vpop.xlane.xlu0 %3053
    %v3055 = vsel %vm1090, %v3034, 0.0
    %3056 = vadd.xlane.f32.xlu0 %v3055
    %v3057 = vpop.xlane.xlu0 %3056
    %v3058 = vsel %vm1090, %v3036, 0.0
    %3059 = vadd.xlane.f32.xlu0 %v3058
    %v3060 = vpop.xlane.xlu0 %3059
    %v3061 = vrcp.pop %v3039
    %v3062 = vrcp.pop %v3042
    %v3063 = vrcp.pop %v3045
    %v3064 = vrcp.pop %v3048
    %v3065 = vrcp.pop %v3051
    %v3066 = vrcp.pop %v3054
    %v3067 = vrcp.pop %v3057
    %v3068 = vrcp.pop %v3060
    %v3069 = vmul.f32 %v3022, %v3061
    %v3070 = vmul.f32 %v3024, %v3062
    %v3071 = vmul.f32 %v3026, %v3063
    %v3072 = vmul.f32 %v3028, %v3064
    %v3073 = vmul.f32 %v3030, %v3065
    %v3074 = vmul.f32 %v3032, %v3066
    %v3075 = vmul.f32 %v3034, %v3067
    %v3076 = vmul.f32 %v3036, %v3068
    %v3077 = vpack.c.bf16 %v3069, %v3069
    %v3078 = vpack.c.bf16 %v3070, %v3070
    %v3079 = vpack.c.bf16 %v3071, %v3071
    %v3080 = vpack.c.bf16 %v3072, %v3072
    %v3081 = vpack.c.bf16 %v3073, %v3073
    %v3082 = vpack.c.bf16 %v3074, %v3074
    %v3083 = vpack.c.bf16 %v3075, %v3075
    %v3084 = vpack.c.bf16 %v3076, %v3076
    %v3086 = vsel %vm1090, %v3077, 0
    %v3089 = vsel %vm1362, %v2813, 0
    %3091 = vmatpush.bf16.msra.mxu0 0
    %3092 = vmatpush.bf16.msra.mxu0 0
    %3093 = vmatpush.bf16.msra.mxu0 0
    %3094 = vmatpush.bf16.msra.mxu0 0
    %3095 = vmatpush.bf16.msra.mxu0 0
    %3096 = vmatpush.bf16.msra.mxu0 0
    %3097 = vmatpush.bf16.msra.mxu0 0
    %3098 = vmatpush.bf16.msra.mxu0 %v3089
    %3099 = vmatmul.bf16.gmra.mxu0 %v3086
    %v3100 = vpop.f32.mrf.mxu0
    %v3101 = vadd.f32 0.0, %v3100
    %v3102 = vpop.f32.mrf.mxu0
    %3103 = vdwg.mxu0
    %v3105 = vsel %vm1090, %v3078, 0
    %v3108 = vsel %vm1362, %v2814, 0
    %3110 = vmatpush.bf16.msra.mxu0 0
    %3111 = vmatpush.bf16.msra.mxu0 0
    %3112 = vmatpush.bf16.msra.mxu0 0
    %3113 = vmatpush.bf16.msra.mxu0 0
    %3114 = vmatpush.bf16.msra.mxu0 0
    %3115 = vmatpush.bf16.msra.mxu0 0
    %3116 = vmatpush.bf16.msra.mxu0 0
    %3117 = vmatpush.bf16.msra.mxu0 %v3108
    %3118 = vmatmul.bf16.gmra.mxu0 %v3105
    %v3119 = vpop.f32.mrf.mxu0
    %v3120 = vadd.f32 0.0, %v3119
    %v3121 = vpop.f32.mrf.mxu0
    %3122 = vdwg.mxu0
    %v3124 = vsel %vm1090, %v3079, 0
    %v3127 = vsel %vm1362, %v2815, 0
    %3129 = vmatpush.bf16.msra.mxu0 0
    %3130 = vmatpush.bf16.msra.mxu0 0
    %3131 = vmatpush.bf16.msra.mxu0 0
    %3132 = vmatpush.bf16.msra.mxu0 0
    %3133 = vmatpush.bf16.msra.mxu0 0
    %3134 = vmatpush.bf16.msra.mxu0 0
    %3135 = vmatpush.bf16.msra.mxu0 0
    %3136 = vmatpush.bf16.msra.mxu0 %v3127
    %3137 = vmatmul.bf16.gmra.mxu0 %v3124
    %v3138 = vpop.f32.mrf.mxu0
    %v3139 = vadd.f32 0.0, %v3138
    %v3140 = vpop.f32.mrf.mxu0
    %3141 = vdwg.mxu0
    %v3143 = vsel %vm1090, %v3080, 0
    %v3146 = vsel %vm1362, %v2816, 0
    %3148 = vmatpush.bf16.msra.mxu0 0
    %3149 = vmatpush.bf16.msra.mxu0 0
    %3150 = vmatpush.bf16.msra.mxu0 0
    %3151 = vmatpush.bf16.msra.mxu0 0
    %3152 = vmatpush.bf16.msra.mxu0 0
    %3153 = vmatpush.bf16.msra.mxu0 0
    %3154 = vmatpush.bf16.msra.mxu0 0
    %3155 = vmatpush.bf16.msra.mxu0 %v3146
    %3156 = vmatmul.bf16.gmra.mxu0 %v3143
    %v3157 = vpop.f32.mrf.mxu0
    %v3158 = vadd.f32 0.0, %v3157
    %v3159 = vpop.f32.mrf.mxu0
    %3160 = vdwg.mxu0
    %v3162 = vsel %vm1090, %v3081, 0
    %v3165 = vsel %vm1362, %v2817, 0
    %3167 = vmatpush.bf16.msra.mxu0 0
    %3168 = vmatpush.bf16.msra.mxu0 0
    %3169 = vmatpush.bf16.msra.mxu0 0
    %3170 = vmatpush.bf16.msra.mxu0 0
    %3171 = vmatpush.bf16.msra.mxu0 0
    %3172 = vmatpush.bf16.msra.mxu0 0
    %3173 = vmatpush.bf16.msra.mxu0 0
    %3174 = vmatpush.bf16.msra.mxu0 %v3165
    %3175 = vmatmul.bf16.gmra.mxu0 %v3162
    %v3176 = vpop.f32.mrf.mxu0
    %v3177 = vadd.f32 0.0, %v3176
    %v3178 = vpop.f32.mrf.mxu0
    %3179 = vdwg.mxu0
    %v3181 = vsel %vm1090, %v3082, 0
    %v3184 = vsel %vm1362, %v2818, 0
    %3186 = vmatpush.bf16.msra.mxu0 0
    %3187 = vmatpush.bf16.msra.mxu0 0
    %3188 = vmatpush.bf16.msra.mxu0 0
    %3189 = vmatpush.bf16.msra.mxu0 0
    %3190 = vmatpush.bf16.msra.mxu0 0
    %3191 = vmatpush.bf16.msra.mxu0 0
    %3192 = vmatpush.bf16.msra.mxu0 0
    %3193 = vmatpush.bf16.msra.mxu0 %v3184
    %3194 = vmatmul.bf16.gmra.mxu0 %v3181
    %v3195 = vpop.f32.mrf.mxu0
    %v3196 = vadd.f32 0.0, %v3195
    %v3197 = vpop.f32.mrf.mxu0
    %3198 = vdwg.mxu0
    %v3200 = vsel %vm1090, %v3083, 0
    %v3203 = vsel %vm1362, %v2819, 0
    %3205 = vmatpush.bf16.msra.mxu0 0
    %3206 = vmatpush.bf16.msra.mxu0 0
    %3207 = vmatpush.bf16.msra.mxu0 0
    %3208 = vmatpush.bf16.msra.mxu0 0
    %3209 = vmatpush.bf16.msra.mxu0 0
    %3210 = vmatpush.bf16.msra.mxu0 0
    %3211 = vmatpush.bf16.msra.mxu0 0
    %3212 = vmatpush.bf16.msra.mxu0 %v3203
    %3213 = vmatmul.bf16.gmra.mxu0 %v3200
    %v3214 = vpop.f32.mrf.mxu0
    %v3215 = vadd.f32 0.0, %v3214
    %v3216 = vpop.f32.mrf.mxu0
    %3217 = vdwg.mxu0
    %v3219 = vsel %vm1090, %v3084, 0
    %v3222 = vsel %vm1362, %v2820, 0
    %3224 = vmatpush.bf16.msra.mxu0 0
    %3225 = vmatpush.bf16.msra.mxu0 0
    %3226 = vmatpush.bf16.msra.mxu0 0
    %3227 = vmatpush.bf16.msra.mxu0 0
    %3228 = vmatpush.bf16.msra.mxu0 0
    %3229 = vmatpush.bf16.msra.mxu0 0
    %3230 = vmatpush.bf16.msra.mxu0 0
    %3231 = vmatpush.bf16.msra.mxu0 %v3222
    %3232 = vmatmul.bf16.gmra.mxu0 %v3219
    %v3233 = vpop.f32.mrf.mxu0
    %v3234 = vadd.f32 0.0, %v3233
    %v3235 = vpop.f32.mrf.mxu0
    %3236 = vdwg.mxu0
    %v3237 = vrot.slane %v3139, 4
    %v3238 = vsel %vm358, %v3237, %v3101
    %v3239 = vrot.slane %v3101, 4
    %v3240 = vsel %vm358, %v3139, %v3239
    %v3242 = vunpack.c.l.s4 1983009808
    %v3243 = vunpack.c.0.s8 %v3242
    %v3244 = vperm.slane %v3238, %v3243
    %v3246 = vunpack.c.l.s4 1983009808
    %v3247 = vunpack.c.0.s8 %v3246
    %v3248 = vperm.slane %v3240, %v3247
    %v3249 = vrot.slane %v3158, 4
    %v3250 = vsel %vm358, %v3249, %v3120
    %v3251 = vrot.slane %v3120, 4
    %v3252 = vsel %vm358, %v3158, %v3251
    %v3254 = vunpack.c.l.s4 1983009808
    %v3255 = vunpack.c.0.s8 %v3254
    %v3256 = vperm.slane %v3250, %v3255
    %v3258 = vunpack.c.l.s4 1983009808
    %v3259 = vunpack.c.0.s8 %v3258
    %v3260 = vperm.slane %v3252, %v3259
    %v3261 = vrot.slane %v3256, 4
    %v3262 = vsel %vm358, %v3261, %v3244
    %v3263 = vrot.slane %v3244, 4
    %v3264 = vsel %vm358, %v3256, %v3263
    %v3266 = vunpack.c.l.s4 1934713408
    %v3267 = vunpack.c.0.s8 %v3266
    %v3268 = vperm.slane %v3262, %v3267
    %v3270 = vunpack.c.l.s4 1934713408
    %v3271 = vunpack.c.0.s8 %v3270
    %v3272 = vperm.slane %v3264, %v3271
    %v3273 = vrot.slane %v3260, 4
    %v3274 = vsel %vm358, %v3273, %v3248
    %v3275 = vrot.slane %v3248, 4
    %v3276 = vsel %vm358, %v3260, %v3275
    %v3278 = vunpack.c.l.s4 1934713408
    %v3279 = vunpack.c.0.s8 %v3278
    %v3280 = vperm.slane %v3274, %v3279
    %v3282 = vunpack.c.l.s4 1934713408
    %v3283 = vunpack.c.0.s8 %v3282
    %v3284 = vperm.slane %v3276, %v3283
    %v3285 = vrot.slane %v3268, 4
    %v3286 = vsel %vm358, 0.0, %v3285
    %v3287 = vrot.slane %v3272, 4
    %v3288 = vsel %vm358, 0.0, %v3287
    %v3289 = vrot.slane %v3280, 4
    %v3290 = vsel %vm358, 0.0, %v3289
    %v3291 = vrot.slane %v3284, 4
    %v3292 = vsel %vm358, 0.0, %v3291
    %v3293 = vrot.slane %v3215, 4
    %v3294 = vsel %vm358, %v3293, %v3177
    %v3295 = vrot.slane %v3177, 4
    %v3296 = vsel %vm358, %v3215, %v3295
    %v3298 = vunpack.c.l.s4 1983009808
    %v3299 = vunpack.c.0.s8 %v3298
    %v3300 = vperm.slane %v3294, %v3299
    %v3302 = vunpack.c.l.s4 1983009808
    %v3303 = vunpack.c.0.s8 %v3302
    %v3304 = vperm.slane %v3296, %v3303
    %v3305 = vrot.slane %v3234, 4
    %v3306 = vsel %vm358, %v3305, %v3196
    %v3307 = vrot.slane %v3196, 4
    %v3308 = vsel %vm358, %v3234, %v3307
    %v3310 = vunpack.c.l.s4 1983009808
    %v3311 = vunpack.c.0.s8 %v3310
    %v3312 = vperm.slane %v3306, %v3311
    %v3314 = vunpack.c.l.s4 1983009808
    %v3315 = vunpack.c.0.s8 %v3314
    %v3316 = vperm.slane %v3308, %v3315
    %v3317 = vrot.slane %v3312, 4
    %v3318 = vsel %vm358, %v3317, %v3300
    %v3319 = vrot.slane %v3300, 4
    %v3320 = vsel %vm358, %v3312, %v3319
    %v3322 = vunpack.c.l.s4 1934713408
    %v3323 = vunpack.c.0.s8 %v3322
    %v3324 = vperm.slane %v3318, %v3323
    %v3326 = vunpack.c.l.s4 1934713408
    %v3327 = vunpack.c.0.s8 %v3326
    %v3328 = vperm.slane %v3320, %v3327
    %v3329 = vrot.slane %v3316, 4
    %v3330 = vsel %vm358, %v3329, %v3304
    %v3331 = vrot.slane %v3304, 4
    %v3332 = vsel %vm358, %v3316, %v3331
    %v3334 = vunpack.c.l.s4 1934713408
    %v3335 = vunpack.c.0.s8 %v3334
    %v3336 = vperm.slane %v3330, %v3335
    %v3338 = vunpack.c.l.s4 1934713408
    %v3339 = vunpack.c.0.s8 %v3338
    %v3340 = vperm.slane %v3332, %v3339
    %v3341 = vrot.slane %v3324, 4
    %v3342 = vsel %vm358, 0.0, %v3341
    %v3343 = vrot.slane %v3328, 4
    %v3344 = vsel %vm358, 0.0, %v3343
    %v3345 = vrot.slane %v3336, 4
    %v3346 = vsel %vm358, 0.0, %v3345
    %v3347 = vrot.slane %v3340, 4
    %v3348 = vsel %vm358, 0.0, %v3347
    %v3349 = vsel %vm358, %v3287, %v3268
    %v3351 = vunpack.c.l.s4 1983009808
    %v3352 = vunpack.c.0.s8 %v3351
    %v3353 = vperm.slane %v3349, %v3352
    %v3354 = vrot.slane %v3288, 4
    %v3355 = vsel %vm358, %v3354, %v3286
    %v3357 = vunpack.c.l.s4 1983009808
    %v3358 = vunpack.c.0.s8 %v3357
    %v3359 = vperm.slane %v3355, %v3358
    %v3360 = vsel %vm358, %v3291, %v3280
    %v3362 = vunpack.c.l.s4 1983009808
    %v3363 = vunpack.c.0.s8 %v3362
    %v3364 = vperm.slane %v3360, %v3363
    %v3365 = vrot.slane %v3292, 4
    %v3366 = vsel %vm358, %v3365, %v3290
    %v3368 = vunpack.c.l.s4 1983009808
    %v3369 = vunpack.c.0.s8 %v3368
    %v3370 = vperm.slane %v3366, %v3369
    %v3371 = vrot.slane %v3359, 4
    %v3372 = vsel %vm358, %v3371, %v3353
    %v3373 = vrot.slane %v3353, 4
    %v3374 = vsel %vm358, %v3359, %v3373
    %v3376 = vunpack.c.l.s4 1934713408
    %v3377 = vunpack.c.0.s8 %v3376
    %v3378 = vperm.slane %v3372, %v3377
    %v3380 = vunpack.c.l.s4 1934713408
    %v3381 = vunpack.c.0.s8 %v3380
    %v3382 = vperm.slane %v3374, %v3381
    %v3383 = vrot.slane %v3370, 4
    %v3384 = vsel %vm358, %v3383, %v3364
    %v3385 = vrot.slane %v3364, 4
    %v3386 = vsel %vm358, %v3370, %v3385
    %v3388 = vunpack.c.l.s4 1934713408
    %v3389 = vunpack.c.0.s8 %v3388
    %v3390 = vperm.slane %v3384, %v3389
    %v3392 = vunpack.c.l.s4 1934713408
    %v3393 = vunpack.c.0.s8 %v3392
    %v3394 = vperm.slane %v3386, %v3393
    %v3395 = vrot.slane %v3390, 4
    %v3396 = vsel %vm358, %v3395, %v3378
    %v3397 = vrot.slane %v3378, 4
    %v3398 = vsel %vm358, %v3390, %v3397
    %v3399 = vrot.slane %v3394, 4
    %v3400 = vsel %vm358, %v3399, %v3382
    %v3401 = vrot.slane %v3382, 4
    %v3402 = vsel %vm358, %v3394, %v3401
    %v3403 = vsel %vm358, %v3343, %v3324
    %v3405 = vunpack.c.l.s4 1983009808
    %v3406 = vunpack.c.0.s8 %v3405
    %v3407 = vperm.slane %v3403, %v3406
    %v3408 = vrot.slane %v3344, 4
    %v3409 = vsel %vm358, %v3408, %v3342
    %v3411 = vunpack.c.l.s4 1983009808
    %v3412 = vunpack.c.0.s8 %v3411
    %v3413 = vperm.slane %v3409, %v3412
    %v3414 = vsel %vm358, %v3347, %v3336
    %v3416 = vunpack.c.l.s4 1983009808
    %v3417 = vunpack.c.0.s8 %v3416
    %v3418 = vperm.slane %v3414, %v3417
    %v3419 = vrot.slane %v3348, 4
    %v3420 = vsel %vm358, %v3419, %v3346
    %v3422 = vunpack.c.l.s4 1983009808
    %v3423 = vunpack.c.0.s8 %v3422
    %v3424 = vperm.slane %v3420, %v3423
    %v3425 = vrot.slane %v3413, 4
    %v3426 = vsel %vm358, %v3425, %v3407
    %v3427 = vrot.slane %v3407, 4
    %v3428 = vsel %vm358, %v3413, %v3427
    %v3430 = vunpack.c.l.s4 1934713408
    %v3431 = vunpack.c.0.s8 %v3430
    %v3432 = vperm.slane %v3426, %v3431
    %v3434 = vunpack.c.l.s4 1934713408
    %v3435 = vunpack.c.0.s8 %v3434
    %v3436 = vperm.slane %v3428, %v3435
    %v3437 = vrot.slane %v3424, 4
    %v3438 = vsel %vm358, %v3437, %v3418
    %v3439 = vrot.slane %v3418, 4
    %v3440 = vsel %vm358, %v3424, %v3439
    %v3442 = vunpack.c.l.s4 1934713408
    %v3443 = vunpack.c.0.s8 %v3442
    %v3444 = vperm.slane %v3438, %v3443
    %v3446 = vunpack.c.l.s4 1934713408
    %v3447 = vunpack.c.0.s8 %v3446
    %v3448 = vperm.slane %v3440, %v3447
    %v3449 = vrot.slane %v3444, 4
    %v3450 = vsel %vm358, %v3449, %v3432
    %v3451 = vrot.slane %v3432, 4
    %v3452 = vsel %vm358, %v3444, %v3451
    %v3453 = vrot.slane %v3448, 4
    %v3454 = vsel %vm358, %v3453, %v3436
    %v3455 = vrot.slane %v3436, 4
    %v3456 = vsel %vm358, %v3448, %v3455
    %3459 = vrot.lane.b32.xlu0 %v3398, 8
    %v3460 = vpop.permute.xlu0 %3459
    %3461 = vrot.lane.b32.xlu0 %v3452, 8
    %v3462 = vpop.permute.xlu0 %3461
    %3467 = vrot.lane.b32.xlu0 %v3400, 16
    %v3468 = vpop.permute.xlu0 %3467
    %3469 = vrot.lane.b32.xlu0 %v3454, 16
    %v3470 = vpop.permute.xlu0 %3469
    %3475 = vrot.lane.b32.xlu0 %v3402, 24
    %v3476 = vpop.permute.xlu0 %3475
    %3477 = vrot.lane.b32.xlu0 %v3456, 24
    %v3478 = vpop.permute.xlu0 %3477
    %v3481 = vsel %vm1090, %v3396, %v3460
    %v3482 = vsel %vm1090, %v3450, %v3462
    %v3483 = vsel %vm1758, %v3481, %v3468
    %v3484 = vsel %vm1758, %v3482, %v3470
    %v3485 = vsel %vm1761, %v3483, %v3476
    %v3486 = vsel %vm1761, %v3484, %v3478
    %v3487 = vpack.c.bf16 %v3486, %v3485
    %s3488 = scalar_lea.vmem %s23, 16
    %v3489 = vld [vmem:[%s3488] sm:$0xf]
    %v3490 = vld [vmem:[%s3488 + $0x4] sm:$0xf]
    %v3491 = vld [vmem:[%s3488 + $0x8] sm:$0xf]
    %v3492 = vld [vmem:[%s3488 + $0xc] sm:$0xf]
    %s3493 = scalar_lea.vmem %s25, 1
    %v3494 = vld [vmem:[%s3493] sm:$0x1]
    %v3496 = vperm.slane %v3494, 0
    %v3502 = vunpack.c.l.b16 %v3489
    %v3503 = vunpack.c.l.b16 %v3490
    %v3504 = vunpack.c.l.b16 %v3491
    %v3505 = vunpack.c.l.b16 %v3492
    %v3506 = vpack.c.b16 %v3503, %v3502
    %v3507 = vpack.c.b16 %v3505, %v3504
    %v3511 = vsel %vm231, %v3487, 0
    %3513 = vmatpush.bf16.msra.mxu0 0
    %3514 = vmatpush.bf16.msra.mxu0 0
    %3515 = vmatpush.bf16.msra.mxu0 0
    %3516 = vmatpush.bf16.msra.mxu0 0
    %3517 = vmatpush.bf16.msra.mxu0 0
    %3518 = vmatpush.bf16.msra.mxu0 0
    %3519 = vmatpush.bf16.msra.mxu0 %v3507
    %3520 = vmatpush.bf16.msra.mxu0 %v3506
    %3521 = vmatmul.bf16.gmra.mxu0 %v3511
    %v3522 = vpop.f32.mrf.mxu0
    %v3523 = vadd.f32 %v3496, %v3522
    %v3524 = vpop.f32.mrf.mxu0
    %v3525 = vadd.f32 %v3496, %v3524
    %3526 = vdwg.mxu0
    %v3527 = vadd.f32 %v3523, %v2027
    %v3528 = vadd.f32 %v3525, %v2028
    %s3529 = scalar_lea.vmem %s27, 1
    %v3530 = vld [vmem:[%s3529] sm:$0x1]
    %s3531 = scalar_lea.vmem %s29, 1
    %v3532 = vld [vmem:[%s3531] sm:$0x1]
    %v3533 = vsel %vm231, %v3527, 0.0
    %3534 = vadd.xlane.f32.xlu0 %v3533
    %v3535 = vpop.xlane.xlu0 %3534
    %v3536 = vsel %vm231, %v3528, 0.0
    %3537 = vadd.xlane.f32.xlu0 %v3536
    %v3538 = vpop.xlane.xlu0 %3537
    %v3539 = vmul.f32 %v3535, %v244
    %v3540 = vmul.f32 %v3538, %v244
    %v3541 = vsub.f32 %v3527, %v3539
    %v3542 = vsub.f32 %v3528, %v3540
    %v3543 = vmul.f32 %v3541, %v3541
    %v3544 = vmul.f32 %v3542, %v3542
    %v3545 = vsel %vm231, %v3543, 0.0
    %3546 = vadd.xlane.f32.xlu0 %v3545
    %v3547 = vpop.xlane.xlu0 %3546
    %v3548 = vsel %vm231, %v3544, 0.0
    %3549 = vadd.xlane.f32.xlu0 %v3548
    %v3550 = vpop.xlane.xlu0 %3549
    %v3551 = vmul.f32 %v3547, %v244
    %v3552 = vmul.f32 %v3550, %v244
    %v3553 = vadd.f32 %v3551, 1e-12
    %v3554 = vadd.f32 %v3552, 1e-12
    %v3555 = vrsqrt.pop %v3553
    %v3556 = vmul.f32 %v3555, %v3553
    %v3557 = vmul.f32 %v3556, %v3555
    %v3558 = vmul.f32 0.5, %v3557
    %v3559 = vsub.f32 1.5, %v3558
    %v3560 = vmul.f32 %v3555, %v3559
    %vm3561 = vweird.f32 %v3553
    %vm3562 = vweird.f32 %v3555
    %vm3563 = vmor %vm3561, %vm3562
    %v3564 = vsel %vm3563, %v3555, %v3560
    %v3565 = vrsqrt.pop %v3554
    %v3566 = vmul.f32 %v3565, %v3554
    %v3567 = vmul.f32 %v3566, %v3565
    %v3568 = vmul.f32 0.5, %v3567
    %v3569 = vsub.f32 1.5, %v3568
    %v3570 = vmul.f32 %v3565, %v3569
    %vm3571 = vweird.f32 %v3554
    %vm3572 = vweird.f32 %v3565
    %vm3573 = vmor %vm3571, %vm3572
    %v3574 = vsel %vm3573, %v3565, %v3570
    %v3575 = vmul.f32 %v3541, %v3564
    %v3576 = vmul.f32 %v3542, %v3574
    %v3578 = vperm.slane %v3530, 0
    %v3580 = vmul.f32 %v3575, %v3578
    %v3581 = vmul.f32 %v3576, %v3578
    %v3583 = vperm.slane %v3532, 0
    %v3585 = vadd.f32 %v3580, %v3583
    %v3586 = vadd.f32 %v3581, %v3583
    %v3587 = vpack.c.bf16 %v3586, %v3585
    %s3588 = scalar_lea.vmem %s31, 16
    %v3589 = vld [vmem:[%s3588] sm:$0xf]
    %v3590 = vld [vmem:[%s3588 + $0x4] sm:$0xf]
    %v3591 = vld [vmem:[%s3588 + $0x8] sm:$0xf]
    %v3592 = vld [vmem:[%s3588 + $0xc] sm:$0xf]
    %s3593 = scalar_lea.vmem %s33, 1
    %v3594 = vld [vmem:[%s3593] sm:$0x1]
    %v3596 = vperm.slane %v3594, 0
    %v3602 = vunpack.c.l.b16 %v3589
    %v3603 = vunpack.c.l.b16 %v3590
    %v3604 = vunpack.c.l.b16 %v3591
    %v3605 = vunpack.c.l.b16 %v3592
    %v3606 = vpack.c.b16 %v3603, %v3602
    %v3607 = vpack.c.b16 %v3605, %v3604
    %v3611 = vsel %vm231, %v3587, 0
    %3613 = vmatpush.bf16.msra.mxu0 0
    %3614 = vmatpush.bf16.msra.mxu0 0
    %3615 = vmatpush.bf16.msra.mxu0 0
    %3616 = vmatpush.bf16.msra.mxu0 0
    %3617 = vmatpush.bf16.msra.mxu0 0
    %3618 = vmatpush.bf16.msra.mxu0 0
    %3619 = vmatpush.bf16.msra.mxu0 %v3607
    %3620 = vmatpush.bf16.msra.mxu0 %v3606
    %3621 = vmatmul.bf16.gmra.mxu0 %v3611
    %v3622 = vpop.f32.mrf.mxu0
    %v3623 = vadd.f32 %v3596, %v3622
    %v3624 = vpop.f32.mrf.mxu0
    %v3625 = vadd.f32 %v3596, %v3624
    %3626 = vdwg.mxu0
    %v3627 = vmul.f32 %v3623, %v3623
    %v3628 = vmul.f32 %v3625, %v3625
    %v3629 = vmul.f32 %v3623, %v3627
    %v3630 = vmul.f32 %v3625, %v3628
    %v3631 = vmul.f32 %v3629, 0.044715
    %v3632 = vmul.f32 %v3630, 0.044715
    %v3633 = vadd.f32 %v3623, %v3631
    %v3634 = vadd.f32 %v3625, %v3632
    %v3635 = vmul.f32 %v3633, 0.7978846
    %v3636 = vmul.f32 %v3634, 0.7978846
    %v3637 = vtanh.pop %v3635
    %v3638 = vtanh.pop %v3636
    %v3639 = vadd.f32 %v3637, 1.0
    %v3640 = vadd.f32 %v3638, 1.0
    %v3641 = vmul.f32 %v3639, 0.5
    %v3642 = vmul.f32 %v3640, 0.5
    %v3643 = vmul.f32 %v3623, %v3641
    %v3644 = vmul.f32 %v3625, %v3642
    %v3645 = vpack.c.bf16 %v3644, %v3643
    %s3646 = scalar_lea.vmem %s35, 32
    %v3647 = vld [vmem:[%s3646] sm:$0xf]
    %v3648 = vld [vmem:[%s3646 + $0x4] sm:$0xf]
    %v3649 = vld [vmem:[%s3646 + $0x8] sm:$0xf]
    %v3650 = vld [vmem:[%s3646 + $0xc] sm:$0xf]
    %v3651 = vld [vmem:[%s3646 + $0x10] sm:$0xf]
    %v3652 = vld [vmem:[%s3646 + $0x14] sm:$0xf]
    %v3653 = vld [vmem:[%s3646 + $0x18] sm:$0xf]
    %v3654 = vld [vmem:[%s3646 + $0x1c] sm:$0xf]
    %s3655 = scalar_lea.vmem %s37, 1
    %v3656 = vld [vmem:[%s3655] sm:$0x1]
    %v3658 = vperm.slane %v3656, 0
    %v3668 = vunpack.c.l.b16 %v3647
    %v3669 = vunpack.c.l.b16 %v3648
    %v3670 = vunpack.c.l.b16 %v3649
    %v3671 = vunpack.c.l.b16 %v3650
    %v3672 = vunpack.c.l.b16 %v3651
    %v3673 = vunpack.c.l.b16 %v3652
    %v3674 = vunpack.c.l.b16 %v3653
    %v3675 = vunpack.c.l.b16 %v3654
    %v3676 = vpack.c.b16 %v3669, %v3668
    %v3677 = vpack.c.b16 %v3671, %v3670
    %v3678 = vpack.c.b16 %v3673, %v3672
    %v3679 = vpack.c.b16 %v3675, %v3674
    %v3685 = vsel %vm1953, %v3645, 0
    %3687 = vmatpush.bf16.msra.mxu0 0
    %3688 = vmatpush.bf16.msra.mxu0 0
    %3689 = vmatpush.bf16.msra.mxu0 0
    %3690 = vmatpush.bf16.msra.mxu0 0
    %3691 = vmatpush.bf16.msra.mxu0 %v3679
    %3692 = vmatpush.bf16.msra.mxu0 %v3678
    %3693 = vmatpush.bf16.msra.mxu0 %v3677
    %3694 = vmatpush.bf16.msra.mxu0 %v3676
    %3695 = vmatmul.bf16.gmra.mxu0 %v3685
    %v3696 = vpop.f32.mrf.mxu0
    %v3697 = vadd.f32 %v3658, %v3696
    %v3698 = vpop.f32.mrf.mxu0
    %v3699 = vadd.f32 %v3658, %v3698
    %3700 = vdwg.mxu0
    %v3701 = vadd.f32 %v3697, %v3585
    %v3702 = vadd.f32 %v3699, %v3586
    %s3703 = scalar_lea.vmem %s39, 1
    %v3704 = vld [vmem:[%s3703] sm:$0x1]
    %s3705 = scalar_lea.vmem %s41, 1
    %v3706 = vld [vmem:[%s3705] sm:$0x1]
    %v3707 = vsel %vm231, %v3701, 0.0
    %3708 = vadd.xlane.f32.xlu0 %v3707
    %v3709 = vpop.xlane.xlu0 %3708
    %v3710 = vsel %vm231, %v3702, 0.0
    %3711 = vadd.xlane.f32.xlu0 %v3710
    %v3712 = vpop.xlane.xlu0 %3711
    %v3713 = vmul.f32 %v3709, %v244
    %v3714 = vmul.f32 %v3712, %v244
    %v3715 = vsub.f32 %v3701, %v3713
    %v3716 = vsub.f32 %v3702, %v3714
    %v3717 = vmul.f32 %v3715, %v3715
    %v3718 = vmul.f32 %v3716, %v3716
    %v3719 = vsel %vm231, %v3717, 0.0
    %3720 = vadd.xlane.f32.xlu0 %v3719
    %v3721 = vpop.xlane.xlu0 %3720
    %v3722 = vsel %vm231, %v3718, 0.0
    %3723 = vadd.xlane.f32.xlu0 %v3722
    %v3724 = vpop.xlane.xlu0 %3723
    %v3725 = vmul.f32 %v3721, %v244
    %v3726 = vmul.f32 %v3724, %v244
    %v3727 = vadd.f32 %v3725, 1e-12
    %v3728 = vadd.f32 %v3726, 1e-12
    %v3729 = vrsqrt.pop %v3727
    %v3730 = vmul.f32 %v3729, %v3727
    %v3731 = vmul.f32 %v3730, %v3729
    %v3732 = vmul.f32 0.5, %v3731
    %v3733 = vsub.f32 1.5, %v3732
    %v3734 = vmul.f32 %v3729, %v3733
    %vm3735 = vweird.f32 %v3727
    %vm3736 = vweird.f32 %v3729
    %vm3737 = vmor %vm3735, %vm3736
    %v3738 = vsel %vm3737, %v3729, %v3734
    %v3739 = vrsqrt.pop %v3728
    %v3740 = vmul.f32 %v3739, %v3728
    %v3741 = vmul.f32 %v3740, %v3739
    %v3742 = vmul.f32 0.5, %v3741
    %v3743 = vsub.f32 1.5, %v3742
    %v3744 = vmul.f32 %v3739, %v3743
    %vm3745 = vweird.f32 %v3728
    %vm3746 = vweird.f32 %v3739
    %vm3747 = vmor %vm3745, %vm3746
    %v3748 = vsel %vm3747, %v3739, %v3744
    %v3749 = vmul.f32 %v3715, %v3738
    %v3750 = vmul.f32 %v3716, %v3748
    %v3752 = vperm.slane %v3704, 0
    %v3754 = vmul.f32 %v3749, %v3752
    %v3755 = vmul.f32 %v3750, %v3752
    %v3757 = vperm.slane %v3706, 0
    %v3759 = vadd.f32 %v3754, %v3757
    %v3760 = vadd.f32 %v3755, %v3757
    %v3761 = vpack.c.bf16 %v3760, %v3759
    %v3762 = vld [vmem:[%s43] sm:$0xf]
    %v3763 = vld [vmem:[%s43 + $0x4] sm:$0xf]
    %v3764 = vld [vmem:[%s43 + $0x8] sm:$0xf]
    %v3765 = vld [vmem:[%s43 + $0xc] sm:$0xf]
    %v3766 = vld [vmem:[%s45] sm:$0x1]
    %v3768 = vperm.slane %v3766, 0
    %v3774 = vunpack.c.l.b16 %v3762
    %v3775 = vunpack.c.l.b16 %v3763
    %v3776 = vunpack.c.l.b16 %v3764
    %v3777 = vunpack.c.l.b16 %v3765
    %v3778 = vpack.c.b16 %v3775, %v3774
    %v3779 = vpack.c.b16 %v3777, %v3776
    %v3783 = vsel %vm231, %v3761, 0
    %3785 = vmatpush.bf16.msra.mxu0 0
    %3786 = vmatpush.bf16.msra.mxu0 0
    %3787 = vmatpush.bf16.msra.mxu0 0
    %3788 = vmatpush.bf16.msra.mxu0 0
    %3789 = vmatpush.bf16.msra.mxu0 0
    %3790 = vmatpush.bf16.msra.mxu0 0
    %3791 = vmatpush.bf16.msra.mxu0 %v3779
    %3792 = vmatpush.bf16.msra.mxu0 %v3778
    %3793 = vmatmul.bf16.gmra.mxu0 %v3783
    %v3794 = vpop.f32.mrf.mxu0
    %v3795 = vadd.f32 %v3768, %v3794
    %v3796 = vpop.f32.mrf.mxu0
    %v3797 = vadd.f32 %v3768, %v3796
    %3798 = vdwg.mxu0
    %v3799 = vmul.f32 %v3795, %v3795
    %v3800 = vmul.f32 %v3797, %v3797
    %v3801 = vmul.f32 %v3795, %v3799
    %v3802 = vmul.f32 %v3797, %v3800
    %v3803 = vmul.f32 %v3801, 0.044715
    %v3804 = vmul.f32 %v3802, 0.044715
    %v3805 = vadd.f32 %v3795, %v3803
    %v3806 = vadd.f32 %v3797, %v3804
    %v3807 = vmul.f32 %v3805, 0.7978846
    %v3808 = vmul.f32 %v3806, 0.7978846
    %v3809 = vtanh.pop %v3807
    %v3810 = vtanh.pop %v3808
    %v3811 = vadd.f32 %v3809, 1.0
    %v3812 = vadd.f32 %v3810, 1.0
    %v3813 = vmul.f32 %v3811, 0.5
    %v3814 = vmul.f32 %v3812, 0.5
    %v3815 = vmul.f32 %v3795, %v3813
    %v3816 = vmul.f32 %v3797, %v3814
    %v3817 = vld [vmem:[%s47] sm:$0x1]
    %v3818 = vld [vmem:[%s49] sm:$0x1]
    %v3819 = vsel %vm231, %v3815, 0.0
    %3820 = vadd.xlane.f32.xlu0 %v3819
    %v3821 = vpop.xlane.xlu0 %3820
    %v3822 = vsel %vm231, %v3816, 0.0
    %3823 = vadd.xlane.f32.xlu0 %v3822
    %v3824 = vpop.xlane.xlu0 %3823
    %v3825 = vmul.f32 %v3821, %v244
    %v3826 = vmul.f32 %v3824, %v244
    %v3827 = vsub.f32 %v3815, %v3825
    %v3828 = vsub.f32 %v3816, %v3826
    %v3829 = vmul.f32 %v3827, %v3827
    %v3830 = vmul.f32 %v3828, %v3828
    %v3831 = vsel %vm231, %v3829, 0.0
    %3832 = vadd.xlane.f32.xlu0 %v3831
    %v3833 = vpop.xlane.xlu0 %3832
    %v3834 = vsel %vm231, %v3830, 0.0
    %3835 = vadd.xlane.f32.xlu0 %v3834
    %v3836 = vpop.xlane.xlu0 %3835
    %v3837 = vmul.f32 %v3833, %v244
    %v3838 = vmul.f32 %v3836, %v244
    %v3839 = vadd.f32 %v3837, 1e-12
    %v3840 = vadd.f32 %v3838, 1e-12
    %v3841 = vrsqrt.pop %v3839
    %v3842 = vmul.f32 %v3841, %v3839
    %v3843 = vmul.f32 %v3842, %v3841
    %v3844 = vmul.f32 0.5, %v3843
    %v3845 = vsub.f32 1.5, %v3844
    %v3846 = vmul.f32 %v3841, %v3845
    %vm3847 = vweird.f32 %v3839
    %vm3848 = vweird.f32 %v3841
    %vm3849 = vmor %vm3847, %vm3848
    %v3850 = vsel %vm3849, %v3841, %v3846
    %v3851 = vrsqrt.pop %v3840
    %v3852 = vmul.f32 %v3851, %v3840
    %v3853 = vmul.f32 %v3852, %v3851
    %v3854 = vmul.f32 0.5, %v3853
    %v3855 = vsub.f32 1.5, %v3854
    %v3856 = vmul.f32 %v3851, %v3855
    %vm3857 = vweird.f32 %v3840
    %vm3858 = vweird.f32 %v3851
    %vm3859 = vmor %vm3857, %vm3858
    %v3860 = vsel %vm3859, %v3851, %v3856
    %v3861 = vmul.f32 %v3827, %v3850
    %v3862 = vmul.f32 %v3828, %v3860
    %v3864 = vperm.slane %v3817, 0
    %v3866 = vmul.f32 %v3861, %v3864
    %v3867 = vmul.f32 %v3862, %v3864
    %v3869 = vperm.slane %v3818, 0
    %v3871 = vadd.f32 %v3866, %v3869
    %v3872 = vadd.f32 %v3867, %v3869
    %v3873 = vpack.c.bf16 %v3872, %v3871
    %v3874 = vld [vmem:[%s51] sm:$0x1]
    %v3876 = vperm.slane %v3874, 0
    %v3879 = vsel %vm231, %v3873, 0
    %v3882 = vsel %vm231, %v193, 0
    %v3885 = vsel %vm231, %v194, 0
    %v3888 = vsel %vm231, %v195, 0
    %v3891 = vsel %vm231, %v196, 0
    %v3894 = vsel %vm231, %v197, 0
    %v3897 = vsel %vm231, %v198, 0
    %v3900 = vsel %vm231, %v199, 0
    %v3903 = vsel %vm231, %v200, 0
    %3905 = vmatpush.bf16.xpose.msra.mxu0 %v3903
    %3906 = vmatpush.bf16.xpose.msra.mxu0 %v3900
    %3907 = vmatpush.bf16.xpose.msra.mxu0 %v3897
    %3908 = vmatpush.bf16.xpose.msra.mxu0 %v3894
    %3909 = vmatpush.bf16.xpose.msra.mxu0 %v3891
    %3910 = vmatpush.bf16.xpose.msra.mxu0 %v3888
    %3911 = vmatpush.bf16.xpose.msra.mxu0 %v3885
    %3912 = vmatpush.bf16.xpose.msra.mxu0 %v3882
    %3913 = vmatmul.bf16.gmra.mxu0 %v3879
    %v3914 = vpop.f32.mrf.mxu0
    %v3915 = vadd.f32 %v3876, %v3914
    %v3916 = vpop.f32.mrf.mxu0
    %v3917 = vadd.f32 %v3876, %v3916
    %3918 = vdwg.mxu0
    %v3919 = vld [vmem:[%s5] sm:$0xff]
    %v3920 = vld [vmem:[%s5 + $0x8] sm:$0xff]
    %3921 = vmax.xlane.f32.xlu0 %v3915
    %v3922 = vpop.xlane.xlu0 %3921
    %3923 = vmax.xlane.f32.xlu0 %v3917
    %v3924 = vpop.xlane.xlu0 %3923
    %v3925 = vsub.f32 %v3915, %v3922
    %v3926 = vsub.f32 %v3917, %v3924
    %v3927 = vmul.f32 %v3925, 1.442695
    %v3928 = vpow.pop %v3927
    %v3929 = vmul.f32 %v3926, 1.442695
    %v3930 = vpow.pop %v3929
    %3931 = vadd.xlane.f32.xlu0 %v3928
    %v3932 = vpop.xlane.xlu0 %3931
    %3933 = vadd.xlane.f32.xlu0 %v3930
    %v3934 = vpop.xlane.xlu0 %3933
    %v3935 = vlog2.pop %v3932
    %v3936 = vmul.f32 %v3935, 0.6931472
    %v3937 = vlog2.pop %v3934
    %v3938 = vmul.f32 %v3937, 0.6931472
    %v3939 = vadd.f32 %v3936, %v3922
    %v3940 = vadd.f32 %v3938, %v3924
    %3941 = vset.pattern.permute.xlu0 0
    %3942 = vperm.xlu0 %3941, %v3919
    %v3943 = vpop.permute.xlu0 %3942
    %3944 = vset.pattern.permute.xlu0 0
    %3945 = vperm.xlu0 %3944, %v3920
    %v3946 = vpop.permute.xlu0 %3945
    %vm3947 = vcmp.eq.s32.totalorder %v145, %v3943
    %vm3948 = vcmp.eq.s32.totalorder %v145, %v3946
    %v3949 = vsel %vm3947, %v3915, 0.0
    %v3950 = vsel %vm3948, %v3917, 0.0
    %3951 = vadd.xlane.f32.xlu0 %v3949
    %v3952 = vpop.xlane.xlu0 %3951
    %3953 = vadd.xlane.f32.xlu0 %v3950
    %v3954 = vpop.xlane.xlu0 %3953
    %vm3955 = vcmp.ne.s32.totalorder %v3919, 4294967196
    %vm3956 = vcmp.ne.s32.totalorder %v3920, 4294967196
    %v3957 = vsel %vm3955, 1, 0
    %v3958 = vsel %vm3956, 1, 0
    %v3959 = vcvt.s32.f32 %v3957
    %v3960 = vcvt.s32.f32 %v3958
    %v3961 = vsub.f32 %v3939, %v3952
    %v3962 = vsub.f32 %v3940, %v3954
    %v3963 = vmul.f32 %v3961, %v3959
    %v3964 = vmul.f32 %v3962, %v3960
    %vm3965 = vcmask 7168
    %v3966 = vsel %vm3965, %v3963, 0.0
    %v3967 = vsel %vm3965, %v3964, 0.0
    %v3968 = vadd.f32 %v3966, %v3967
    %3969 = vadd.xlane.f32.xlu0 %v3968
    %v3970 = vpop.xlane.xlu0 %3969
    %v3971 = vrot.slane %v3970, 4
    %v3972 = vadd.f32 %v3970, %v3971
    %v3973 = vrot.slane %v3972, 2
    %v3974 = vadd.f32 %v3972, %v3973
    %v3975 = vrot.slane %v3974, 1
    %v3976 = vadd.f32 %v3974, %v3975
    %s3977 = vtos %v3976
    %v3978 = vsel %vm3965, %v3959, 0.0
    %v3979 = vsel %vm3965, %v3960, 0.0
    %v3980 = vadd.f32 %v3978, %v3979
    %3981 = vadd.xlane.f32.xlu0 %v3980
    %v3982 = vpop.xlane.xlu0 %3981
    %v3983 = vrot.slane %v3982, 4
    %v3984 = vadd.f32 %v3982, %v3983
    %v3985 = vrot.slane %v3984, 2
    %v3986 = vadd.f32 %v3984, %v3985
    %v3987 = vrot.slane %v3986, 1
    %v3988 = vadd.f32 %v3986, %v3987
    %s3989 = vtos %v3988
    %s3990 = smax.f32 %s3989, 1.0
    %v3991 = vstv %s3990
    %v3992 = vrcp.pop %v3991
    %v3993 = vmul.f32 %v3991, %v3992
    %v3994 = vsub.f32 1.0, %v3993
    %v3995 = vmul.f32 %v3992, %v3994
    %v3996 = vadd.f32 %v3992, %v3995
    %vm3997 = vweird.f32 %v3991
    %vm3998 = vweird.f32 %v3992
    %vm3999 = vmor %vm3997, %vm3998
    %v4000 = vsel %vm3999, %v3992, %v3996
    %v4001 = vand.u32 2147483647, %v3991
    %vm4002 = vcmp.eq.f32.partialorder %v4001, 8.507059e+37
    %v4003 = vand.u32 %v3991, 2147483648
    %v4004 = vor.u32 1.1754944e-38, %v4003
    %v4005 = vsel %vm4002, %v4004, %v4000
    %s4006 = vtos %v4005
    %s4007 = smul.f32 %s3977, %s4006
    %v4008 = vpack.c.bf16 %v3759, %v3759
    %v4009 = vpack.c.bf16 %v3760, %v3760
    %v4010 = vld [vmem:[%s53] sm:$0xf]
    %v4011 = vld [vmem:[%s53 + $0x4] sm:$0xf]
    %v4012 = vld [vmem:[%s53 + $0x8] sm:$0xf]
    %v4013 = vld [vmem:[%s53 + $0xc] sm:$0xf]
    %v4014 = vld [vmem:[%s55] sm:$0x1]
    %v4016 = vperm.slane %v4014, 0
    %v4020 = vunpack.c.l.b16 %v4008
    %v4021 = vunpack.c.l.b16 %v4009
    %v4022 = vrot.slane %v4021, 7
    %vm4023 = vcmask 1041409
    %v4024 = vsel %vm4023, %v4022, %v4020
    %v4025 = vpack.c.b16 %v4024, %v4024
    %v4030 = vunpack.c.l.b16 %v4010
    %v4031 = vunpack.c.l.b16 %v4011
    %v4032 = vunpack.c.l.b16 %v4012
    %v4033 = vunpack.c.l.b16 %v4013
    %v4034 = vpack.c.b16 %v4031, %v4030
    %v4035 = vpack.c.b16 %v4033, %v4032
    %v4039 = vsel %vm231, %v4025, 0
    %4041 = vmatpush.bf16.msra.mxu0 0
    %4042 = vmatpush.bf16.msra.mxu0 0
    %4043 = vmatpush.bf16.msra.mxu0 0
    %4044 = vmatpush.bf16.msra.mxu0 0
    %4045 = vmatpush.bf16.msra.mxu0 0
    %4046 = vmatpush.bf16.msra.mxu0 0
    %4047 = vmatpush.bf16.msra.mxu0 %v4035
    %4048 = vmatpush.bf16.msra.mxu0 %v4034
    %4049 = vmatmul.bf16.gmra.mxu0 %v4039
    %v4050 = vpop.f32.mrf.mxu0
    %v4051 = vadd.f32 %v4016, %v4050
    %v4052 = vpop.f32.mrf.mxu0
    %4053 = vdwg.mxu0
    %v4054 = vtanh.pop %v4051
    %v4055 = vpack.c.bf16 %v4054, %v4054
    %v4056 = vld [vmem:[%s57] sm:$0xf]
    %v4057 = vld [vmem:[%s57 + $0x4] sm:$0xf]
    %v4058 = vld [vmem:[%s57 + $0x8] sm:$0xf]
    %v4059 = vld [vmem:[%s57 + $0xc] sm:$0xf]
    %v4060 = vld [vmem:[%s59] sm:$0x1]
    %v4062 = vperm.slane %v4060, 0
    %v4068 = vunpack.c.l.b16 %v4056
    %v4069 = vunpack.c.l.b16 %v4057
    %v4070 = vunpack.c.l.b16 %v4058
    %v4071 = vunpack.c.l.b16 %v4059
    %v4072 = vpack.c.b16 %v4069, %v4068
    %v4073 = vpack.c.b16 %v4071, %v4070
    %v4077 = vsel %vm231, %v4055, 0
    %4079 = vmatpush.bf16.msra.mxu0 0
    %4080 = vmatpush.bf16.msra.mxu0 0
    %4081 = vmatpush.bf16.msra.mxu0 0
    %4082 = vmatpush.bf16.msra.mxu0 0
    %4083 = vmatpush.bf16.msra.mxu0 0
    %4084 = vmatpush.bf16.msra.mxu0 0
    %4085 = vmatpush.bf16.msra.mxu0 %v4073
    %4086 = vmatpush.bf16.msra.mxu0 %v4072
    %4087 = vmatmul.bf16.gmra.mxu0 %v4077
    %v4088 = vpop.f32.mrf.mxu0
    %v4089 = vadd.f32 %v4062, %v4088
    %v4090 = vpop.f32.mrf.mxu0
    %4091 = vdwg.mxu0
    %v4092 = vld [vmem:[%s7] sm:$0x3]
    %vm4093 = vcmask 9216
    %v4094 = vsel %vm4093, %v4089, -inf
    %4095 = vmax.xlane.f32.xlu0 %v4094
    %v4096 = vpop.xlane.xlu0 %4095
    %v4097 = vsub.f32 %v4089, %v4096
    %v4098 = vmul.f32 %v4097, 1.442695
    %v4099 = vpow.pop %v4098
    %v4100 = vsel %vm4093, %v4099, 0.0
    %4101 = vadd.xlane.f32.xlu0 %v4100
    %v4102 = vpop.xlane.xlu0 %4101
    %v4103 = vlog2.pop %v4102
    %v4104 = vmul.f32 %v4103, 0.6931472
    %v4105 = vadd.f32 %v4104, %v4096
    %4106 = vset.pattern.permute.xlu0 0
    %4107 = vperm.xlu0 %4106, %v4092
    %v4108 = vpop.permute.xlu0 %4107
    %vm4109 = vcmp.eq.s32.totalorder %v145, %v4108
    %v4110 = vsel %vm4109, %v4089, 0.0
    %v4111 = vsel %vm4093, %v4110, 0.0
    %4112 = vadd.xlane.f32.xlu0 %v4111
    %v4113 = vpop.xlane.xlu0 %4112
    %v4114 = vsub.f32 %v4105, %v4113
    %vm4115 = vcmask 1024
    %v4116 = vsel %vm4115, %v4114, 0.0
    %4117 = vadd.xlane.f32.xlu0 %v4116
    %v4118 = vpop.xlane.xlu0 %4117
    %v4119 = vrot.slane %v4118, 4
    %v4120 = vadd.f32 %v4118, %v4119
    %v4121 = vrot.slane %v4120, 2
    %v4122 = vadd.f32 %v4120, %v4121
    %v4123 = vrot.slane %v4122, 1
    %v4124 = vadd.f32 %v4122, %v4123
    %s4125 = vtos %v4124
    %v4126 = vrcp.pop 2.0
    %v4127 = vmul.f32 2.0, %v4126
    %v4128 = vsub.f32 1.0, %v4127
    %v4129 = vmul.f32 %v4126, %v4128
    %v4130 = vadd.f32 %v4126, %v4129
    %vm4131 = vweird.f32 %v4126
    %v4132 = vsel %vm4131, %v4126, %v4130
    %s4133 = vtos %v4132
    %s4134 = smul.f32 %s4125, %s4133
    %s4135 = scalar_lea.smem [#allocation2], 0
    %4136 = sst [smem:[%s4135]] %s4007
    %s4137 = scalar_lea.smem [#allocation2], 1
    %4138 = sst [smem:[%s4137]] %s4134
    // Predicated region
    $region122: #{post_training_bert_forward.1} parent=1 // pred_check
      _
    $region123: #{post_training_bert_forward.1} parent=1 // pred_check_branch
      %4140 = sbr.rel (0) target = $region125
    $region124: #{post_training_bert_forward.1} parent=1 // pred_region
      %4142 = vsyncadd [#allocation3], 0
      %s4144 = sshll.u32 %s61, 4
      %s4145 = int_to_ptr.vmem [resolvable:$true] %s4144
      %4147 = dma.smem_to_vmem [#allocation2], 16, %s4145, [#allocation3]
    $region125: #{post_training_bert_forward.1} parent=1 // pred_fallthru
      _
    // Predicated region
    $region126: #{post_training_bert_forward.1} parent=1 // pred_check
      _
    $region127: #{post_training_bert_forward.1} parent=1 // pred_check_branch
      %4149 = sbr.rel (0) target = $region129
    $region128: #{post_training_bert_forward.1} parent=1 // pred_region
      %4151 = dma.done [#allocation3], 16
    $region129: #{post_training_bert_forward.1} parent=1 // pred_fallthru
      _
    %4152 = sfence
    %4153 = vsyncpa [#allocation3], 1

</llo_original>
